<compile_context>
chip_gen: v6e
topology: v6e:2x2x1
jax: 0.10.0
libtpu: 0.0.40
codegen_flags: <defaults>
</compile_context>

<pallas_src>
import functools
import math

import jax
import jax.numpy as jnp
from jax.experimental import pallas as pl
from jax.experimental.pallas import tpu as pltpu


_MASK_VALUE = -1.0e9      # matches torch masked_fill(-1e9)
_NEG_INIT = -1.0e30       # online-softmax running-max init (finite, avoids inf-inf)


def _round_up(a, m):
    return (a + m - 1) // m * m


# ----------------------------- in-kernel helpers -----------------------------

def _erf(z):
    # Abramowitz & Stegun 7.1.26 polynomial (|err| <= 1.5e-7), VPU/EUP friendly.
    # TODO(synk): exact erf (torch.nn.GELU default) approximated to ~1.5e-7 abs error.
    a1, a2, a3, a4, a5 = (0.254829592, -0.284496736, 1.421413741,
                          -1.453152027, 1.061405429)
    p = 0.3275911
    s = jnp.sign(z)
    az = jnp.abs(z)
    t = 1.0 / (1.0 + p * az)
    poly = t * (a1 + t * (a2 + t * (a3 + t * (a4 + t * a5))))
    return s * (1.0 - poly * jnp.exp(-az * az))


def _gelu_exact(x):
    # torch.nn.GELU() default (erf-based)
    return 0.5 * x * (1.0 + _erf(x * (1.0 / math.sqrt(2.0))))


def _layer_norm(v, gamma, beta, eps=1e-5):
    mu = jnp.mean(v, axis=-1, keepdims=True)
    var = jnp.mean((v - mu) * (v - mu), axis=-1, keepdims=True)
    return (v - mu) * jax.lax.rsqrt(var + eps) * gamma + beta


# ------------------------- kernel 1: Q/K/V projection -------------------------

def _qkv_proj_kernel(x_ref, wq_ref, wk_ref, wv_ref, q_ref, k_ref, v_ref,
                     *, scale, num_heads):
    cdt = wq_ref.dtype
    x = x_ref[0].astype(cdt)                                   # (TS, D) bf16
    for h in range(num_heads):                                 # static unroll
        q = jnp.dot(x, wq_ref[h], preferred_element_type=jnp.float32)
        q_ref[0, h] = (q * scale).astype(q_ref.dtype)          # fold 1/sqrt(hd)
        k = jnp.dot(x, wk_ref[h], preferred_element_type=jnp.float32)
        k_ref[0, h] = k.astype(k_ref.dtype)
        v = jnp.dot(x, wv_ref[h], preferred_element_type=jnp.float32)
        v_ref[0, h] = v.astype(v_ref.dtype)


# --------------- kernel 2: flash attention + output projection ----------------

def _flash_attn_kernel(q_ref, k_ref, v_ref, wo_ref, o_ref,
                       m_scr, l_scr, acc_scr, *, q_blk, kv_blk, num_heads):
    qi = pl.program_id(1)
    ki = pl.program_id(2)
    n_kv = pl.num_programs(2)
    cdt = wo_ref.dtype                                         # bf16

    @pl.when(ki == 0)
    def _():
        m_scr[...] = jnp.full(m_scr.shape, _NEG_INIT, m_scr.dtype)
        l_scr[...] = jnp.zeros(l_scr.shape, l_scr.dtype)
        acc_scr[...] = jnp.zeros(acc_scr.shape, acc_scr.dtype)

    # online-softmax update; fully-masked causal KV tiles are skipped entirely
    @pl.when(ki * kv_blk <= qi * q_blk + (q_blk - 1))
    def _():
        q = q_ref[0]                                           # (H, TQ,  hd) bf16 (scaled)
        k = k_ref[0]                                           # (H, TKV, hd) bf16
        v = v_ref[0]                                           # (H, TKV, hd) bf16

        # batched over heads: s[h] = q[h] @ k[h]^T  (contract head_dim directly)
        s = jax.lax.dot_general(q, k, (((2,), (2,)), ((0,), (0,))),
                                preferred_element_type=jnp.float32)  # (H, TQ, TKV)

        row = qi * q_blk + jax.lax.broadcasted_iota(jnp.int32, s.shape, 1)
        col = ki * kv_blk + jax.lax.broadcasted_iota(jnp.int32, s.shape, 2)
        s = jnp.where(col > row, _MASK_VALUE, s)               # causal mask

        m_prev = m_scr[...]
        m_new = jnp.maximum(m_prev, jnp.max(s, axis=-1, keepdims=True))
        alpha = jnp.exp(m_prev - m_new)
        p = jnp.exp(s - m_new)
        l_scr[...] = alpha * l_scr[...] + jnp.sum(p, axis=-1, keepdims=True)
        acc_scr[...] = alpha * acc_scr[...] + jax.lax.dot_general(
            p.astype(cdt), v, (((2,), (1,)), ((0,), (0,))),
            preferred_element_type=jnp.float32)                # (H, TQ, hd)
        m_scr[...] = m_new

    # last KV tile: normalize and fold the per-head output projection
    @pl.when(ki == n_kv - 1)
    def _():
        ctx = (acc_scr[...] * pl.reciprocal(l_scr[...], approx=True)).astype(cdt)
        d_model = wo_ref.shape[-1]
        out = jnp.zeros((q_blk, d_model), jnp.float32)
        for h in range(num_heads):                             # static unroll
            out = out + jnp.dot(ctx[h], wo_ref[h],
                                preferred_element_type=jnp.float32)
        o_ref[0] = out.astype(o_ref.dtype)


# --------------- kernel 3: residual + LN1 + FFN(GELU) + residual + LN2 --------

def _ffn_kernel(x_ref, attn_ref, ln1_g_ref, ln1_b_ref,
                w1_ref, b1_ref, w2_ref, b2_ref, ln2_g_ref, ln2_b_ref,
                o_ref, x1_scr, acc_scr):
    fi = pl.program_id(2)
    n_f = pl.num_programs(2)
    cdt = w1_ref.dtype

    @pl.when(fi == 0)
    def _():
        x = x_ref[0].astype(jnp.float32)
        x1_scr[...] = _layer_norm(x + attn_ref[0], ln1_g_ref[0], ln1_b_ref[0])
        acc_scr[...] = jnp.zeros(acc_scr.shape, acc_scr.dtype)

    # FFN tiled over F: stream (D, TF)/(TF, D) weight chunks, keep hidden live
    # at (TQ, TF) instead of (TQ, F)
    hid = jnp.dot(x1_scr[...].astype(cdt), w1_ref[...],
                  preferred_element_type=jnp.float32) + b1_ref[0]
    hid = _gelu_exact(hid)
    acc_scr[...] += jnp.dot(hid.astype(cdt), w2_ref[...],
                            preferred_element_type=jnp.float32)

    @pl.when(fi == n_f - 1)
    def _():
        out = _layer_norm(x1_scr[...] + acc_scr[...] + b2_ref[0],
                          ln2_g_ref[0], ln2_b_ref[0])
        o_ref[0] = out.astype(o_ref.dtype)


# ----------------------- one-time weight re-packing --------------------------

def prepare_params(params, num_heads, compute_dtype=jnp.bfloat16):
    """Convert torch-layout weights into the canonical kernel layout ONCE."""
    D = params["wq"].shape[0]
    F = params["w_ff1"].shape[0]
    hd = D // num_heads

    def heads_in(w):  # nn.Linear (out,in) -> (H, D_in, hd), head-major out features
        return jnp.transpose(w.T.reshape(D, num_heads, hd), (1, 0, 2)).astype(compute_dtype)

    return {
        "wq_h": heads_in(params["wq"]),
        "wk_h": heads_in(params["wk"]),
        "wv_h": heads_in(params["wv"]),
        "wo_h": params["wo"].T.reshape(num_heads, hd, D).astype(compute_dtype),
        "ln1_g": params["ln1_g"].reshape(1, D).astype(jnp.float32),
        "ln1_b": params["ln1_b"].reshape(1, D).astype(jnp.float32),
        "w1": params["w_ff1"].T.astype(compute_dtype),            # (D, F)
        "b1": params["b_ff1"].reshape(1, F).astype(jnp.float32),
        "w2": params["w_ff2"].T.astype(compute_dtype),            # (F, D)
        "b2": params["b_ff2"].reshape(1, D).astype(jnp.float32),
        "ln2_g": params["ln2_g"].reshape(1, D).astype(jnp.float32),
        "ln2_b": params["ln2_b"].reshape(1, D).astype(jnp.float32),
    }


# --------------------------------- wrapper -----------------------------------

def _vmem_limit_bytes():
    """Per-generation VMEM limit: leave headroom below physical capacity."""
    cap = None
    try:
        info = pltpu.get_tpu_info()
        for attr in ("vmem_capacity_bytes", "vmem_size_bytes", "vmem_bytes"):
            v = getattr(info, attr, None)
            if v:
                cap = int(v)
                break
    except Exception:
        cap = None
    if cap is None:
        cap = 64 * 1024 * 1024  # conservative (v7x-sized) fallback
    # ~112 MiB on 128 MiB chips (v5e/v6e), ~48 MiB on 64 MiB v7x
    return int(min(max(cap - 16 * 1024 * 1024, 32 * 1024 * 1024), 112 * 1024 * 1024))


def transformer_layer(x, kparams, *, num_heads, q_block=None, kv_block=None,
                      f_block=None):
    """x: (B, S, D) f32; kparams: output of prepare_params."""
    B, S, D = x.shape
    assert D % num_heads == 0, "model_dim must be divisible by num_heads"
    hd = D // num_heads
    F = kparams["w1"].shape[1]
    cdt = kparams["w1"].dtype
    scale = 1.0 / math.sqrt(hd)

    # Tiles default to 256 (256-wide MXU on v6e/v7x, fewer grid steps). Small or
    # non-divisible S is padded (padded KV columns are causally masked, padded
    # query rows are sliced off) instead of collapsing to one giant block.
    def pick(blk, default=256):
        t = blk if blk is not None else default
        t = min(_round_up(t, 8), _round_up(S, 8))
        return max(t, 8)

    TQ = pick(q_block)
    TKV = pick(kv_block)
    S_pad = _round_up(S, math.lcm(TQ, TKV))
    nq, nkv, ns = S_pad // TQ, S_pad // TKV, S_pad // TQ

    TF = f_block if f_block is not None else min(F, 2048)
    if TF != F and (F % TF != 0 or TF % 128 != 0):
        TF = F
    n_f = F // TF

    vmem_limit = _vmem_limit_bytes()
    x_p = x if S_pad == S else jnp.pad(x, ((0, 0), (0, S_pad - S), (0, 0)))

    # ---- phase 1: Q/K/V projected once, head-major bf16 (B, H, S, hd) --------
    q, k, v = pl.pallas_call(
        functools.partial(_qkv_proj_kernel, scale=scale, num_heads=num_heads),
        out_shape=[jax.ShapeDtypeStruct((B, num_heads, S_pad, hd), cdt)] * 3,
        grid=(B, ns),
        in_specs=[
            pl.BlockSpec((1, TQ, D), lambda b, si: (b, si, 0)),
            pl.BlockSpec((num_heads, D, hd), lambda b, si: (0, 0, 0)),
            pl.BlockSpec((num_heads, D, hd), lambda b, si: (0, 0, 0)),
            pl.BlockSpec((num_heads, D, hd), lambda b, si: (0, 0, 0)),
        ],
        out_specs=[pl.BlockSpec((1, num_heads, TQ, hd),
                                lambda b, si: (b, 0, si, 0))] * 3,
        compiler_params=pltpu.CompilerParams(
            dimension_semantics=("parallel", "parallel"),
            vmem_limit_bytes=vmem_limit),
    )(x_p, kparams["wq_h"], kparams["wk_h"], kparams["wv_h"])

    # ---- phase 2: flash attention (all heads per step) + output projection ----
    def _kv_map(b, qi, ki):
        # clamp ki for fully-masked causal tiles so the pipeline revisits the
        # previous block instead of issuing a DMA that pl.when would waste.
        last = ((qi + 1) * TQ - 1) // TKV
        return (b, 0, jnp.minimum(ki, last), 0)

    attn = pl.pallas_call(
        functools.partial(_flash_attn_kernel, q_blk=TQ, kv_blk=TKV,
                          num_heads=num_heads),
        out_shape=jax.ShapeDtypeStruct((B, S_pad, D), jnp.float32),
        grid=(B, nq, nkv),
        in_specs=[
            pl.BlockSpec((1, num_heads, TQ, hd), lambda b, qi, ki: (b, 0, qi, 0)),
            pl.BlockSpec((1, num_heads, TKV, hd), _kv_map),
            pl.BlockSpec((1, num_heads, TKV, hd), _kv_map),
            pl.BlockSpec((num_heads, hd, D), lambda b, qi, ki: (0, 0, 0)),
        ],
        out_specs=pl.BlockSpec((1, TQ, D), lambda b, qi, ki: (b, qi, 0)),
        scratch_shapes=[
            pltpu.VMEM((num_heads, TQ, 1), jnp.float32),    # running max
            pltpu.VMEM((num_heads, TQ, 1), jnp.float32),    # running sum
            pltpu.VMEM((num_heads, TQ, hd), jnp.float32),   # context accumulator
        ],
        compiler_params=pltpu.CompilerParams(
            dimension_semantics=("parallel", "parallel", "arbitrary"),
            vmem_limit_bytes=vmem_limit),
    )(q, k, v, kparams["wo_h"])

    # ---- phase 3: residual + LN1 + FFN (tiled over F) + residual + LN2 -------
    out = pl.pallas_call(
        _ffn_kernel,
        out_shape=jax.ShapeDtypeStruct((B, S_pad, D), x.dtype),
        grid=(B, ns, n_f),
        in_specs=[
            pl.BlockSpec((1, TQ, D), lambda b, si, fi: (b, si, 0)),   # x
            pl.BlockSpec((1, TQ, D), lambda b, si, fi: (b, si, 0)),   # attn out
            pl.BlockSpec((1, D), lambda b, si, fi: (0, 0)),           # ln1 gamma
            pl.BlockSpec((1, D), lambda b, si, fi: (0, 0)),           # ln1 beta
            pl.BlockSpec((D, TF), lambda b, si, fi: (0, fi)),         # w1 chunk
            pl.BlockSpec((1, TF), lambda b, si, fi: (0, fi)),         # b1 chunk
            pl.BlockSpec((TF, D), lambda b, si, fi: (fi, 0)),         # w2 chunk
            pl.BlockSpec((1, D), lambda b, si, fi: (0, 0)),           # b2
            pl.BlockSpec((1, D), lambda b, si, fi: (0, 0)),           # ln2 gamma
            pl.BlockSpec((1, D), lambda b, si, fi: (0, 0)),           # ln2 beta
        ],
        out_specs=pl.BlockSpec((1, TQ, D), lambda b, si, fi: (b, si, 0)),
        scratch_shapes=[
            pltpu.VMEM((TQ, D), jnp.float32),   # LN1 output (reused across F chunks)
            pltpu.VMEM((TQ, D), jnp.float32),   # FFN output accumulator
        ],
        compiler_params=pltpu.CompilerParams(
            dimension_semantics=("parallel", "parallel", "arbitrary"),
            vmem_limit_bytes=vmem_limit),
    )(x_p, attn,
      kparams["ln1_g"], kparams["ln1_b"],
      kparams["w1"], kparams["b1"], kparams["w2"], kparams["b2"],
      kparams["ln2_g"], kparams["ln2_b"])

    return out if S_pad == S else out[:, :S, :]


# ------------------------------ parameter init --------------------------------

def init_params(key, model_dim, ff_dim):
    ks = jax.random.split(key, 8)

    def lin(k, out_f, in_f):
        bound = 1.0 / math.sqrt(in_f)
        return jax.random.uniform(k, (out_f, in_f), jnp.float32, -bound, bound)

    return {
        "wq": lin(ks[0], model_dim, model_dim),
        "wk": lin(ks[1], model_dim, model_dim),
        "wv": lin(ks[2], model_dim, model_dim),
        "wo": lin(ks[3], model_dim, model_dim),
        "ln1_g": jnp.ones((model_dim,), jnp.float32),
        "ln1_b": jnp.zeros((model_dim,), jnp.float32),
        "w_ff1": lin(ks[4], ff_dim, model_dim),
        "b_ff1": jax.random.uniform(ks[5], (ff_dim,), jnp.float32,
                                    -1.0 / math.sqrt(model_dim),
                                    1.0 / math.sqrt(model_dim)),
        "w_ff2": lin(ks[6], model_dim, ff_dim),
        "b_ff2": jax.random.uniform(ks[7], (model_dim,), jnp.float32,
                                    -1.0 / math.sqrt(ff_dim),
                                    1.0 / math.sqrt(ff_dim)),
        "ln2_g": jnp.ones((model_dim,), jnp.float32),
        "ln2_b": jnp.zeros((model_dim,), jnp.float32),
    }


# ----------------------------- pure-JAX reference -----------------------------

def _reference_layer(x, params, *, num_heads):
    B, S, D = x.shape
    hd = D // num_heads
    def split_heads(t):
        return jnp.transpose(t.reshape(B, S, num_heads, hd), (0, 2, 1, 3))
    q = split_heads(x @ params["wq"].T)
    k = split_heads(x @ params["wk"].T)
    v = split_heads(x @ params["wv"].T)
    s = jnp.einsum("bhqd,bhkd->bhqk", q, k) / math.sqrt(hd)
    mask = jnp.triu(jnp.ones((S, S), dtype=bool), 1)
    s = jnp.where(mask[None, None], -1e9, s)
    p = jax.nn.softmax(s, axis=-1)
    ctx = jnp.transpose(jnp.einsum("bhqk,bhkd->bhqd", p, v),
                        (0, 2, 1, 3)).reshape(B, S, D)
    attn = ctx @ params["wo"].T

    def ln(t, g, b):
        mu = t.mean(-1, keepdims=True)
        var = ((t - mu) ** 2).mean(-1, keepdims=True)
        return (t - mu) * jax.lax.rsqrt(var + 1e-5) * g + b

    x1 = ln(x + attn, params["ln1_g"], params["ln1_b"])
    h1 = jax.nn.gelu(x1 @ params["w_ff1"].T + params["b_ff1"], approximate=False)
    ff = h1 @ params["w_ff2"].T + params["b_ff2"]
    return ln(x1 + ff, params["ln2_g"], params["ln2_b"])


if __name__ == "__main__":
    # small but lane-aligned shapes: D and F multiples of 128, tiles multiples of 8
    B, S, D, H = 2, 16, 128, 8
    FF = 4 * D

    key = jax.random.PRNGKey(0)
    kx, kp = jax.random.split(key)
    x = jax.random.normal(kx, (B, S, D), jnp.float32)

    params = init_params(kp, D, FF)                 # torch-layout params
    kparams = prepare_params(params, num_heads=H)   # packed once into kernel layout

    # q/kv tiles of 8 exercise the online-softmax accumulation across multiple
    # KV steps, the causal compute skip, and the clamped KV index_map.
    out = transformer_layer(x, kparams, num_heads=H, q_block=8, kv_block=8)
    jax.block_until_ready(out)
    assert out.shape == (B, S, D)

    ref = _reference_layer(x, params, num_heads=H)
    err = float(jnp.max(jnp.abs(out - ref)))
    assert err < 5e-2, f"max abs error vs reference: {err}"
    print("KERNEL_OK")
</pallas_src>

<mosaic_0001>
module attributes {stable_mosaic.version = 11 : i64} {
  func.func @_qkv_proj_kernel(%arg0: i32, %arg1: i32, %arg2: memref<1x8x128xf32, #tpu.memory_space<vmem>>, %arg3: memref<8x128x16xbf16, #tpu.memory_space<vmem>>, %arg4: memref<8x128x16xbf16, #tpu.memory_space<vmem>>, %arg5: memref<8x128x16xbf16, #tpu.memory_space<vmem>>, %arg6: memref<1x8x8x16xbf16, #tpu.memory_space<vmem>>, %arg7: memref<1x8x8x16xbf16, #tpu.memory_space<vmem>>, %arg8: memref<1x8x8x16xbf16, #tpu.memory_space<vmem>>) attributes {dimension_semantics = [#tpu.dimension_semantics<parallel>, #tpu.dimension_semantics<parallel>], iteration_bounds = array<i64: 2, 2>, scalar_prefetch = 0 : i64, scratch_operands = 0 : i64, tpu.core_type = #tpu.core_type<tc>, window_params = [{transform_indices = @transform_0, window_bounds = array<i64: 1, 8, 128>}, {pipeline_mode = #tpu.pipeline_mode<synchronous>, transform_indices = @transform_1, window_bounds = array<i64: 8, 128, 16>}, {pipeline_mode = #tpu.pipeline_mode<synchronous>, transform_indices = @transform_2, window_bounds = array<i64: 8, 128, 16>}, {pipeline_mode = #tpu.pipeline_mode<synchronous>, transform_indices = @transform_3, window_bounds = array<i64: 8, 128, 16>}, {transform_indices = @transform_4, window_bounds = array<i64: 1, 8, 8, 16>}, {transform_indices = @transform_5, window_bounds = array<i64: 1, 8, 8, 16>}, {transform_indices = @transform_6, window_bounds = array<i64: 1, 8, 8, 16>}]} {
    %c0 = arith.constant 0 : index
    %c0_0 = arith.constant 0 : index
    %c0_1 = arith.constant 0 : index
    %0 = vector.load %arg2[%c0, %c0_0, %c0_1] : memref<1x8x128xf32, #tpu.memory_space<vmem>>, vector<1x8x128xf32>
    %1 = vector.shape_cast %0 : vector<1x8x128xf32> to vector<8x128xf32>
    %2 = arith.truncf %1 : vector<8x128xf32> to vector<8x128xbf16>
    %c0_2 = arith.constant 0 : index
    %c0_3 = arith.constant 0 : index
    %c0_4 = arith.constant 0 : index
    %3 = vector.load %arg3[%c0_2, %c0_3, %c0_4] : memref<8x128x16xbf16, #tpu.memory_space<vmem>>, vector<1x128x16xbf16>
    %4 = vector.shape_cast %3 : vector<1x128x16xbf16> to vector<128x16xbf16>
    %cst = arith.constant dense<0.000000e+00> : vector<8x16xf32>
    %5 = tpu.matmul %2, %4, %cst {dimension_numbers = #tpu.dot_dimension_numbers<[1], [0], [0], [1], [0, 0, 1, 1], [], []>} : vector<8x128xbf16>, vector<128x16xbf16>, vector<8x16xf32> -> vector<8x16xf32>
    %cst_5 = arith.constant 2.500000e-01 : f32
    %6 = vector.broadcast %cst_5 : f32 to vector<8x16xf32>
    %7 = arith.mulf %5, %6 : vector<8x16xf32>
    %8 = arith.truncf %7 : vector<8x16xf32> to vector<8x16xbf16>
    %c0_6 = arith.constant 0 : index
    %c0_7 = arith.constant 0 : index
    %c0_8 = arith.constant 0 : index
    %c0_9 = arith.constant 0 : index
    %9 = vector.load %arg6[%c0_6, %c0_7, %c0_8, %c0_9] : memref<1x8x8x16xbf16, #tpu.memory_space<vmem>>, vector<1x1x8x16xbf16>
    %10 = vector.shape_cast %9 : vector<1x1x8x16xbf16> to vector<8x16xbf16>
    %11 = vector.shape_cast %8 : vector<8x16xbf16> to vector<1x1x8x16xbf16>
    tpu.vector_store %arg6[%c0_6, %c0_7, %c0_8, %c0_9], %11 {strides = array<i32>} : memref<1x8x8x16xbf16, #tpu.memory_space<vmem>>, vector<1x1x8x16xbf16>,
    %c0_10 = arith.constant 0 : index
    %c0_11 = arith.constant 0 : index
    %c0_12 = arith.constant 0 : index
    %12 = vector.load %arg4[%c0_10, %c0_11, %c0_12] : memref<8x128x16xbf16, #tpu.memory_space<vmem>>, vector<1x128x16xbf16>
    %13 = vector.shape_cast %12 : vector<1x128x16xbf16> to vector<128x16xbf16>
    %cst_13 = arith.constant dense<0.000000e+00> : vector<8x16xf32>
    %14 = tpu.matmul %2, %13, %cst_13 {dimension_numbers = #tpu.dot_dimension_numbers<[1], [0], [0], [1], [0, 0, 1, 1], [], []>} : vector<8x128xbf16>, vector<128x16xbf16>, vector<8x16xf32> -> vector<8x16xf32>
    %15 = arith.truncf %14 : vector<8x16xf32> to vector<8x16xbf16>
    %c0_14 = arith.constant 0 : index
    %c0_15 = arith.constant 0 : index
    %c0_16 = arith.constant 0 : index
    %c0_17 = arith.constant 0 : index
    %16 = vector.load %arg7[%c0_14, %c0_15, %c0_16, %c0_17] : memref<1x8x8x16xbf16, #tpu.memory_space<vmem>>, vector<1x1x8x16xbf16>
    %17 = vector.shape_cast %16 : vector<1x1x8x16xbf16> to vector<8x16xbf16>
    %18 = vector.shape_cast %15 : vector<8x16xbf16> to vector<1x1x8x16xbf16>
    tpu.vector_store %arg7[%c0_14, %c0_15, %c0_16, %c0_17], %18 {strides = array<i32>} : memref<1x8x8x16xbf16, #tpu.memory_space<vmem>>, vector<1x1x8x16xbf16>,
    %c0_18 = arith.constant 0 : index
    %c0_19 = arith.constant 0 : index
    %c0_20 = arith.constant 0 : index
    %19 = vector.load %arg5[%c0_18, %c0_19, %c0_20] : memref<8x128x16xbf16, #tpu.memory_space<vmem>>, vector<1x128x16xbf16>
    %20 = vector.shape_cast %19 : vector<1x128x16xbf16> to vector<128x16xbf16>
    %cst_21 = arith.constant dense<0.000000e+00> : vector<8x16xf32>
    %21 = tpu.matmul %2, %20, %cst_21 {dimension_numbers = #tpu.dot_dimension_numbers<[1], [0], [0], [1], [0, 0, 1, 1], [], []>} : vector<8x128xbf16>, vector<128x16xbf16>, vector<8x16xf32> -> vector<8x16xf32>
    %22 = arith.truncf %21 : vector<8x16xf32> to vector<8x16xbf16>
    %c0_22 = arith.constant 0 : index
    %c0_23 = arith.constant 0 : index
    %c0_24 = arith.constant 0 : index
    %c0_25 = arith.constant 0 : index
    %23 = vector.load %arg8[%c0_22, %c0_23, %c0_24, %c0_25] : memref<1x8x8x16xbf16, #tpu.memory_space<vmem>>, vector<1x1x8x16xbf16>
    %24 = vector.shape_cast %23 : vector<1x1x8x16xbf16> to vector<8x16xbf16>
    %25 = vector.shape_cast %22 : vector<8x16xbf16> to vector<1x1x8x16xbf16>
    tpu.vector_store %arg8[%c0_22, %c0_23, %c0_24, %c0_25], %25 {strides = array<i32>} : memref<1x8x8x16xbf16, #tpu.memory_space<vmem>>, vector<1x1x8x16xbf16>,
    %c1 = arith.constant 1 : index
    %c0_26 = arith.constant 0 : index
    %c0_27 = arith.constant 0 : index
    %26 = vector.load %arg3[%c1, %c0_26, %c0_27] : memref<8x128x16xbf16, #tpu.memory_space<vmem>>, vector<1x128x16xbf16>
    %27 = vector.shape_cast %26 : vector<1x128x16xbf16> to vector<128x16xbf16>
    %cst_28 = arith.constant dense<0.000000e+00> : vector<8x16xf32>
    %28 = tpu.matmul %2, %27, %cst_28 {dimension_numbers = #tpu.dot_dimension_numbers<[1], [0], [0], [1], [0, 0, 1, 1], [], []>} : vector<8x128xbf16>, vector<128x16xbf16>, vector<8x16xf32> -> vector<8x16xf32>
    %cst_29 = arith.constant 2.500000e-01 : f32
    %29 = vector.broadcast %cst_29 : f32 to vector<8x16xf32>
    %30 = arith.mulf %28, %29 : vector<8x16xf32>
    %31 = arith.truncf %30 : vector<8x16xf32> to vector<8x16xbf16>
    %c0_30 = arith.constant 0 : index
    %c1_31 = arith.constant 1 : index
    %c0_32 = arith.constant 0 : index
    %c0_33 = arith.constant 0 : index
    %32 = vector.load %arg6[%c0_30, %c1_31, %c0_32, %c0_33] : memref<1x8x8x16xbf16, #tpu.memory_space<vmem>>, vector<1x1x8x16xbf16>
    %33 = vector.shape_cast %32 : vector<1x1x8x16xbf16> to vector<8x16xbf16>
    %34 = vector.shape_cast %31 : vector<8x16xbf16> to vector<1x1x8x16xbf16>
    tpu.vector_store %arg6[%c0_30, %c1_31, %c0_32, %c0_33], %34 {strides = array<i32>} : memref<1x8x8x16xbf16, #tpu.memory_space<vmem>>, vector<1x1x8x16xbf16>,
    %c1_34 = arith.constant 1 : index
    %c0_35 = arith.constant 0 : index
    %c0_36 = arith.constant 0 : index
    %35 = vector.load %arg4[%c1_34, %c0_35, %c0_36] : memref<8x128x16xbf16, #tpu.memory_space<vmem>>, vector<1x128x16xbf16>
    %36 = vector.shape_cast %35 : vector<1x128x16xbf16> to vector<128x16xbf16>
    %cst_37 = arith.constant dense<0.000000e+00> : vector<8x16xf32>
    %37 = tpu.matmul %2, %36, %cst_37 {dimension_numbers = #tpu.dot_dimension_numbers<[1], [0], [0], [1], [0, 0, 1, 1], [], []>} : vector<8x128xbf16>, vector<128x16xbf16>, vector<8x16xf32> -> vector<8x16xf32>
    %38 = arith.truncf %37 : vector<8x16xf32> to vector<8x16xbf16>
    %c0_38 = arith.constant 0 : index
    %c1_39 = arith.constant 1 : index
    %c0_40 = arith.constant 0 : index
    %c0_41 = arith.constant 0 : index
    %39 = vector.load %arg7[%c0_38, %c1_39, %c0_40, %c0_41] : memref<1x8x8x16xbf16, #tpu.memory_space<vmem>>, vector<1x1x8x16xbf16>
    %40 = vector.shape_cast %39 : vector<1x1x8x16xbf16> to vector<8x16xbf16>
    %41 = vector.shape_cast %38 : vector<8x16xbf16> to vector<1x1x8x16xbf16>
    tpu.vector_store %arg7[%c0_38, %c1_39, %c0_40, %c0_41], %41 {strides = array<i32>} : memref<1x8x8x16xbf16, #tpu.memory_space<vmem>>, vector<1x1x8x16xbf16>,
    %c1_42 = arith.constant 1 : index
    %c0_43 = arith.constant 0 : index
    %c0_44 = arith.constant 0 : index
    %42 = vector.load %arg5[%c1_42, %c0_43, %c0_44] : memref<8x128x16xbf16, #tpu.memory_space<vmem>>, vector<1x128x16xbf16>
    %43 = vector.shape_cast %42 : vector<1x128x16xbf16> to vector<128x16xbf16>
    %cst_45 = arith.constant dense<0.000000e+00> : vector<8x16xf32>
    %44 = tpu.matmul %2, %43, %cst_45 {dimension_numbers = #tpu.dot_dimension_numbers<[1], [0], [0], [1], [0, 0, 1, 1], [], []>} : vector<8x128xbf16>, vector<128x16xbf16>, vector<8x16xf32> -> vector<8x16xf32>
    %45 = arith.truncf %44 : vector<8x16xf32> to vector<8x16xbf16>
    %c0_46 = arith.constant 0 : index
    %c1_47 = arith.constant 1 : index
    %c0_48 = arith.constant 0 : index
    %c0_49 = arith.constant 0 : index
    %46 = vector.load %arg8[%c0_46, %c1_47, %c0_48, %c0_49] : memref<1x8x8x16xbf16, #tpu.memory_space<vmem>>, vector<1x1x8x16xbf16>
    %47 = vector.shape_cast %46 : vector<1x1x8x16xbf16> to vector<8x16xbf16>
    %48 = vector.shape_cast %45 : vector<8x16xbf16> to vector<1x1x8x16xbf16>
    tpu.vector_store %arg8[%c0_46, %c1_47, %c0_48, %c0_49], %48 {strides = array<i32>} : memref<1x8x8x16xbf16, #tpu.memory_space<vmem>>, vector<1x1x8x16xbf16>,
    %c2 = arith.constant 2 : index
    %c0_50 = arith.constant 0 : index
    %c0_51 = arith.constant 0 : index
    %49 = vector.load %arg3[%c2, %c0_50, %c0_51] : memref<8x128x16xbf16, #tpu.memory_space<vmem>>, vector<1x128x16xbf16>
    %50 = vector.shape_cast %49 : vector<1x128x16xbf16> to vector<128x16xbf16>
    %cst_52 = arith.constant dense<0.000000e+00> : vector<8x16xf32>
    %51 = tpu.matmul %2, %50, %cst_52 {dimension_numbers = #tpu.dot_dimension_numbers<[1], [0], [0], [1], [0, 0, 1, 1], [], []>} : vector<8x128xbf16>, vector<128x16xbf16>, vector<8x16xf32> -> vector<8x16xf32>
    %cst_53 = arith.constant 2.500000e-01 : f32
    %52 = vector.broadcast %cst_53 : f32 to vector<8x16xf32>
    %53 = arith.mulf %51, %52 : vector<8x16xf32>
    %54 = arith.truncf %53 : vector<8x16xf32> to vector<8x16xbf16>
    %c0_54 = arith.constant 0 : index
    %c2_55 = arith.constant 2 : index
    %c0_56 = arith.constant 0 : index
    %c0_57 = arith.constant 0 : index
    %55 = vector.load %arg6[%c0_54, %c2_55, %c0_56, %c0_57] : memref<1x8x8x16xbf16, #tpu.memory_space<vmem>>, vector<1x1x8x16xbf16>
    %56 = vector.shape_cast %55 : vector<1x1x8x16xbf16> to vector<8x16xbf16>
    %57 = vector.shape_cast %54 : vector<8x16xbf16> to vector<1x1x8x16xbf16>
    tpu.vector_store %arg6[%c0_54, %c2_55, %c0_56, %c0_57], %57 {strides = array<i32>} : memref<1x8x8x16xbf16, #tpu.memory_space<vmem>>, vector<1x1x8x16xbf16>,
    %c2_58 = arith.constant 2 : index
    %c0_59 = arith.constant 0 : index
    %c0_60 = arith.constant 0 : index
    %58 = vector.load %arg4[%c2_58, %c0_59, %c0_60] : memref<8x128x16xbf16, #tpu.memory_space<vmem>>, vector<1x128x16xbf16>
    %59 = vector.shape_cast %58 : vector<1x128x16xbf16> to vector<128x16xbf16>
    %cst_61 = arith.constant dense<0.000000e+00> : vector<8x16xf32>
    %60 = tpu.matmul %2, %59, %cst_61 {dimension_numbers = #tpu.dot_dimension_numbers<[1], [0], [0], [1], [0, 0, 1, 1], [], []>} : vector<8x128xbf16>, vector<128x16xbf16>, vector<8x16xf32> -> vector<8x16xf32>
    %61 = arith.truncf %60 : vector<8x16xf32> to vector<8x16xbf16>
    %c0_62 = arith.constant 0 : index
    %c2_63 = arith.constant 2 : index
    %c0_64 = arith.constant 0 : index
    %c0_65 = arith.constant 0 : index
    %62 = vector.load %arg7[%c0_62, %c2_63, %c0_64, %c0_65] : memref<1x8x8x16xbf16, #tpu.memory_space<vmem>>, vector<1x1x8x16xbf16>
    %63 = vector.shape_cast %62 : vector<1x1x8x16xbf16> to vector<8x16xbf16>
    %64 = vector.shape_cast %61 : vector<8x16xbf16> to vector<1x1x8x16xbf16>
    tpu.vector_store %arg7[%c0_62, %c2_63, %c0_64, %c0_65], %64 {strides = array<i32>} : memref<1x8x8x16xbf16, #tpu.memory_space<vmem>>, vector<1x1x8x16xbf16>,
    %c2_66 = arith.constant 2 : index
    %c0_67 = arith.constant 0 : index
    %c0_68 = arith.constant 0 : index
    %65 = vector.load %arg5[%c2_66, %c0_67, %c0_68] : memref<8x128x16xbf16, #tpu.memory_space<vmem>>, vector<1x128x16xbf16>
    %66 = vector.shape_cast %65 : vector<1x128x16xbf16> to vector<128x16xbf16>
    %cst_69 = arith.constant dense<0.000000e+00> : vector<8x16xf32>
    %67 = tpu.matmul %2, %66, %cst_69 {dimension_numbers = #tpu.dot_dimension_numbers<[1], [0], [0], [1], [0, 0, 1, 1], [], []>} : vector<8x128xbf16>, vector<128x16xbf16>, vector<8x16xf32> -> vector<8x16xf32>
    %68 = arith.truncf %67 : vector<8x16xf32> to vector<8x16xbf16>
    %c0_70 = arith.constant 0 : index
    %c2_71 = arith.constant 2 : index
    %c0_72 = arith.constant 0 : index
    %c0_73 = arith.constant 0 : index
    %69 = vector.load %arg8[%c0_70, %c2_71, %c0_72, %c0_73] : memref<1x8x8x16xbf16, #tpu.memory_space<vmem>>, vector<1x1x8x16xbf16>
    %70 = vector.shape_cast %69 : vector<1x1x8x16xbf16> to vector<8x16xbf16>
    %71 = vector.shape_cast %68 : vector<8x16xbf16> to vector<1x1x8x16xbf16>
    tpu.vector_store %arg8[%c0_70, %c2_71, %c0_72, %c0_73], %71 {strides = array<i32>} : memref<1x8x8x16xbf16, #tpu.memory_space<vmem>>, vector<1x1x8x16xbf16>,
    %c3 = arith.constant 3 : index
    %c0_74 = arith.constant 0 : index
    %c0_75 = arith.constant 0 : index
    %72 = vector.load %arg3[%c3, %c0_74, %c0_75] : memref<8x128x16xbf16, #tpu.memory_space<vmem>>, vector<1x128x16xbf16>
    %73 = vector.shape_cast %72 : vector<1x128x16xbf16> to vector<128x16xbf16>
    %cst_76 = arith.constant dense<0.000000e+00> : vector<8x16xf32>
    %74 = tpu.matmul %2, %73, %cst_76 {dimension_numbers = #tpu.dot_dimension_numbers<[1], [0], [0], [1], [0, 0, 1, 1], [], []>} : vector<8x128xbf16>, vector<128x16xbf16>, vector<8x16xf32> -> vector<8x16xf32>
    %cst_77 = arith.constant 2.500000e-01 : f32
    %75 = vector.broadcast %cst_77 : f32 to vector<8x16xf32>
    %76 = arith.mulf %74, %75 : vector<8x16xf32>
    %77 = arith.truncf %76 : vector<8x16xf32> to vector<8x16xbf16>
    %c0_78 = arith.constant 0 : index
    %c3_79 = arith.constant 3 : index
    %c0_80 = arith.constant 0 : index
    %c0_81 = arith.constant 0 : index
    %78 = vector.load %arg6[%c0_78, %c3_79, %c0_80, %c0_81] : memref<1x8x8x16xbf16, #tpu.memory_space<vmem>>, vector<1x1x8x16xbf16>
    %79 = vector.shape_cast %78 : vector<1x1x8x16xbf16> to vector<8x16xbf16>
    %80 = vector.shape_cast %77 : vector<8x16xbf16> to vector<1x1x8x16xbf16>
    tpu.vector_store %arg6[%c0_78, %c3_79, %c0_80, %c0_81], %80 {strides = array<i32>} : memref<1x8x8x16xbf16, #tpu.memory_space<vmem>>, vector<1x1x8x16xbf16>,
    %c3_82 = arith.constant 3 : index
    %c0_83 = arith.constant 0 : index
    %c0_84 = arith.constant 0 : index
    %81 = vector.load %arg4[%c3_82, %c0_83, %c0_84] : memref<8x128x16xbf16, #tpu.memory_space<vmem>>, vector<1x128x16xbf16>
    %82 = vector.shape_cast %81 : vector<1x128x16xbf16> to vector<128x16xbf16>
    %cst_85 = arith.constant dense<0.000000e+00> : vector<8x16xf32>
    %83 = tpu.matmul %2, %82, %cst_85 {dimension_numbers = #tpu.dot_dimension_numbers<[1], [0], [0], [1], [0, 0, 1, 1], [], []>} : vector<8x128xbf16>, vector<128x16xbf16>, vector<8x16xf32> -> vector<8x16xf32>
    %84 = arith.truncf %83 : vector<8x16xf32> to vector<8x16xbf16>
    %c0_86 = arith.constant 0 : index
    %c3_87 = arith.constant 3 : index
    %c0_88 = arith.constant 0 : index
    %c0_89 = arith.constant 0 : index
    %85 = vector.load %arg7[%c0_86, %c3_87, %c0_88, %c0_89] : memref<1x8x8x16xbf16, #tpu.memory_space<vmem>>, vector<1x1x8x16xbf16>
    %86 = vector.shape_cast %85 : vector<1x1x8x16xbf16> to vector<8x16xbf16>
    %87 = vector.shape_cast %84 : vector<8x16xbf16> to vector<1x1x8x16xbf16>
    tpu.vector_store %arg7[%c0_86, %c3_87, %c0_88, %c0_89], %87 {strides = array<i32>} : memref<1x8x8x16xbf16, #tpu.memory_space<vmem>>, vector<1x1x8x16xbf16>,
    %c3_90 = arith.constant 3 : index
    %c0_91 = arith.constant 0 : index
    %c0_92 = arith.constant 0 : index
    %88 = vector.load %arg5[%c3_90, %c0_91, %c0_92] : memref<8x128x16xbf16, #tpu.memory_space<vmem>>, vector<1x128x16xbf16>
    %89 = vector.shape_cast %88 : vector<1x128x16xbf16> to vector<128x16xbf16>
    %cst_93 = arith.constant dense<0.000000e+00> : vector<8x16xf32>
    %90 = tpu.matmul %2, %89, %cst_93 {dimension_numbers = #tpu.dot_dimension_numbers<[1], [0], [0], [1], [0, 0, 1, 1], [], []>} : vector<8x128xbf16>, vector<128x16xbf16>, vector<8x16xf32> -> vector<8x16xf32>
    %91 = arith.truncf %90 : vector<8x16xf32> to vector<8x16xbf16>
    %c0_94 = arith.constant 0 : index
    %c3_95 = arith.constant 3 : index
    %c0_96 = arith.constant 0 : index
    %c0_97 = arith.constant 0 : index
    %92 = vector.load %arg8[%c0_94, %c3_95, %c0_96, %c0_97] : memref<1x8x8x16xbf16, #tpu.memory_space<vmem>>, vector<1x1x8x16xbf16>
    %93 = vector.shape_cast %92 : vector<1x1x8x16xbf16> to vector<8x16xbf16>
    %94 = vector.shape_cast %91 : vector<8x16xbf16> to vector<1x1x8x16xbf16>
    tpu.vector_store %arg8[%c0_94, %c3_95, %c0_96, %c0_97], %94 {strides = array<i32>} : memref<1x8x8x16xbf16, #tpu.memory_space<vmem>>, vector<1x1x8x16xbf16>,
    %c4 = arith.constant 4 : index
    %c0_98 = arith.constant 0 : index
    %c0_99 = arith.constant 0 : index
    %95 = vector.load %arg3[%c4, %c0_98, %c0_99] : memref<8x128x16xbf16, #tpu.memory_space<vmem>>, vector<1x128x16xbf16>
    %96 = vector.shape_cast %95 : vector<1x128x16xbf16> to vector<128x16xbf16>
    %cst_100 = arith.constant dense<0.000000e+00> : vector<8x16xf32>
    %97 = tpu.matmul %2, %96, %cst_100 {dimension_numbers = #tpu.dot_dimension_numbers<[1], [0], [0], [1], [0, 0, 1, 1], [], []>} : vector<8x128xbf16>, vector<128x16xbf16>, vector<8x16xf32> -> vector<8x16xf32>
    %cst_101 = arith.constant 2.500000e-01 : f32
    %98 = vector.broadcast %cst_101 : f32 to vector<8x16xf32>
    %99 = arith.mulf %97, %98 : vector<8x16xf32>
    %100 = arith.truncf %99 : vector<8x16xf32> to vector<8x16xbf16>
    %c0_102 = arith.constant 0 : index
    %c4_103 = arith.constant 4 : index
    %c0_104 = arith.constant 0 : index
    %c0_105 = arith.constant 0 : index
    %101 = vector.load %arg6[%c0_102, %c4_103, %c0_104, %c0_105] : memref<1x8x8x16xbf16, #tpu.memory_space<vmem>>, vector<1x1x8x16xbf16>
    %102 = vector.shape_cast %101 : vector<1x1x8x16xbf16> to vector<8x16xbf16>
    %103 = vector.shape_cast %100 : vector<8x16xbf16> to vector<1x1x8x16xbf16>
    tpu.vector_store %arg6[%c0_102, %c4_103, %c0_104, %c0_105], %103 {strides = array<i32>} : memref<1x8x8x16xbf16, #tpu.memory_space<vmem>>, vector<1x1x8x16xbf16>,
    %c4_106 = arith.constant 4 : index
    %c0_107 = arith.constant 0 : index
    %c0_108 = arith.constant 0 : index
    %104 = vector.load %arg4[%c4_106, %c0_107, %c0_108] : memref<8x128x16xbf16, #tpu.memory_space<vmem>>, vector<1x128x16xbf16>
    %105 = vector.shape_cast %104 : vector<1x128x16xbf16> to vector<128x16xbf16>
    %cst_109 = arith.constant dense<0.000000e+00> : vector<8x16xf32>
    %106 = tpu.matmul %2, %105, %cst_109 {dimension_numbers = #tpu.dot_dimension_numbers<[1], [0], [0], [1], [0, 0, 1, 1], [], []>} : vector<8x128xbf16>, vector<128x16xbf16>, vector<8x16xf32> -> vector<8x16xf32>
    %107 = arith.truncf %106 : vector<8x16xf32> to vector<8x16xbf16>
    %c0_110 = arith.constant 0 : index
    %c4_111 = arith.constant 4 : index
    %c0_112 = arith.constant 0 : index
    %c0_113 = arith.constant 0 : index
    %108 = vector.load %arg7[%c0_110, %c4_111, %c0_112, %c0_113] : memref<1x8x8x16xbf16, #tpu.memory_space<vmem>>, vector<1x1x8x16xbf16>
    %109 = vector.shape_cast %108 : vector<1x1x8x16xbf16> to vector<8x16xbf16>
    %110 = vector.shape_cast %107 : vector<8x16xbf16> to vector<1x1x8x16xbf16>
    tpu.vector_store %arg7[%c0_110, %c4_111, %c0_112, %c0_113], %110 {strides = array<i32>} : memref<1x8x8x16xbf16, #tpu.memory_space<vmem>>, vector<1x1x8x16xbf16>,
    %c4_114 = arith.constant 4 : index
    %c0_115 = arith.constant 0 : index
    %c0_116 = arith.constant 0 : index
    %111 = vector.load %arg5[%c4_114, %c0_115, %c0_116] : memref<8x128x16xbf16, #tpu.memory_space<vmem>>, vector<1x128x16xbf16>
    %112 = vector.shape_cast %111 : vector<1x128x16xbf16> to vector<128x16xbf16>
    %cst_117 = arith.constant dense<0.000000e+00> : vector<8x16xf32>
    %113 = tpu.matmul %2, %112, %cst_117 {dimension_numbers = #tpu.dot_dimension_numbers<[1], [0], [0], [1], [0, 0, 1, 1], [], []>} : vector<8x128xbf16>, vector<128x16xbf16>, vector<8x16xf32> -> vector<8x16xf32>
    %114 = arith.truncf %113 : vector<8x16xf32> to vector<8x16xbf16>
    %c0_118 = arith.constant 0 : index
    %c4_119 = arith.constant 4 : index
    %c0_120 = arith.constant 0 : index
    %c0_121 = arith.constant 0 : index
    %115 = vector.load %arg8[%c0_118, %c4_119, %c0_120, %c0_121] : memref<1x8x8x16xbf16, #tpu.memory_space<vmem>>, vector<1x1x8x16xbf16>
    %116 = vector.shape_cast %115 : vector<1x1x8x16xbf16> to vector<8x16xbf16>
    %117 = vector.shape_cast %114 : vector<8x16xbf16> to vector<1x1x8x16xbf16>
    tpu.vector_store %arg8[%c0_118, %c4_119, %c0_120, %c0_121], %117 {strides = array<i32>} : memref<1x8x8x16xbf16, #tpu.memory_space<vmem>>, vector<1x1x8x16xbf16>,
    %c5 = arith.constant 5 : index
    %c0_122 = arith.constant 0 : index
    %c0_123 = arith.constant 0 : index
    %118 = vector.load %arg3[%c5, %c0_122, %c0_123] : memref<8x128x16xbf16, #tpu.memory_space<vmem>>, vector<1x128x16xbf16>
    %119 = vector.shape_cast %118 : vector<1x128x16xbf16> to vector<128x16xbf16>
    %cst_124 = arith.constant dense<0.000000e+00> : vector<8x16xf32>
    %120 = tpu.matmul %2, %119, %cst_124 {dimension_numbers = #tpu.dot_dimension_numbers<[1], [0], [0], [1], [0, 0, 1, 1], [], []>} : vector<8x128xbf16>, vector<128x16xbf16>, vector<8x16xf32> -> vector<8x16xf32>
    %cst_125 = arith.constant 2.500000e-01 : f32
    %121 = vector.broadcast %cst_125 : f32 to vector<8x16xf32>
    %122 = arith.mulf %120, %121 : vector<8x16xf32>
    %123 = arith.truncf %122 : vector<8x16xf32> to vector<8x16xbf16>
    %c0_126 = arith.constant 0 : index
    %c5_127 = arith.constant 5 : index
    %c0_128 = arith.constant 0 : index
    %c0_129 = arith.constant 0 : index
    %124 = vector.load %arg6[%c0_126, %c5_127, %c0_128, %c0_129] : memref<1x8x8x16xbf16, #tpu.memory_space<vmem>>, vector<1x1x8x16xbf16>
    %125 = vector.shape_cast %124 : vector<1x1x8x16xbf16> to vector<8x16xbf16>
    %126 = vector.shape_cast %123 : vector<8x16xbf16> to vector<1x1x8x16xbf16>
    tpu.vector_store %arg6[%c0_126, %c5_127, %c0_128, %c0_129], %126 {strides = array<i32>} : memref<1x8x8x16xbf16, #tpu.memory_space<vmem>>, vector<1x1x8x16xbf16>,
    %c5_130 = arith.constant 5 : index
    %c0_131 = arith.constant 0 : index
    %c0_132 = arith.constant 0 : index
    %127 = vector.load %arg4[%c5_130, %c0_131, %c0_132] : memref<8x128x16xbf16, #tpu.memory_space<vmem>>, vector<1x128x16xbf16>
    %128 = vector.shape_cast %127 : vector<1x128x16xbf16> to vector<128x16xbf16>
    %cst_133 = arith.constant dense<0.000000e+00> : vector<8x16xf32>
    %129 = tpu.matmul %2, %128, %cst_133 {dimension_numbers = #tpu.dot_dimension_numbers<[1], [0], [0], [1], [0, 0, 1, 1], [], []>} : vector<8x128xbf16>, vector<128x16xbf16>, vector<8x16xf32> -> vector<8x16xf32>
    %130 = arith.truncf %129 : vector<8x16xf32> to vector<8x16xbf16>
    %c0_134 = arith.constant 0 : index
    %c5_135 = arith.constant 5 : index
    %c0_136 = arith.constant 0 : index
    %c0_137 = arith.constant 0 : index
    %131 = vector.load %arg7[%c0_134, %c5_135, %c0_136, %c0_137] : memref<1x8x8x16xbf16, #tpu.memory_space<vmem>>, vector<1x1x8x16xbf16>
    %132 = vector.shape_cast %131 : vector<1x1x8x16xbf16> to vector<8x16xbf16>
    %133 = vector.shape_cast %130 : vector<8x16xbf16> to vector<1x1x8x16xbf16>
    tpu.vector_store %arg7[%c0_134, %c5_135, %c0_136, %c0_137], %133 {strides = array<i32>} : memref<1x8x8x16xbf16, #tpu.memory_space<vmem>>, vector<1x1x8x16xbf16>,
    %c5_138 = arith.constant 5 : index
    %c0_139 = arith.constant 0 : index
    %c0_140 = arith.constant 0 : index
    %134 = vector.load %arg5[%c5_138, %c0_139, %c0_140] : memref<8x128x16xbf16, #tpu.memory_space<vmem>>, vector<1x128x16xbf16>
    %135 = vector.shape_cast %134 : vector<1x128x16xbf16> to vector<128x16xbf16>
    %cst_141 = arith.constant dense<0.000000e+00> : vector<8x16xf32>
    %136 = tpu.matmul %2, %135, %cst_141 {dimension_numbers = #tpu.dot_dimension_numbers<[1], [0], [0], [1], [0, 0, 1, 1], [], []>} : vector<8x128xbf16>, vector<128x16xbf16>, vector<8x16xf32> -> vector<8x16xf32>
    %137 = arith.truncf %136 : vector<8x16xf32> to vector<8x16xbf16>
    %c0_142 = arith.constant 0 : index
    %c5_143 = arith.constant 5 : index
    %c0_144 = arith.constant 0 : index
    %c0_145 = arith.constant 0 : index
    %138 = vector.load %arg8[%c0_142, %c5_143, %c0_144, %c0_145] : memref<1x8x8x16xbf16, #tpu.memory_space<vmem>>, vector<1x1x8x16xbf16>
    %139 = vector.shape_cast %138 : vector<1x1x8x16xbf16> to vector<8x16xbf16>
    %140 = vector.shape_cast %137 : vector<8x16xbf16> to vector<1x1x8x16xbf16>
    tpu.vector_store %arg8[%c0_142, %c5_143, %c0_144, %c0_145], %140 {strides = array<i32>} : memref<1x8x8x16xbf16, #tpu.memory_space<vmem>>, vector<1x1x8x16xbf16>,
    %c6 = arith.constant 6 : index
    %c0_146 = arith.constant 0 : index
    %c0_147 = arith.constant 0 : index
    %141 = vector.load %arg3[%c6, %c0_146, %c0_147] : memref<8x128x16xbf16, #tpu.memory_space<vmem>>, vector<1x128x16xbf16>
    %142 = vector.shape_cast %141 : vector<1x128x16xbf16> to vector<128x16xbf16>
    %cst_148 = arith.constant dense<0.000000e+00> : vector<8x16xf32>
    %143 = tpu.matmul %2, %142, %cst_148 {dimension_numbers = #tpu.dot_dimension_numbers<[1], [0], [0], [1], [0, 0, 1, 1], [], []>} : vector<8x128xbf16>, vector<128x16xbf16>, vector<8x16xf32> -> vector<8x16xf32>
    %cst_149 = arith.constant 2.500000e-01 : f32
    %144 = vector.broadcast %cst_149 : f32 to vector<8x16xf32>
    %145 = arith.mulf %143, %144 : vector<8x16xf32>
    %146 = arith.truncf %145 : vector<8x16xf32> to vector<8x16xbf16>
    %c0_150 = arith.constant 0 : index
    %c6_151 = arith.constant 6 : index
    %c0_152 = arith.constant 0 : index
    %c0_153 = arith.constant 0 : index
    %147 = vector.load %arg6[%c0_150, %c6_151, %c0_152, %c0_153] : memref<1x8x8x16xbf16, #tpu.memory_space<vmem>>, vector<1x1x8x16xbf16>
    %148 = vector.shape_cast %147 : vector<1x1x8x16xbf16> to vector<8x16xbf16>
    %149 = vector.shape_cast %146 : vector<8x16xbf16> to vector<1x1x8x16xbf16>
    tpu.vector_store %arg6[%c0_150, %c6_151, %c0_152, %c0_153], %149 {strides = array<i32>} : memref<1x8x8x16xbf16, #tpu.memory_space<vmem>>, vector<1x1x8x16xbf16>,
    %c6_154 = arith.constant 6 : index
    %c0_155 = arith.constant 0 : index
    %c0_156 = arith.constant 0 : index
    %150 = vector.load %arg4[%c6_154, %c0_155, %c0_156] : memref<8x128x16xbf16, #tpu.memory_space<vmem>>, vector<1x128x16xbf16>
    %151 = vector.shape_cast %150 : vector<1x128x16xbf16> to vector<128x16xbf16>
    %cst_157 = arith.constant dense<0.000000e+00> : vector<8x16xf32>
    %152 = tpu.matmul %2, %151, %cst_157 {dimension_numbers = #tpu.dot_dimension_numbers<[1], [0], [0], [1], [0, 0, 1, 1], [], []>} : vector<8x128xbf16>, vector<128x16xbf16>, vector<8x16xf32> -> vector<8x16xf32>
    %153 = arith.truncf %152 : vector<8x16xf32> to vector<8x16xbf16>
    %c0_158 = arith.constant 0 : index
    %c6_159 = arith.constant 6 : index
    %c0_160 = arith.constant 0 : index
    %c0_161 = arith.constant 0 : index
    %154 = vector.load %arg7[%c0_158, %c6_159, %c0_160, %c0_161] : memref<1x8x8x16xbf16, #tpu.memory_space<vmem>>, vector<1x1x8x16xbf16>
    %155 = vector.shape_cast %154 : vector<1x1x8x16xbf16> to vector<8x16xbf16>
    %156 = vector.shape_cast %153 : vector<8x16xbf16> to vector<1x1x8x16xbf16>
    tpu.vector_store %arg7[%c0_158, %c6_159, %c0_160, %c0_161], %156 {strides = array<i32>} : memref<1x8x8x16xbf16, #tpu.memory_space<vmem>>, vector<1x1x8x16xbf16>,
    %c6_162 = arith.constant 6 : index
    %c0_163 = arith.constant 0 : index
    %c0_164 = arith.constant 0 : index
    %157 = vector.load %arg5[%c6_162, %c0_163, %c0_164] : memref<8x128x16xbf16, #tpu.memory_space<vmem>>, vector<1x128x16xbf16>
    %158 = vector.shape_cast %157 : vector<1x128x16xbf16> to vector<128x16xbf16>
    %cst_165 = arith.constant dense<0.000000e+00> : vector<8x16xf32>
    %159 = tpu.matmul %2, %158, %cst_165 {dimension_numbers = #tpu.dot_dimension_numbers<[1], [0], [0], [1], [0, 0, 1, 1], [], []>} : vector<8x128xbf16>, vector<128x16xbf16>, vector<8x16xf32> -> vector<8x16xf32>
    %160 = arith.truncf %159 : vector<8x16xf32> to vector<8x16xbf16>
    %c0_166 = arith.constant 0 : index
    %c6_167 = arith.constant 6 : index
    %c0_168 = arith.constant 0 : index
    %c0_169 = arith.constant 0 : index
    %161 = vector.load %arg8[%c0_166, %c6_167, %c0_168, %c0_169] : memref<1x8x8x16xbf16, #tpu.memory_space<vmem>>, vector<1x1x8x16xbf16>
    %162 = vector.shape_cast %161 : vector<1x1x8x16xbf16> to vector<8x16xbf16>
    %163 = vector.shape_cast %160 : vector<8x16xbf16> to vector<1x1x8x16xbf16>
    tpu.vector_store %arg8[%c0_166, %c6_167, %c0_168, %c0_169], %163 {strides = array<i32>} : memref<1x8x8x16xbf16, #tpu.memory_space<vmem>>, vector<1x1x8x16xbf16>,
    %c7 = arith.constant 7 : index
    %c0_170 = arith.constant 0 : index
    %c0_171 = arith.constant 0 : index
    %164 = vector.load %arg3[%c7, %c0_170, %c0_171] : memref<8x128x16xbf16, #tpu.memory_space<vmem>>, vector<1x128x16xbf16>
    %165 = vector.shape_cast %164 : vector<1x128x16xbf16> to vector<128x16xbf16>
    %cst_172 = arith.constant dense<0.000000e+00> : vector<8x16xf32>
    %166 = tpu.matmul %2, %165, %cst_172 {dimension_numbers = #tpu.dot_dimension_numbers<[1], [0], [0], [1], [0, 0, 1, 1], [], []>} : vector<8x128xbf16>, vector<128x16xbf16>, vector<8x16xf32> -> vector<8x16xf32>
    %cst_173 = arith.constant 2.500000e-01 : f32
    %167 = vector.broadcast %cst_173 : f32 to vector<8x16xf32>
    %168 = arith.mulf %166, %167 : vector<8x16xf32>
    %169 = arith.truncf %168 : vector<8x16xf32> to vector<8x16xbf16>
    %c0_174 = arith.constant 0 : index
    %c7_175 = arith.constant 7 : index
    %c0_176 = arith.constant 0 : index
    %c0_177 = arith.constant 0 : index
    %170 = vector.load %arg6[%c0_174, %c7_175, %c0_176, %c0_177] : memref<1x8x8x16xbf16, #tpu.memory_space<vmem>>, vector<1x1x8x16xbf16>
    %171 = vector.shape_cast %170 : vector<1x1x8x16xbf16> to vector<8x16xbf16>
    %172 = vector.shape_cast %169 : vector<8x16xbf16> to vector<1x1x8x16xbf16>
    tpu.vector_store %arg6[%c0_174, %c7_175, %c0_176, %c0_177], %172 {strides = array<i32>} : memref<1x8x8x16xbf16, #tpu.memory_space<vmem>>, vector<1x1x8x16xbf16>,
    %c7_178 = arith.constant 7 : index
    %c0_179 = arith.constant 0 : index
    %c0_180 = arith.constant 0 : index
    %173 = vector.load %arg4[%c7_178, %c0_179, %c0_180] : memref<8x128x16xbf16, #tpu.memory_space<vmem>>, vector<1x128x16xbf16>
    %174 = vector.shape_cast %173 : vector<1x128x16xbf16> to vector<128x16xbf16>
    %cst_181 = arith.constant dense<0.000000e+00> : vector<8x16xf32>
    %175 = tpu.matmul %2, %174, %cst_181 {dimension_numbers = #tpu.dot_dimension_numbers<[1], [0], [0], [1], [0, 0, 1, 1], [], []>} : vector<8x128xbf16>, vector<128x16xbf16>, vector<8x16xf32> -> vector<8x16xf32>
    %176 = arith.truncf %175 : vector<8x16xf32> to vector<8x16xbf16>
    %c0_182 = arith.constant 0 : index
    %c7_183 = arith.constant 7 : index
    %c0_184 = arith.constant 0 : index
    %c0_185 = arith.constant 0 : index
    %177 = vector.load %arg7[%c0_182, %c7_183, %c0_184, %c0_185] : memref<1x8x8x16xbf16, #tpu.memory_space<vmem>>, vector<1x1x8x16xbf16>
    %178 = vector.shape_cast %177 : vector<1x1x8x16xbf16> to vector<8x16xbf16>
    %179 = vector.shape_cast %176 : vector<8x16xbf16> to vector<1x1x8x16xbf16>
    tpu.vector_store %arg7[%c0_182, %c7_183, %c0_184, %c0_185], %179 {strides = array<i32>} : memref<1x8x8x16xbf16, #tpu.memory_space<vmem>>, vector<1x1x8x16xbf16>,
    %c7_186 = arith.constant 7 : index
    %c0_187 = arith.constant 0 : index
    %c0_188 = arith.constant 0 : index
    %180 = vector.load %arg5[%c7_186, %c0_187, %c0_188] : memref<8x128x16xbf16, #tpu.memory_space<vmem>>, vector<1x128x16xbf16>
    %181 = vector.shape_cast %180 : vector<1x128x16xbf16> to vector<128x16xbf16>
    %cst_189 = arith.constant dense<0.000000e+00> : vector<8x16xf32>
    %182 = tpu.matmul %2, %181, %cst_189 {dimension_numbers = #tpu.dot_dimension_numbers<[1], [0], [0], [1], [0, 0, 1, 1], [], []>} : vector<8x128xbf16>, vector<128x16xbf16>, vector<8x16xf32> -> vector<8x16xf32>
    %183 = arith.truncf %182 : vector<8x16xf32> to vector<8x16xbf16>
    %c0_190 = arith.constant 0 : index
    %c7_191 = arith.constant 7 : index
    %c0_192 = arith.constant 0 : index
    %c0_193 = arith.constant 0 : index
    %184 = vector.load %arg8[%c0_190, %c7_191, %c0_192, %c0_193] : memref<1x8x8x16xbf16, #tpu.memory_space<vmem>>, vector<1x1x8x16xbf16>
    %185 = vector.shape_cast %184 : vector<1x1x8x16xbf16> to vector<8x16xbf16>
    %186 = vector.shape_cast %183 : vector<8x16xbf16> to vector<1x1x8x16xbf16>
    tpu.vector_store %arg8[%c0_190, %c7_191, %c0_192, %c0_193], %186 {strides = array<i32>} : memref<1x8x8x16xbf16, #tpu.memory_space<vmem>>, vector<1x1x8x16xbf16>,
    return
  }
  func.func @transform_0(%arg0: i32, %arg1: i32) -> (i32, i32, i32) {
    %c0_i32 = arith.constant 0 : i32
    %c0_i32_0 = arith.constant 0 : i32
    return %arg0, %arg1, %c0_i32 : i32, i32, i32
  }
  func.func @transform_1(%arg0: i32, %arg1: i32) -> (i32, i32, i32) {
    %c0_i32 = arith.constant 0 : i32
    %c0_i32_0 = arith.constant 0 : i32
    %c0_i32_1 = arith.constant 0 : i32
    %c0_i32_2 = arith.constant 0 : i32
    return %c0_i32, %c0_i32_0, %c0_i32_1 : i32, i32, i32
  }
  func.func @transform_2(%arg0: i32, %arg1: i32) -> (i32, i32, i32) {
    %c0_i32 = arith.constant 0 : i32
    %c0_i32_0 = arith.constant 0 : i32
    %c0_i32_1 = arith.constant 0 : i32
    %c0_i32_2 = arith.constant 0 : i32
    return %c0_i32, %c0_i32_0, %c0_i32_1 : i32, i32, i32
  }
  func.func @transform_3(%arg0: i32, %arg1: i32) -> (i32, i32, i32) {
    %c0_i32 = arith.constant 0 : i32
    %c0_i32_0 = arith.constant 0 : i32
    %c0_i32_1 = arith.constant 0 : i32
    %c0_i32_2 = arith.constant 0 : i32
    return %c0_i32, %c0_i32_0, %c0_i32_1 : i32, i32, i32
  }
  func.func @transform_4(%arg0: i32, %arg1: i32) -> (i32, i32, i32, i32) {
    %c0_i32 = arith.constant 0 : i32
    %c0_i32_0 = arith.constant 0 : i32
    %c0_i32_1 = arith.constant 0 : i32
    return %arg0, %c0_i32, %arg1, %c0_i32_0 : i32, i32, i32, i32
  }
  func.func @transform_5(%arg0: i32, %arg1: i32) -> (i32, i32, i32, i32) {
    %c0_i32 = arith.constant 0 : i32
    %c0_i32_0 = arith.constant 0 : i32
    %c0_i32_1 = arith.constant 0 : i32
    return %arg0, %c0_i32, %arg1, %c0_i32_0 : i32, i32, i32, i32
  }
  func.func @transform_6(%arg0: i32, %arg1: i32) -> (i32, i32, i32, i32) {
    %c0_i32 = arith.constant 0 : i32
    %c0_i32_0 = arith.constant 0 : i32
    %c0_i32_1 = arith.constant 0 : i32
    return %arg0, %c0_i32, %arg1, %c0_i32_0 : i32, i32, i32, i32
  }
}

</mosaic_0001>

<llo_original>
// kernel: tpu_custom_call.1
$region0: #{tpu_custom_call.1}
  #allocation0 [shape = 'u32[]', space=smem, size = 0x4, offset = 0x4, fixed_abs, tag = 'smem constant byte address 0x4 - core index']
  #allocation1 [shape = 'u32[144,128]{1,0:T(1,128)}', space=vmem, size = 0x12000, scoped, tag = 'internal scratch']
  %s0 = inlined_call_operand.vmem [shape: f32[2,16,128], index: 0, kind: input, shape index: {}]
  %s1 = inlined_call_operand.vmem [shape: bf16[8,128,16], index: 1, kind: input, shape index: {}]
  %s2 = inlined_call_operand.vmem [shape: bf16[8,128,16], index: 2, kind: input, shape index: {}]
  %s3 = inlined_call_operand.vmem [shape: bf16[8,128,16], index: 3, kind: input, shape index: {}]
  %s4 = inlined_call_operand.hbm [shape: bf16[2,8,16,16], index: 4, kind: output, shape index: {0}]
  %s5 = inlined_call_operand.hbm [shape: bf16[2,8,16,16], index: 5, kind: output, shape index: {1}]
  %s6 = inlined_call_operand.hbm [shape: bf16[2,8,16,16], index: 6, kind: output, shape index: {2}]
  %7 = xla_tuple %s4, %s5, %s6
  %s8 = sld [smem:[#allocation0]]
  $region65: #{tpu_custom_call.1} parent=0
    _
  %s10 = ssub.s32 1, %s8
  %s11 = scalar_select 0, %s10, %s8
  $region1: #{tpu_custom_call.1} parent=0
    #allocation2 [shape = 'u8[32768]{0}', space=vmem, size = 0x8000, scoped, tag = 'output window, operand 0']
    #allocation3 [shape = 's32[2]{0}', space=sflag, size = 0x8, scoped, tag = 'scoped memory for tpu_custom_call.1']
    #allocation4 [shape = 'u8[32768]{0}', space=vmem, size = 0x8000, scoped, tag = 'output window, operand 1']
    #allocation5 [shape = 's32[2]{0}', space=sflag, size = 0x8, scoped, tag = 'scoped memory for tpu_custom_call.1']
    #allocation6 [shape = 'u8[32768]{0}', space=vmem, size = 0x8000, scoped, tag = 'output window, operand 2']
    %12 = vsyncpa [#allocation3], 0
    %s13 = scalar_lea.sflag [#allocation3], 1
    %14 = vsyncpa %s13, 0
    %15 = vsyncpa [#allocation5], 0
    %s16 = scalar_lea.sflag [#allocation5], 1
    %17 = vsyncpa %s16, 0
    loop: start=0, step=1, limit=6
    $region2: #{tpu_custom_call.1} parent=1 // loop_pre_header
      _
    $region3: #{tpu_custom_call.1} parent=1 // loop_header
      %s19 = sphi 0, %s23
      %p20 = scmp.ge.s32.totalorder %s19, 6
      %s26 = sphi 0, %s38
      %s27 = sphi 0, %s34
      %s28 = sphi 0, %s26
      %s29 = sphi 0, %s27
      %s30 = sphi 0, %s28
      %s31 = sphi 0, %s29
      %s43 = sphi 0, %s45
      %s46 = sphi 0, %s43
      %s47 = sphi 0, %s46
      %s63 = sphi 0, %s47
      %s67 = sphi 0, %s67
      %s69 = sphi 0, %s67
      %s70 = sphi 0, %s69
      %s84 = sphi 0, %s70
      %s88 = sphi 0, %s88
      %s90 = sphi 0, %s88
      %s91 = sphi 0, %s90
      %s105 = sphi 0, %s91
      %s109 = sphi 0, %s109
      %s111 = sphi 0, %s109
      %s112 = sphi 0, %s111
      %s126 = sphi 0, %s112
      %s134 = sphi 0, %s136
      %s137 = sphi 0, %s134
      %s138 = sphi 0, %s137
      %s154 = sphi 0, %s138
      %s162 = sphi 0, %s164
      %s165 = sphi 0, %s162
      %s166 = sphi 0, %s165
      %s182 = sphi 0, %s166
      %s190 = sphi 0, %s192
      %s193 = sphi 0, %s190
      %s194 = sphi 0, %s193
      %s210 = sphi 0, %s194
    $region4: #{tpu_custom_call.1} parent=1 // loop_header_branch
      %22 = sbr.rel (%p20) target = $region8
    $region5: #{tpu_custom_call.1} parent=1 // loop_body
      %s24 = ssub.s32 %s19, 1
      %s25 = ssub.s32 %s19, 2
      %s32 = sadd.s32 1, %s27
      %p33 = scmp.ge.s32.totalorder %s32, 2
      %s34 = scalar_select %p33, 0, %s32
      %s35 = sadd.s32 1, %s26
      %s36 = scalar_select %p33, %s35, %s26
      %p37 = scmp.ge.s32.totalorder %s36, 2
      %s38 = scalar_select %p37, 0, %s36
      %s39 = ssub.s32 %s26, %s38
      %s40 = ssub.s32 %s27, %s34
      %s41 = sor.u32 %s39, %s40
      %p42 = scmp.eq.s32.totalorder %s41, 0
      %s44 = sadd.s32 %s43, 1
      %s45 = scalar_select %p42, %s43, %s44
      %p48 = pneg %p42
      %p49 = scmp.eq.s32.totalorder %s19, 3
      %p50 = por %p48, %p49
      %p51 = scmp.ne.s32.totalorder %s43, %s46
      %p52 = scmp.eq.s32.totalorder %s19, 0
      %p53 = por %p51, %p52
      %p54 = scmp.ne.s32.totalorder %s43, %s46
      %p55 = scmp.eq.s32.totalorder %s24, 3
      %p56 = por %p54, %p55
      %p57 = scmp.ne.s32.totalorder %s46, %s47
      %p58 = scmp.eq.s32.totalorder %s24, 0
      %p59 = por %p57, %p58
      %p60 = scmp.ne.s32.totalorder %s46, %s47
      %p61 = scmp.eq.s32.totalorder %s25, 3
      %p62 = por %p60, %p61
      %p64 = scmp.ne.s32.totalorder %s47, %s63
      %p65 = scmp.eq.s32.totalorder %s25, 0
      %p66 = por %p64, %p65
      %s68 = sadd.s32 %s67, 1
      %p71 = scmp.eq.s32.totalorder %s19, 3
      %p72 = scmp.ne.s32.totalorder %s67, %s69
      %p73 = scmp.eq.s32.totalorder %s19, 0
      %p74 = por %p72, %p73
      %p75 = scmp.ne.s32.totalorder %s67, %s69
      %p76 = scmp.eq.s32.totalorder %s24, 3
      %p77 = por %p75, %p76
      %p78 = scmp.ne.s32.totalorder %s69, %s70
      %p79 = scmp.eq.s32.totalorder %s24, 0
      %p80 = por %p78, %p79
      %p81 = scmp.ne.s32.totalorder %s69, %s70
      %p82 = scmp.eq.s32.totalorder %s25, 3
      %p83 = por %p81, %p82
      %p85 = scmp.ne.s32.totalorder %s70, %s84
      %p86 = scmp.eq.s32.totalorder %s25, 0
      %p87 = por %p85, %p86
      %s89 = sadd.s32 %s88, 1
      %p92 = scmp.eq.s32.totalorder %s19, 3
      %p93 = scmp.ne.s32.totalorder %s88, %s90
      %p94 = scmp.eq.s32.totalorder %s19, 0
      %p95 = por %p93, %p94
      %p96 = scmp.ne.s32.totalorder %s88, %s90
      %p97 = scmp.eq.s32.totalorder %s24, 3
      %p98 = por %p96, %p97
      %p99 = scmp.ne.s32.totalorder %s90, %s91
      %p100 = scmp.eq.s32.totalorder %s24, 0
      %p101 = por %p99, %p100
      %p102 = scmp.ne.s32.totalorder %s90, %s91
      %p103 = scmp.eq.s32.totalorder %s25, 3
      %p104 = por %p102, %p103
      %p106 = scmp.ne.s32.totalorder %s91, %s105
      %p107 = scmp.eq.s32.totalorder %s25, 0
      %p108 = por %p106, %p107
      %s110 = sadd.s32 %s109, 1
      %p113 = scmp.eq.s32.totalorder %s19, 3
      %p114 = scmp.ne.s32.totalorder %s109, %s111
      %p115 = scmp.eq.s32.totalorder %s19, 0
      %p116 = por %p114, %p115
      %p117 = scmp.ne.s32.totalorder %s109, %s111
      %p118 = scmp.eq.s32.totalorder %s24, 3
      %p119 = por %p117, %p118
      %p120 = scmp.ne.s32.totalorder %s111, %s112
      %p121 = scmp.eq.s32.totalorder %s24, 0
      %p122 = por %p120, %p121
      %p123 = scmp.ne.s32.totalorder %s111, %s112
      %p124 = scmp.eq.s32.totalorder %s25, 3
      %p125 = por %p123, %p124
      %p127 = scmp.ne.s32.totalorder %s112, %s126
      %p128 = scmp.eq.s32.totalorder %s25, 0
      %p129 = por %p127, %p128
      %s130 = ssub.s32 %s26, %s38
      %s131 = ssub.s32 %s27, %s34
      %s132 = sor.u32 %s130, %s131
      %p133 = scmp.eq.s32.totalorder %s132, 0
      %s135 = sadd.s32 %s134, 1
      %s136 = scalar_select %p133, %s134, %s135
      %p139 = pneg %p133
      %p140 = scmp.eq.s32.totalorder %s19, 3
      %p141 = por %p139, %p140
      %p142 = scmp.ne.s32.totalorder %s134, %s137
      %p143 = scmp.eq.s32.totalorder %s19, 0
      %p144 = por %p142, %p143
      %p145 = scmp.ne.s32.totalorder %s134, %s137
      %p146 = scmp.eq.s32.totalorder %s24, 3
      %p147 = por %p145, %p146
      %p148 = scmp.ne.s32.totalorder %s137, %s138
      %p149 = scmp.eq.s32.totalorder %s24, 0
      %p150 = por %p148, %p149
      %p151 = scmp.ne.s32.totalorder %s137, %s138
      %p152 = scmp.eq.s32.totalorder %s25, 3
      %p153 = por %p151, %p152
      %p155 = scmp.ne.s32.totalorder %s138, %s154
      %p156 = scmp.eq.s32.totalorder %s25, 0
      %p157 = por %p155, %p156
      %s158 = ssub.s32 %s26, %s38
      %s159 = ssub.s32 %s27, %s34
      %s160 = sor.u32 %s158, %s159
      %p161 = scmp.eq.s32.totalorder %s160, 0
      %s163 = sadd.s32 %s162, 1
      %s164 = scalar_select %p161, %s162, %s163
      %p167 = pneg %p161
      %p168 = scmp.eq.s32.totalorder %s19, 3
      %p169 = por %p167, %p168
      %p170 = scmp.ne.s32.totalorder %s162, %s165
      %p171 = scmp.eq.s32.totalorder %s19, 0
      %p172 = por %p170, %p171
      %p173 = scmp.ne.s32.totalorder %s162, %s165
      %p174 = scmp.eq.s32.totalorder %s24, 3
      %p175 = por %p173, %p174
      %p176 = scmp.ne.s32.totalorder %s165, %s166
      %p177 = scmp.eq.s32.totalorder %s24, 0
      %p178 = por %p176, %p177
      %p179 = scmp.ne.s32.totalorder %s165, %s166
      %p180 = scmp.eq.s32.totalorder %s25, 3
      %p181 = por %p179, %p180
      %p183 = scmp.ne.s32.totalorder %s166, %s182
      %p184 = scmp.eq.s32.totalorder %s25, 0
      %p185 = por %p183, %p184
      %s186 = ssub.s32 %s26, %s38
      %s187 = ssub.s32 %s27, %s34
      %s188 = sor.u32 %s186, %s187
      %p189 = scmp.eq.s32.totalorder %s188, 0
      %s191 = sadd.s32 %s190, 1
      %s192 = scalar_select %p189, %s190, %s191
      %p195 = pneg %p189
      %p196 = scmp.eq.s32.totalorder %s19, 3
      %p197 = por %p195, %p196
      %p198 = scmp.ne.s32.totalorder %s190, %s193
      %p199 = scmp.eq.s32.totalorder %s19, 0
      %p200 = por %p198, %p199
      %p201 = scmp.ne.s32.totalorder %s190, %s193
      %p202 = scmp.eq.s32.totalorder %s24, 3
      %p203 = por %p201, %p202
      %p204 = scmp.ne.s32.totalorder %s193, %s194
      %p205 = scmp.eq.s32.totalorder %s24, 0
      %p206 = por %p204, %p205
      %p207 = scmp.ne.s32.totalorder %s193, %s194
      %p208 = scmp.eq.s32.totalorder %s25, 3
      %p209 = por %p207, %p208
      %p211 = scmp.ne.s32.totalorder %s194, %s210
      %p212 = scmp.eq.s32.totalorder %s25, 0
      %p213 = por %p211, %p212
      %p214 = scmp.le.s32.totalorder 1, %s19
      %p215 = scmp.lt.s32.totalorder %s19, 5
      %p216 = pnand %p214, %p215
      %p217 = pneg %p216
      // Predicated region
      $region9: #{tpu_custom_call.1} parent=5 // pred_check
        _
      $region10: #{tpu_custom_call.1} parent=5 // pred_check_branch
        %219 = sbr.rel (%p216) target = $region12
      $region11: #{tpu_custom_call.1} parent=5 // pred_region
        %s220 = ssub.s32 %s19, 1
        // Predicated region
        $region13: #{tpu_custom_call.1} parent=11 // pred_check
          %p221 = pneg %p80
        $region14: #{tpu_custom_call.1} parent=11 // pred_check_branch
          %223 = sbr.rel (%p221) target = $region16
        $region15: #{tpu_custom_call.1} parent=11 // pred_region
          _
        $region16: #{tpu_custom_call.1} parent=11 // pred_fallthru
          _
        // Predicated region
        $region17: #{tpu_custom_call.1} parent=11 // pred_check
          %p224 = pneg %p101
        $region18: #{tpu_custom_call.1} parent=11 // pred_check_branch
          %226 = sbr.rel (%p224) target = $region20
        $region19: #{tpu_custom_call.1} parent=11 // pred_region
          _
        $region20: #{tpu_custom_call.1} parent=11 // pred_fallthru
          _
        // Predicated region
        $region21: #{tpu_custom_call.1} parent=11 // pred_check
          %p227 = pneg %p122
        $region22: #{tpu_custom_call.1} parent=11 // pred_check_branch
          %229 = sbr.rel (%p227) target = $region24
        $region23: #{tpu_custom_call.1} parent=11 // pred_region
          _
        $region24: #{tpu_custom_call.1} parent=11 // pred_fallthru
          _
      $region12: #{tpu_custom_call.1} parent=5 // pred_fallthru
        _
      %p230 = scmp.lt.s32.totalorder %s19, 4
      // Predicated region
      $region25: #{tpu_custom_call.1} parent=5 // pred_check
        %p231 = pneg %p230
      $region26: #{tpu_custom_call.1} parent=5 // pred_check_branch
        %233 = sbr.rel (%p231) target = $region28
      $region27: #{tpu_custom_call.1} parent=5 // pred_region
        // Predicated region
        $region29: #{tpu_custom_call.1} parent=27 // pred_check
          %p234 = pneg %p53
        $region30: #{tpu_custom_call.1} parent=27 // pred_check_branch
          %236 = sbr.rel (%p234) target = $region32
        $region31: #{tpu_custom_call.1} parent=27 // pred_region
          %p237 = scmp.lt.s32.totalorder %s26, 1
          %s238 = scalar_select %p237, %s26, 1
          %p239 = scmp.lt.s32.totalorder %s27, 1
          %s240 = scalar_select %p239, %s27, 1
          %s241 = smul.addr %s238, 2
          %s242 = sadd.s32 %s240, %s241
          %s243 = smul.addr %s242, 8
          %s244 = scalar_lea.vmem %s0, %s243
        $region32: #{tpu_custom_call.1} parent=27 // pred_fallthru
          _
      $region28: #{tpu_custom_call.1} parent=5 // pred_fallthru
        _
      %p245 = scmp.le.s32.totalorder 1, %s19
      %p246 = scmp.lt.s32.totalorder %s19, 5
      %p247 = pnand %p245, %p246
      %p248 = pneg %p247
      // Predicated region
      $region33: #{tpu_custom_call.1} parent=5 // pred_check
        _
      $region34: #{tpu_custom_call.1} parent=5 // pred_check_branch
        %250 = sbr.rel (%p247) target = $region36
      $region35: #{tpu_custom_call.1} parent=5 // pred_region
        %s251 = ssub.s32 %s19, 1
        %p252 = scmp.lt.s32.totalorder %s28, 1
        %s253 = scalar_select %p252, %s28, 1
        %p254 = scmp.lt.s32.totalorder %s29, 1
        %s255 = scalar_select %p254, %s29, 1
        %s256 = smul.addr %s253, 2
        %s257 = sadd.s32 %s255, %s256
        %s258 = smul.addr %s257, 8
        %s259 = scalar_lea.vmem %s0, %s258
        %p260 = pneg %p59
        %p261 = pneg %p56
        %p262 = pneg %p80
        %p263 = pneg %p77
        %p264 = pneg %p101
        %p265 = pneg %p98
        %p266 = pneg %p122
        %p267 = pneg %p119
        %p268 = pneg %p150
        %p269 = pneg %p147
        %s270 = sand.u32 %s137, 1
        %s271 = scalar_lea.sflag [#allocation3], %s270
        %s272 = sand.u32 %s137, 1
        %s273 = smul.addr %s272, 32
        %s274 = scalar_lea.vmem [#allocation2], %s273
        %p275 = pneg %p178
        %p276 = pneg %p175
        %s277 = sand.u32 %s24, 1
        %s278 = scalar_lea.sflag [#allocation5], %s277
        %s279 = sand.u32 %s165, 1
        %s280 = smul.addr %s279, 32
        %s281 = scalar_lea.vmem [#allocation4], %s280
        %p282 = pneg %p206
        %p283 = pneg %p203
        %s284 = sand.u32 %s24, 1
        %s285 = scalar_lea.sflag [#allocation5], %s284
        %s286 = sand.u32 %s193, 1
        %s287 = smul.addr %s286, 32
        %s288 = scalar_lea.vmem [#allocation6], %s287
        %p289 = scmp.lt.s32.totalorder %s28, 1
        %s290 = scalar_select %p289, %s28, 1
        %p291 = scmp.lt.s32.totalorder %s29, 1
        %s292 = scalar_select %p291, %s29, 1
        %s293 = smul.addr %s290, 2
        %s294 = sadd.s32 %s292, %s293
        %s295 = smul.addr %s294, 8
        %s296 = scalar_lea.vmem %s0, %s295
        %v298 = vld [vmem:[%s296] sm:$0xff]
        %v299 = vpack.c.bf16 %v298, %v298
        %v300 = vld [vmem:[%s1] sm:$0xf]
        %v301 = vld [vmem:[%s1 + $0x4] sm:$0xf]
        %v302 = vld [vmem:[%s1 + $0x8] sm:$0xf]
        %v303 = vld [vmem:[%s1 + $0xc] sm:$0xf]
        %v304 = vld [vmem:[%s1 + $0x10] sm:$0xf]
        %v305 = vld [vmem:[%s1 + $0x14] sm:$0xf]
        %v306 = vld [vmem:[%s1 + $0x18] sm:$0xf]
        %v307 = vld [vmem:[%s1 + $0x1c] sm:$0xf]
        %v308 = vld [vmem:[%s1 + $0x20] sm:$0xf]
        %v309 = vld [vmem:[%s1 + $0x24] sm:$0xf]
        %v310 = vld [vmem:[%s1 + $0x28] sm:$0xf]
        %v311 = vld [vmem:[%s1 + $0x2c] sm:$0xf]
        %v312 = vld [vmem:[%s1 + $0x30] sm:$0xf]
        %v313 = vld [vmem:[%s1 + $0x34] sm:$0xf]
        %v314 = vld [vmem:[%s1 + $0x38] sm:$0xf]
        %v315 = vld [vmem:[%s1 + $0x3c] sm:$0xf]
        %v332 = vunpack.c.l.b16 %v300
        %v333 = vunpack.c.l.b16 %v301
        %v334 = vunpack.c.l.b16 %v302
        %v335 = vunpack.c.l.b16 %v303
        %v336 = vunpack.c.l.b16 %v304
        %v337 = vunpack.c.l.b16 %v305
        %v338 = vunpack.c.l.b16 %v306
        %v339 = vunpack.c.l.b16 %v307
        %v340 = vunpack.c.l.b16 %v308
        %v341 = vunpack.c.l.b16 %v309
        %v342 = vunpack.c.l.b16 %v310
        %v343 = vunpack.c.l.b16 %v311
        %v344 = vunpack.c.l.b16 %v312
        %v345 = vunpack.c.l.b16 %v313
        %v346 = vunpack.c.l.b16 %v314
        %v347 = vunpack.c.l.b16 %v315
        %v348 = vpack.c.b16 %v333, %v332
        %v349 = vpack.c.b16 %v335, %v334
        %v350 = vpack.c.b16 %v337, %v336
        %v351 = vpack.c.b16 %v339, %v338
        %v352 = vpack.c.b16 %v341, %v340
        %v353 = vpack.c.b16 %v343, %v342
        %v354 = vpack.c.b16 %v345, %v344
        %v355 = vpack.c.b16 %v347, %v346
        %364 = vmatprep.subr.bf16.mxu0 0
        %365 = vmatpush1.bf16.msra.mxu0 %v355
        %366 = vmatprep.subr.bf16.mxu0 0
        %367 = vmatpush1.bf16.msra.mxu0 %v354
        %368 = vmatprep.subr.bf16.mxu0 0
        %369 = vmatpush1.bf16.msra.mxu0 %v353
        %370 = vmatprep.subr.bf16.mxu0 0
        %371 = vmatpush1.bf16.msra.mxu0 %v352
        %372 = vmatprep.subr.bf16.mxu0 0
        %373 = vmatpush1.bf16.msra.mxu0 %v351
        %374 = vmatprep.subr.bf16.mxu0 0
        %375 = vmatpush1.bf16.msra.mxu0 %v350
        %376 = vmatprep.subr.bf16.mxu0 0
        %377 = vmatpush1.bf16.msra.mxu0 %v349
        %378 = vmatprep.subr.bf16.mxu0 0
        %379 = vmatpush1.bf16.msra.mxu0 %v348
        %380 = vmatprep.subr.bf16.mxu0 0
        %381 = vmatpush2.bf16.msra.mxu0 0
        %382 = vmatprep.subr.bf16.mxu0 0
        %383 = vmatpush2.bf16.msra.mxu0 0
        %384 = vmatprep.subr.bf16.mxu0 0
        %385 = vmatpush2.bf16.msra.mxu0 0
        %386 = vmatprep.subr.bf16.mxu0 0
        %387 = vmatpush2.bf16.msra.mxu0 0
        %388 = vmatprep.subr.bf16.mxu0 0
        %389 = vmatpush2.bf16.msra.mxu0 0
        %390 = vmatprep.subr.bf16.mxu0 0
        %391 = vmatpush2.bf16.msra.mxu0 0
        %392 = vmatprep.subr.bf16.mxu0 0
        %393 = vmatpush2.bf16.msra.mxu0 0
        %394 = vmatprep.subr.bf16.mxu0 0
        %395 = vmatpush2.bf16.msra.mxu0 0
        %396 = vmatprep.mubr.bf16.mxu0 0
        %397 = vmatmul.mubr.bf16.gmra.mxu0 %v299
        %v398 = vpop.f32.mrf.mxu0
        %v399 = vadd.f32 0.0, %v398
        %v400 = vpop.f32.mrf.mxu0
        %v401 = vpop.f32.mrf.mxu0
        %v402 = vpop.f32.mrf.mxu0
        %403 = vdwg.mxu0
        %v404 = vmul.f32 %v399, 0.25
        %v405 = vpack.c.bf16 %v404, %v404
        %vm406 = vcmask 125952
        %407 = vst.msk [vmem:[%s274] sm:$0xf] %vm406, %v405
        %v408 = vld [vmem:[%s2] sm:$0xf]
        %v409 = vld [vmem:[%s2 + $0x4] sm:$0xf]
        %v410 = vld [vmem:[%s2 + $0x8] sm:$0xf]
        %v411 = vld [vmem:[%s2 + $0xc] sm:$0xf]
        %v412 = vld [vmem:[%s2 + $0x10] sm:$0xf]
        %v413 = vld [vmem:[%s2 + $0x14] sm:$0xf]
        %v414 = vld [vmem:[%s2 + $0x18] sm:$0xf]
        %v415 = vld [vmem:[%s2 + $0x1c] sm:$0xf]
        %v416 = vld [vmem:[%s2 + $0x20] sm:$0xf]
        %v417 = vld [vmem:[%s2 + $0x24] sm:$0xf]
        %v418 = vld [vmem:[%s2 + $0x28] sm:$0xf]
        %v419 = vld [vmem:[%s2 + $0x2c] sm:$0xf]
        %v420 = vld [vmem:[%s2 + $0x30] sm:$0xf]
        %v421 = vld [vmem:[%s2 + $0x34] sm:$0xf]
        %v422 = vld [vmem:[%s2 + $0x38] sm:$0xf]
        %v423 = vld [vmem:[%s2 + $0x3c] sm:$0xf]
        %v440 = vunpack.c.l.b16 %v408
        %v441 = vunpack.c.l.b16 %v409
        %v442 = vunpack.c.l.b16 %v410
        %v443 = vunpack.c.l.b16 %v411
        %v444 = vunpack.c.l.b16 %v412
        %v445 = vunpack.c.l.b16 %v413
        %v446 = vunpack.c.l.b16 %v414
        %v447 = vunpack.c.l.b16 %v415
        %v448 = vunpack.c.l.b16 %v416
        %v449 = vunpack.c.l.b16 %v417
        %v450 = vunpack.c.l.b16 %v418
        %v451 = vunpack.c.l.b16 %v419
        %v452 = vunpack.c.l.b16 %v420
        %v453 = vunpack.c.l.b16 %v421
        %v454 = vunpack.c.l.b16 %v422
        %v455 = vunpack.c.l.b16 %v423
        %v456 = vpack.c.b16 %v441, %v440
        %v457 = vpack.c.b16 %v443, %v442
        %v458 = vpack.c.b16 %v445, %v444
        %v459 = vpack.c.b16 %v447, %v446
        %v460 = vpack.c.b16 %v449, %v448
        %v461 = vpack.c.b16 %v451, %v450
        %v462 = vpack.c.b16 %v453, %v452
        %v463 = vpack.c.b16 %v455, %v454
        %472 = vmatprep.subr.bf16.mxu0 0
        %473 = vmatpush1.bf16.msra.mxu0 %v463
        %474 = vmatprep.subr.bf16.mxu0 0
        %475 = vmatpush1.bf16.msra.mxu0 %v462
        %476 = vmatprep.subr.bf16.mxu0 0
        %477 = vmatpush1.bf16.msra.mxu0 %v461
        %478 = vmatprep.subr.bf16.mxu0 0
        %479 = vmatpush1.bf16.msra.mxu0 %v460
        %480 = vmatprep.subr.bf16.mxu0 0
        %481 = vmatpush1.bf16.msra.mxu0 %v459
        %482 = vmatprep.subr.bf16.mxu0 0
        %483 = vmatpush1.bf16.msra.mxu0 %v458
        %484 = vmatprep.subr.bf16.mxu0 0
        %485 = vmatpush1.bf16.msra.mxu0 %v457
        %486 = vmatprep.subr.bf16.mxu0 0
        %487 = vmatpush1.bf16.msra.mxu0 %v456
        %488 = vmatprep.subr.bf16.mxu0 0
        %489 = vmatpush2.bf16.msra.mxu0 0
        %490 = vmatprep.subr.bf16.mxu0 0
        %491 = vmatpush2.bf16.msra.mxu0 0
        %492 = vmatprep.subr.bf16.mxu0 0
        %493 = vmatpush2.bf16.msra.mxu0 0
        %494 = vmatprep.subr.bf16.mxu0 0
        %495 = vmatpush2.bf16.msra.mxu0 0
        %496 = vmatprep.subr.bf16.mxu0 0
        %497 = vmatpush2.bf16.msra.mxu0 0
        %498 = vmatprep.subr.bf16.mxu0 0
        %499 = vmatpush2.bf16.msra.mxu0 0
        %500 = vmatprep.subr.bf16.mxu0 0
        %501 = vmatpush2.bf16.msra.mxu0 0
        %502 = vmatprep.subr.bf16.mxu0 0
        %503 = vmatpush2.bf16.msra.mxu0 0
        %504 = vmatprep.mubr.bf16.mxu0 0
        %505 = vmatmul.mubr.bf16.gmra.mxu0 %v299
        %v506 = vpop.f32.mrf.mxu0
        %v507 = vadd.f32 0.0, %v506
        %v508 = vpop.f32.mrf.mxu0
        %v509 = vpop.f32.mrf.mxu0
        %v510 = vpop.f32.mrf.mxu0
        %511 = vdwg.mxu0
        %v512 = vpack.c.bf16 %v507, %v507
        %513 = vst.msk [vmem:[%s281] sm:$0xf] %vm406, %v512
        %v514 = vld [vmem:[%s3] sm:$0xf]
        %v515 = vld [vmem:[%s3 + $0x4] sm:$0xf]
        %v516 = vld [vmem:[%s3 + $0x8] sm:$0xf]
        %v517 = vld [vmem:[%s3 + $0xc] sm:$0xf]
        %v518 = vld [vmem:[%s3 + $0x10] sm:$0xf]
        %v519 = vld [vmem:[%s3 + $0x14] sm:$0xf]
        %v520 = vld [vmem:[%s3 + $0x18] sm:$0xf]
        %v521 = vld [vmem:[%s3 + $0x1c] sm:$0xf]
        %v522 = vld [vmem:[%s3 + $0x20] sm:$0xf]
        %v523 = vld [vmem:[%s3 + $0x24] sm:$0xf]
        %v524 = vld [vmem:[%s3 + $0x28] sm:$0xf]
        %v525 = vld [vmem:[%s3 + $0x2c] sm:$0xf]
        %v526 = vld [vmem:[%s3 + $0x30] sm:$0xf]
        %v527 = vld [vmem:[%s3 + $0x34] sm:$0xf]
        %v528 = vld [vmem:[%s3 + $0x38] sm:$0xf]
        %v529 = vld [vmem:[%s3 + $0x3c] sm:$0xf]
        %v546 = vunpack.c.l.b16 %v514
        %v547 = vunpack.c.l.b16 %v515
        %v548 = vunpack.c.l.b16 %v516
        %v549 = vunpack.c.l.b16 %v517
        %v550 = vunpack.c.l.b16 %v518
        %v551 = vunpack.c.l.b16 %v519
        %v552 = vunpack.c.l.b16 %v520
        %v553 = vunpack.c.l.b16 %v521
        %v554 = vunpack.c.l.b16 %v522
        %v555 = vunpack.c.l.b16 %v523
        %v556 = vunpack.c.l.b16 %v524
        %v557 = vunpack.c.l.b16 %v525
        %v558 = vunpack.c.l.b16 %v526
        %v559 = vunpack.c.l.b16 %v527
        %v560 = vunpack.c.l.b16 %v528
        %v561 = vunpack.c.l.b16 %v529
        %v562 = vpack.c.b16 %v547, %v546
        %v563 = vpack.c.b16 %v549, %v548
        %v564 = vpack.c.b16 %v551, %v550
        %v565 = vpack.c.b16 %v553, %v552
        %v566 = vpack.c.b16 %v555, %v554
        %v567 = vpack.c.b16 %v557, %v556
        %v568 = vpack.c.b16 %v559, %v558
        %v569 = vpack.c.b16 %v561, %v560
        %578 = vmatprep.subr.bf16.mxu0 0
        %579 = vmatpush1.bf16.msra.mxu0 %v569
        %580 = vmatprep.subr.bf16.mxu0 0
        %581 = vmatpush1.bf16.msra.mxu0 %v568
        %582 = vmatprep.subr.bf16.mxu0 0
        %583 = vmatpush1.bf16.msra.mxu0 %v567
        %584 = vmatprep.subr.bf16.mxu0 0
        %585 = vmatpush1.bf16.msra.mxu0 %v566
        %586 = vmatprep.subr.bf16.mxu0 0
        %587 = vmatpush1.bf16.msra.mxu0 %v565
        %588 = vmatprep.subr.bf16.mxu0 0
        %589 = vmatpush1.bf16.msra.mxu0 %v564
        %590 = vmatprep.subr.bf16.mxu0 0
        %591 = vmatpush1.bf16.msra.mxu0 %v563
        %592 = vmatprep.subr.bf16.mxu0 0
        %593 = vmatpush1.bf16.msra.mxu0 %v562
        %594 = vmatprep.subr.bf16.mxu0 0
        %595 = vmatpush2.bf16.msra.mxu0 0
        %596 = vmatprep.subr.bf16.mxu0 0
        %597 = vmatpush2.bf16.msra.mxu0 0
        %598 = vmatprep.subr.bf16.mxu0 0
        %599 = vmatpush2.bf16.msra.mxu0 0
        %600 = vmatprep.subr.bf16.mxu0 0
        %601 = vmatpush2.bf16.msra.mxu0 0
        %602 = vmatprep.subr.bf16.mxu0 0
        %603 = vmatpush2.bf16.msra.mxu0 0
        %604 = vmatprep.subr.bf16.mxu0 0
        %605 = vmatpush2.bf16.msra.mxu0 0
        %606 = vmatprep.subr.bf16.mxu0 0
        %607 = vmatpush2.bf16.msra.mxu0 0
        %608 = vmatprep.subr.bf16.mxu0 0
        %609 = vmatpush2.bf16.msra.mxu0 0
        %610 = vmatprep.mubr.bf16.mxu0 0
        %611 = vmatmul.mubr.bf16.gmra.mxu0 %v299
        %v612 = vpop.f32.mrf.mxu0
        %v613 = vadd.f32 0.0, %v612
        %v614 = vpop.f32.mrf.mxu0
        %v615 = vpop.f32.mrf.mxu0
        %v616 = vpop.f32.mrf.mxu0
        %617 = vdwg.mxu0
        %v618 = vpack.c.bf16 %v613, %v613
        %619 = vst.msk [vmem:[%s288] sm:$0xf] %vm406, %v618
        %s620 = scalar_lea.vmem %s1, 64
        %v621 = vld [vmem:[%s620] sm:$0xf]
        %v622 = vld [vmem:[%s620 + $0x4] sm:$0xf]
        %v623 = vld [vmem:[%s620 + $0x8] sm:$0xf]
        %v624 = vld [vmem:[%s620 + $0xc] sm:$0xf]
        %v625 = vld [vmem:[%s620 + $0x10] sm:$0xf]
        %v626 = vld [vmem:[%s620 + $0x14] sm:$0xf]
        %v627 = vld [vmem:[%s620 + $0x18] sm:$0xf]
        %v628 = vld [vmem:[%s620 + $0x1c] sm:$0xf]
        %v629 = vld [vmem:[%s620 + $0x20] sm:$0xf]
        %v630 = vld [vmem:[%s620 + $0x24] sm:$0xf]
        %v631 = vld [vmem:[%s620 + $0x28] sm:$0xf]
        %v632 = vld [vmem:[%s620 + $0x2c] sm:$0xf]
        %v633 = vld [vmem:[%s620 + $0x30] sm:$0xf]
        %v634 = vld [vmem:[%s620 + $0x34] sm:$0xf]
        %v635 = vld [vmem:[%s620 + $0x38] sm:$0xf]
        %v636 = vld [vmem:[%s620 + $0x3c] sm:$0xf]
        %v653 = vunpack.c.l.b16 %v621
        %v654 = vunpack.c.l.b16 %v622
        %v655 = vunpack.c.l.b16 %v623
        %v656 = vunpack.c.l.b16 %v624
        %v657 = vunpack.c.l.b16 %v625
        %v658 = vunpack.c.l.b16 %v626
        %v659 = vunpack.c.l.b16 %v627
        %v660 = vunpack.c.l.b16 %v628
        %v661 = vunpack.c.l.b16 %v629
        %v662 = vunpack.c.l.b16 %v630
        %v663 = vunpack.c.l.b16 %v631
        %v664 = vunpack.c.l.b16 %v632
        %v665 = vunpack.c.l.b16 %v633
        %v666 = vunpack.c.l.b16 %v634
        %v667 = vunpack.c.l.b16 %v635
        %v668 = vunpack.c.l.b16 %v636
        %v669 = vpack.c.b16 %v654, %v653
        %v670 = vpack.c.b16 %v656, %v655
        %v671 = vpack.c.b16 %v658, %v657
        %v672 = vpack.c.b16 %v660, %v659
        %v673 = vpack.c.b16 %v662, %v661
        %v674 = vpack.c.b16 %v664, %v663
        %v675 = vpack.c.b16 %v666, %v665
        %v676 = vpack.c.b16 %v668, %v667
        %685 = vmatprep.subr.bf16.mxu0 0
        %686 = vmatpush1.bf16.msra.mxu0 %v676
        %687 = vmatprep.subr.bf16.mxu0 0
        %688 = vmatpush1.bf16.msra.mxu0 %v675
        %689 = vmatprep.subr.bf16.mxu0 0
        %690 = vmatpush1.bf16.msra.mxu0 %v674
        %691 = vmatprep.subr.bf16.mxu0 0
        %692 = vmatpush1.bf16.msra.mxu0 %v673
        %693 = vmatprep.subr.bf16.mxu0 0
        %694 = vmatpush1.bf16.msra.mxu0 %v672
        %695 = vmatprep.subr.bf16.mxu0 0
        %696 = vmatpush1.bf16.msra.mxu0 %v671
        %697 = vmatprep.subr.bf16.mxu0 0
        %698 = vmatpush1.bf16.msra.mxu0 %v670
        %699 = vmatprep.subr.bf16.mxu0 0
        %700 = vmatpush1.bf16.msra.mxu0 %v669
        %701 = vmatprep.subr.bf16.mxu0 0
        %702 = vmatpush2.bf16.msra.mxu0 0
        %703 = vmatprep.subr.bf16.mxu0 0
        %704 = vmatpush2.bf16.msra.mxu0 0
        %705 = vmatprep.subr.bf16.mxu0 0
        %706 = vmatpush2.bf16.msra.mxu0 0
        %707 = vmatprep.subr.bf16.mxu0 0
        %708 = vmatpush2.bf16.msra.mxu0 0
        %709 = vmatprep.subr.bf16.mxu0 0
        %710 = vmatpush2.bf16.msra.mxu0 0
        %711 = vmatprep.subr.bf16.mxu0 0
        %712 = vmatpush2.bf16.msra.mxu0 0
        %713 = vmatprep.subr.bf16.mxu0 0
        %714 = vmatpush2.bf16.msra.mxu0 0
        %715 = vmatprep.subr.bf16.mxu0 0
        %716 = vmatpush2.bf16.msra.mxu0 0
        %717 = vmatprep.mubr.bf16.mxu0 0
        %718 = vmatmul.mubr.bf16.gmra.mxu0 %v299
        %v719 = vpop.f32.mrf.mxu0
        %v720 = vadd.f32 0.0, %v719
        %v721 = vpop.f32.mrf.mxu0
        %v722 = vpop.f32.mrf.mxu0
        %v723 = vpop.f32.mrf.mxu0
        %724 = vdwg.mxu0
        %v725 = vmul.f32 %v720, 0.25
        %v726 = vpack.c.bf16 %v725, %v725
        %s727 = scalar_lea.vmem %s274, 4 [#allocation2]
        %728 = vst.msk [vmem:[%s727] sm:$0xf] %vm406, %v726
        %s729 = scalar_lea.vmem %s2, 64
        %v730 = vld [vmem:[%s729] sm:$0xf]
        %v731 = vld [vmem:[%s729 + $0x4] sm:$0xf]
        %v732 = vld [vmem:[%s729 + $0x8] sm:$0xf]
        %v733 = vld [vmem:[%s729 + $0xc] sm:$0xf]
        %v734 = vld [vmem:[%s729 + $0x10] sm:$0xf]
        %v735 = vld [vmem:[%s729 + $0x14] sm:$0xf]
        %v736 = vld [vmem:[%s729 + $0x18] sm:$0xf]
        %v737 = vld [vmem:[%s729 + $0x1c] sm:$0xf]
        %v738 = vld [vmem:[%s729 + $0x20] sm:$0xf]
        %v739 = vld [vmem:[%s729 + $0x24] sm:$0xf]
        %v740 = vld [vmem:[%s729 + $0x28] sm:$0xf]
        %v741 = vld [vmem:[%s729 + $0x2c] sm:$0xf]
        %v742 = vld [vmem:[%s729 + $0x30] sm:$0xf]
        %v743 = vld [vmem:[%s729 + $0x34] sm:$0xf]
        %v744 = vld [vmem:[%s729 + $0x38] sm:$0xf]
        %v745 = vld [vmem:[%s729 + $0x3c] sm:$0xf]
        %v762 = vunpack.c.l.b16 %v730
        %v763 = vunpack.c.l.b16 %v731
        %v764 = vunpack.c.l.b16 %v732
        %v765 = vunpack.c.l.b16 %v733
        %v766 = vunpack.c.l.b16 %v734
        %v767 = vunpack.c.l.b16 %v735
        %v768 = vunpack.c.l.b16 %v736
        %v769 = vunpack.c.l.b16 %v737
        %v770 = vunpack.c.l.b16 %v738
        %v771 = vunpack.c.l.b16 %v739
        %v772 = vunpack.c.l.b16 %v740
        %v773 = vunpack.c.l.b16 %v741
        %v774 = vunpack.c.l.b16 %v742
        %v775 = vunpack.c.l.b16 %v743
        %v776 = vunpack.c.l.b16 %v744
        %v777 = vunpack.c.l.b16 %v745
        %v778 = vpack.c.b16 %v763, %v762
        %v779 = vpack.c.b16 %v765, %v764
        %v780 = vpack.c.b16 %v767, %v766
        %v781 = vpack.c.b16 %v769, %v768
        %v782 = vpack.c.b16 %v771, %v770
        %v783 = vpack.c.b16 %v773, %v772
        %v784 = vpack.c.b16 %v775, %v774
        %v785 = vpack.c.b16 %v777, %v776
        %794 = vmatprep.subr.bf16.mxu0 0
        %795 = vmatpush1.bf16.msra.mxu0 %v785
        %796 = vmatprep.subr.bf16.mxu0 0
        %797 = vmatpush1.bf16.msra.mxu0 %v784
        %798 = vmatprep.subr.bf16.mxu0 0
        %799 = vmatpush1.bf16.msra.mxu0 %v783
        %800 = vmatprep.subr.bf16.mxu0 0
        %801 = vmatpush1.bf16.msra.mxu0 %v782
        %802 = vmatprep.subr.bf16.mxu0 0
        %803 = vmatpush1.bf16.msra.mxu0 %v781
        %804 = vmatprep.subr.bf16.mxu0 0
        %805 = vmatpush1.bf16.msra.mxu0 %v780
        %806 = vmatprep.subr.bf16.mxu0 0
        %807 = vmatpush1.bf16.msra.mxu0 %v779
        %808 = vmatprep.subr.bf16.mxu0 0
        %809 = vmatpush1.bf16.msra.mxu0 %v778
        %810 = vmatprep.subr.bf16.mxu0 0
        %811 = vmatpush2.bf16.msra.mxu0 0
        %812 = vmatprep.subr.bf16.mxu0 0
        %813 = vmatpush2.bf16.msra.mxu0 0
        %814 = vmatprep.subr.bf16.mxu0 0
        %815 = vmatpush2.bf16.msra.mxu0 0
        %816 = vmatprep.subr.bf16.mxu0 0
        %817 = vmatpush2.bf16.msra.mxu0 0
        %818 = vmatprep.subr.bf16.mxu0 0
        %819 = vmatpush2.bf16.msra.mxu0 0
        %820 = vmatprep.subr.bf16.mxu0 0
        %821 = vmatpush2.bf16.msra.mxu0 0
        %822 = vmatprep.subr.bf16.mxu0 0
        %823 = vmatpush2.bf16.msra.mxu0 0
        %824 = vmatprep.subr.bf16.mxu0 0
        %825 = vmatpush2.bf16.msra.mxu0 0
        %826 = vmatprep.mubr.bf16.mxu0 0
        %827 = vmatmul.mubr.bf16.gmra.mxu0 %v299
        %v828 = vpop.f32.mrf.mxu0
        %v829 = vadd.f32 0.0, %v828
        %v830 = vpop.f32.mrf.mxu0
        %v831 = vpop.f32.mrf.mxu0
        %v832 = vpop.f32.mrf.mxu0
        %833 = vdwg.mxu0
        %v834 = vpack.c.bf16 %v829, %v829
        %s835 = scalar_lea.vmem %s281, 4 [#allocation4]
        %836 = vst.msk [vmem:[%s835] sm:$0xf] %vm406, %v834
        %s837 = scalar_lea.vmem %s3, 64
        %v838 = vld [vmem:[%s837] sm:$0xf]
        %v839 = vld [vmem:[%s837 + $0x4] sm:$0xf]
        %v840 = vld [vmem:[%s837 + $0x8] sm:$0xf]
        %v841 = vld [vmem:[%s837 + $0xc] sm:$0xf]
        %v842 = vld [vmem:[%s837 + $0x10] sm:$0xf]
        %v843 = vld [vmem:[%s837 + $0x14] sm:$0xf]
        %v844 = vld [vmem:[%s837 + $0x18] sm:$0xf]
        %v845 = vld [vmem:[%s837 + $0x1c] sm:$0xf]
        %v846 = vld [vmem:[%s837 + $0x20] sm:$0xf]
        %v847 = vld [vmem:[%s837 + $0x24] sm:$0xf]
        %v848 = vld [vmem:[%s837 + $0x28] sm:$0xf]
        %v849 = vld [vmem:[%s837 + $0x2c] sm:$0xf]
        %v850 = vld [vmem:[%s837 + $0x30] sm:$0xf]
        %v851 = vld [vmem:[%s837 + $0x34] sm:$0xf]
        %v852 = vld [vmem:[%s837 + $0x38] sm:$0xf]
        %v853 = vld [vmem:[%s837 + $0x3c] sm:$0xf]
        %v870 = vunpack.c.l.b16 %v838
        %v871 = vunpack.c.l.b16 %v839
        %v872 = vunpack.c.l.b16 %v840
        %v873 = vunpack.c.l.b16 %v841
        %v874 = vunpack.c.l.b16 %v842
        %v875 = vunpack.c.l.b16 %v843
        %v876 = vunpack.c.l.b16 %v844
        %v877 = vunpack.c.l.b16 %v845
        %v878 = vunpack.c.l.b16 %v846
        %v879 = vunpack.c.l.b16 %v847
        %v880 = vunpack.c.l.b16 %v848
        %v881 = vunpack.c.l.b16 %v849
        %v882 = vunpack.c.l.b16 %v850
        %v883 = vunpack.c.l.b16 %v851
        %v884 = vunpack.c.l.b16 %v852
        %v885 = vunpack.c.l.b16 %v853
        %v886 = vpack.c.b16 %v871, %v870
        %v887 = vpack.c.b16 %v873, %v872
        %v888 = vpack.c.b16 %v875, %v874
        %v889 = vpack.c.b16 %v877, %v876
        %v890 = vpack.c.b16 %v879, %v878
        %v891 = vpack.c.b16 %v881, %v880
        %v892 = vpack.c.b16 %v883, %v882
        %v893 = vpack.c.b16 %v885, %v884
        %902 = vmatprep.subr.bf16.mxu0 0
        %903 = vmatpush1.bf16.msra.mxu0 %v893
        %904 = vmatprep.subr.bf16.mxu0 0
        %905 = vmatpush1.bf16.msra.mxu0 %v892
        %906 = vmatprep.subr.bf16.mxu0 0
        %907 = vmatpush1.bf16.msra.mxu0 %v891
        %908 = vmatprep.subr.bf16.mxu0 0
        %909 = vmatpush1.bf16.msra.mxu0 %v890
        %910 = vmatprep.subr.bf16.mxu0 0
        %911 = vmatpush1.bf16.msra.mxu0 %v889
        %912 = vmatprep.subr.bf16.mxu0 0
        %913 = vmatpush1.bf16.msra.mxu0 %v888
        %914 = vmatprep.subr.bf16.mxu0 0
        %915 = vmatpush1.bf16.msra.mxu0 %v887
        %916 = vmatprep.subr.bf16.mxu0 0
        %917 = vmatpush1.bf16.msra.mxu0 %v886
        %918 = vmatprep.subr.bf16.mxu0 0
        %919 = vmatpush2.bf16.msra.mxu0 0
        %920 = vmatprep.subr.bf16.mxu0 0
        %921 = vmatpush2.bf16.msra.mxu0 0
        %922 = vmatprep.subr.bf16.mxu0 0
        %923 = vmatpush2.bf16.msra.mxu0 0
        %924 = vmatprep.subr.bf16.mxu0 0
        %925 = vmatpush2.bf16.msra.mxu0 0
        %926 = vmatprep.subr.bf16.mxu0 0
        %927 = vmatpush2.bf16.msra.mxu0 0
        %928 = vmatprep.subr.bf16.mxu0 0
        %929 = vmatpush2.bf16.msra.mxu0 0
        %930 = vmatprep.subr.bf16.mxu0 0
        %931 = vmatpush2.bf16.msra.mxu0 0
        %932 = vmatprep.subr.bf16.mxu0 0
        %933 = vmatpush2.bf16.msra.mxu0 0
        %934 = vmatprep.mubr.bf16.mxu0 0
        %935 = vmatmul.mubr.bf16.gmra.mxu0 %v299
        %v936 = vpop.f32.mrf.mxu0
        %v937 = vadd.f32 0.0, %v936
        %v938 = vpop.f32.mrf.mxu0
        %v939 = vpop.f32.mrf.mxu0
        %v940 = vpop.f32.mrf.mxu0
        %941 = vdwg.mxu0
        %v942 = vpack.c.bf16 %v937, %v937
        %s943 = scalar_lea.vmem %s288, 4 [#allocation6]
        %944 = vst.msk [vmem:[%s943] sm:$0xf] %vm406, %v942
        %s945 = scalar_lea.vmem %s1, 128
        %v946 = vld [vmem:[%s945] sm:$0xf]
        %v947 = vld [vmem:[%s945 + $0x4] sm:$0xf]
        %v948 = vld [vmem:[%s945 + $0x8] sm:$0xf]
        %v949 = vld [vmem:[%s945 + $0xc] sm:$0xf]
        %v950 = vld [vmem:[%s945 + $0x10] sm:$0xf]
        %v951 = vld [vmem:[%s945 + $0x14] sm:$0xf]
        %v952 = vld [vmem:[%s945 + $0x18] sm:$0xf]
        %v953 = vld [vmem:[%s945 + $0x1c] sm:$0xf]
        %v954 = vld [vmem:[%s945 + $0x20] sm:$0xf]
        %v955 = vld [vmem:[%s945 + $0x24] sm:$0xf]
        %v956 = vld [vmem:[%s945 + $0x28] sm:$0xf]
        %v957 = vld [vmem:[%s945 + $0x2c] sm:$0xf]
        %v958 = vld [vmem:[%s945 + $0x30] sm:$0xf]
        %v959 = vld [vmem:[%s945 + $0x34] sm:$0xf]
        %v960 = vld [vmem:[%s945 + $0x38] sm:$0xf]
        %v961 = vld [vmem:[%s945 + $0x3c] sm:$0xf]
        %v978 = vunpack.c.l.b16 %v946
        %v979 = vunpack.c.l.b16 %v947
        %v980 = vunpack.c.l.b16 %v948
        %v981 = vunpack.c.l.b16 %v949
        %v982 = vunpack.c.l.b16 %v950
        %v983 = vunpack.c.l.b16 %v951
        %v984 = vunpack.c.l.b16 %v952
        %v985 = vunpack.c.l.b16 %v953
        %v986 = vunpack.c.l.b16 %v954
        %v987 = vunpack.c.l.b16 %v955
        %v988 = vunpack.c.l.b16 %v956
        %v989 = vunpack.c.l.b16 %v957
        %v990 = vunpack.c.l.b16 %v958
        %v991 = vunpack.c.l.b16 %v959
        %v992 = vunpack.c.l.b16 %v960
        %v993 = vunpack.c.l.b16 %v961
        %v994 = vpack.c.b16 %v979, %v978
        %v995 = vpack.c.b16 %v981, %v980
        %v996 = vpack.c.b16 %v983, %v982
        %v997 = vpack.c.b16 %v985, %v984
        %v998 = vpack.c.b16 %v987, %v986
        %v999 = vpack.c.b16 %v989, %v988
        %v1000 = vpack.c.b16 %v991, %v990
        %v1001 = vpack.c.b16 %v993, %v992
        %1010 = vmatprep.subr.bf16.mxu0 0
        %1011 = vmatpush1.bf16.msra.mxu0 %v1001
        %1012 = vmatprep.subr.bf16.mxu0 0
        %1013 = vmatpush1.bf16.msra.mxu0 %v1000
        %1014 = vmatprep.subr.bf16.mxu0 0
        %1015 = vmatpush1.bf16.msra.mxu0 %v999
        %1016 = vmatprep.subr.bf16.mxu0 0
        %1017 = vmatpush1.bf16.msra.mxu0 %v998
        %1018 = vmatprep.subr.bf16.mxu0 0
        %1019 = vmatpush1.bf16.msra.mxu0 %v997
        %1020 = vmatprep.subr.bf16.mxu0 0
        %1021 = vmatpush1.bf16.msra.mxu0 %v996
        %1022 = vmatprep.subr.bf16.mxu0 0
        %1023 = vmatpush1.bf16.msra.mxu0 %v995
        %1024 = vmatprep.subr.bf16.mxu0 0
        %1025 = vmatpush1.bf16.msra.mxu0 %v994
        %1026 = vmatprep.subr.bf16.mxu0 0
        %1027 = vmatpush2.bf16.msra.mxu0 0
        %1028 = vmatprep.subr.bf16.mxu0 0
        %1029 = vmatpush2.bf16.msra.mxu0 0
        %1030 = vmatprep.subr.bf16.mxu0 0
        %1031 = vmatpush2.bf16.msra.mxu0 0
        %1032 = vmatprep.subr.bf16.mxu0 0
        %1033 = vmatpush2.bf16.msra.mxu0 0
        %1034 = vmatprep.subr.bf16.mxu0 0
        %1035 = vmatpush2.bf16.msra.mxu0 0
        %1036 = vmatprep.subr.bf16.mxu0 0
        %1037 = vmatpush2.bf16.msra.mxu0 0
        %1038 = vmatprep.subr.bf16.mxu0 0
        %1039 = vmatpush2.bf16.msra.mxu0 0
        %1040 = vmatprep.subr.bf16.mxu0 0
        %1041 = vmatpush2.bf16.msra.mxu0 0
        %1042 = vmatprep.mubr.bf16.mxu0 0
        %1043 = vmatmul.mubr.bf16.gmra.mxu0 %v299
        %v1044 = vpop.f32.mrf.mxu0
        %v1045 = vadd.f32 0.0, %v1044
        %v1046 = vpop.f32.mrf.mxu0
        %v1047 = vpop.f32.mrf.mxu0
        %v1048 = vpop.f32.mrf.mxu0
        %1049 = vdwg.mxu0
        %v1050 = vmul.f32 %v1045, 0.25
        %v1051 = vpack.c.bf16 %v1050, %v1050
        %s1052 = scalar_lea.vmem %s274, 8 [#allocation2]
        %1053 = vst.msk [vmem:[%s1052] sm:$0xf] %vm406, %v1051
        %s1054 = scalar_lea.vmem %s2, 128
        %v1055 = vld [vmem:[%s1054] sm:$0xf]
        %v1056 = vld [vmem:[%s1054 + $0x4] sm:$0xf]
        %v1057 = vld [vmem:[%s1054 + $0x8] sm:$0xf]
        %v1058 = vld [vmem:[%s1054 + $0xc] sm:$0xf]
        %v1059 = vld [vmem:[%s1054 + $0x10] sm:$0xf]
        %v1060 = vld [vmem:[%s1054 + $0x14] sm:$0xf]
        %v1061 = vld [vmem:[%s1054 + $0x18] sm:$0xf]
        %v1062 = vld [vmem:[%s1054 + $0x1c] sm:$0xf]
        %v1063 = vld [vmem:[%s1054 + $0x20] sm:$0xf]
        %v1064 = vld [vmem:[%s1054 + $0x24] sm:$0xf]
        %v1065 = vld [vmem:[%s1054 + $0x28] sm:$0xf]
        %v1066 = vld [vmem:[%s1054 + $0x2c] sm:$0xf]
        %v1067 = vld [vmem:[%s1054 + $0x30] sm:$0xf]
        %v1068 = vld [vmem:[%s1054 + $0x34] sm:$0xf]
        %v1069 = vld [vmem:[%s1054 + $0x38] sm:$0xf]
        %v1070 = vld [vmem:[%s1054 + $0x3c] sm:$0xf]
        %v1087 = vunpack.c.l.b16 %v1055
        %v1088 = vunpack.c.l.b16 %v1056
        %v1089 = vunpack.c.l.b16 %v1057
        %v1090 = vunpack.c.l.b16 %v1058
        %v1091 = vunpack.c.l.b16 %v1059
        %v1092 = vunpack.c.l.b16 %v1060
        %v1093 = vunpack.c.l.b16 %v1061
        %v1094 = vunpack.c.l.b16 %v1062
        %v1095 = vunpack.c.l.b16 %v1063
        %v1096 = vunpack.c.l.b16 %v1064
        %v1097 = vunpack.c.l.b16 %v1065
        %v1098 = vunpack.c.l.b16 %v1066
        %v1099 = vunpack.c.l.b16 %v1067
        %v1100 = vunpack.c.l.b16 %v1068
        %v1101 = vunpack.c.l.b16 %v1069
        %v1102 = vunpack.c.l.b16 %v1070
        %v1103 = vpack.c.b16 %v1088, %v1087
        %v1104 = vpack.c.b16 %v1090, %v1089
        %v1105 = vpack.c.b16 %v1092, %v1091
        %v1106 = vpack.c.b16 %v1094, %v1093
        %v1107 = vpack.c.b16 %v1096, %v1095
        %v1108 = vpack.c.b16 %v1098, %v1097
        %v1109 = vpack.c.b16 %v1100, %v1099
        %v1110 = vpack.c.b16 %v1102, %v1101
        %1119 = vmatprep.subr.bf16.mxu0 0
        %1120 = vmatpush1.bf16.msra.mxu0 %v1110
        %1121 = vmatprep.subr.bf16.mxu0 0
        %1122 = vmatpush1.bf16.msra.mxu0 %v1109
        %1123 = vmatprep.subr.bf16.mxu0 0
        %1124 = vmatpush1.bf16.msra.mxu0 %v1108
        %1125 = vmatprep.subr.bf16.mxu0 0
        %1126 = vmatpush1.bf16.msra.mxu0 %v1107
        %1127 = vmatprep.subr.bf16.mxu0 0
        %1128 = vmatpush1.bf16.msra.mxu0 %v1106
        %1129 = vmatprep.subr.bf16.mxu0 0
        %1130 = vmatpush1.bf16.msra.mxu0 %v1105
        %1131 = vmatprep.subr.bf16.mxu0 0
        %1132 = vmatpush1.bf16.msra.mxu0 %v1104
        %1133 = vmatprep.subr.bf16.mxu0 0
        %1134 = vmatpush1.bf16.msra.mxu0 %v1103
        %1135 = vmatprep.subr.bf16.mxu0 0
        %1136 = vmatpush2.bf16.msra.mxu0 0
        %1137 = vmatprep.subr.bf16.mxu0 0
        %1138 = vmatpush2.bf16.msra.mxu0 0
        %1139 = vmatprep.subr.bf16.mxu0 0
        %1140 = vmatpush2.bf16.msra.mxu0 0
        %1141 = vmatprep.subr.bf16.mxu0 0
        %1142 = vmatpush2.bf16.msra.mxu0 0
        %1143 = vmatprep.subr.bf16.mxu0 0
        %1144 = vmatpush2.bf16.msra.mxu0 0
        %1145 = vmatprep.subr.bf16.mxu0 0
        %1146 = vmatpush2.bf16.msra.mxu0 0
        %1147 = vmatprep.subr.bf16.mxu0 0
        %1148 = vmatpush2.bf16.msra.mxu0 0
        %1149 = vmatprep.subr.bf16.mxu0 0
        %1150 = vmatpush2.bf16.msra.mxu0 0
        %1151 = vmatprep.mubr.bf16.mxu0 0
        %1152 = vmatmul.mubr.bf16.gmra.mxu0 %v299
        %v1153 = vpop.f32.mrf.mxu0
        %v1154 = vadd.f32 0.0, %v1153
        %v1155 = vpop.f32.mrf.mxu0
        %v1156 = vpop.f32.mrf.mxu0
        %v1157 = vpop.f32.mrf.mxu0
        %1158 = vdwg.mxu0
        %v1159 = vpack.c.bf16 %v1154, %v1154
        %s1160 = scalar_lea.vmem %s281, 8 [#allocation4]
        %1161 = vst.msk [vmem:[%s1160] sm:$0xf] %vm406, %v1159
        %s1162 = scalar_lea.vmem %s3, 128
        %v1163 = vld [vmem:[%s1162] sm:$0xf]
        %v1164 = vld [vmem:[%s1162 + $0x4] sm:$0xf]
        %v1165 = vld [vmem:[%s1162 + $0x8] sm:$0xf]
        %v1166 = vld [vmem:[%s1162 + $0xc] sm:$0xf]
        %v1167 = vld [vmem:[%s1162 + $0x10] sm:$0xf]
        %v1168 = vld [vmem:[%s1162 + $0x14] sm:$0xf]
        %v1169 = vld [vmem:[%s1162 + $0x18] sm:$0xf]
        %v1170 = vld [vmem:[%s1162 + $0x1c] sm:$0xf]
        %v1171 = vld [vmem:[%s1162 + $0x20] sm:$0xf]
        %v1172 = vld [vmem:[%s1162 + $0x24] sm:$0xf]
        %v1173 = vld [vmem:[%s1162 + $0x28] sm:$0xf]
        %v1174 = vld [vmem:[%s1162 + $0x2c] sm:$0xf]
        %v1175 = vld [vmem:[%s1162 + $0x30] sm:$0xf]
        %v1176 = vld [vmem:[%s1162 + $0x34] sm:$0xf]
        %v1177 = vld [vmem:[%s1162 + $0x38] sm:$0xf]
        %v1178 = vld [vmem:[%s1162 + $0x3c] sm:$0xf]
        %v1195 = vunpack.c.l.b16 %v1163
        %v1196 = vunpack.c.l.b16 %v1164
        %v1197 = vunpack.c.l.b16 %v1165
        %v1198 = vunpack.c.l.b16 %v1166
        %v1199 = vunpack.c.l.b16 %v1167
        %v1200 = vunpack.c.l.b16 %v1168
        %v1201 = vunpack.c.l.b16 %v1169
        %v1202 = vunpack.c.l.b16 %v1170
        %v1203 = vunpack.c.l.b16 %v1171
        %v1204 = vunpack.c.l.b16 %v1172
        %v1205 = vunpack.c.l.b16 %v1173
        %v1206 = vunpack.c.l.b16 %v1174
        %v1207 = vunpack.c.l.b16 %v1175
        %v1208 = vunpack.c.l.b16 %v1176
        %v1209 = vunpack.c.l.b16 %v1177
        %v1210 = vunpack.c.l.b16 %v1178
        %v1211 = vpack.c.b16 %v1196, %v1195
        %v1212 = vpack.c.b16 %v1198, %v1197
        %v1213 = vpack.c.b16 %v1200, %v1199
        %v1214 = vpack.c.b16 %v1202, %v1201
        %v1215 = vpack.c.b16 %v1204, %v1203
        %v1216 = vpack.c.b16 %v1206, %v1205
        %v1217 = vpack.c.b16 %v1208, %v1207
        %v1218 = vpack.c.b16 %v1210, %v1209
        %1227 = vmatprep.subr.bf16.mxu0 0
        %1228 = vmatpush1.bf16.msra.mxu0 %v1218
        %1229 = vmatprep.subr.bf16.mxu0 0
        %1230 = vmatpush1.bf16.msra.mxu0 %v1217
        %1231 = vmatprep.subr.bf16.mxu0 0
        %1232 = vmatpush1.bf16.msra.mxu0 %v1216
        %1233 = vmatprep.subr.bf16.mxu0 0
        %1234 = vmatpush1.bf16.msra.mxu0 %v1215
        %1235 = vmatprep.subr.bf16.mxu0 0
        %1236 = vmatpush1.bf16.msra.mxu0 %v1214
        %1237 = vmatprep.subr.bf16.mxu0 0
        %1238 = vmatpush1.bf16.msra.mxu0 %v1213
        %1239 = vmatprep.subr.bf16.mxu0 0
        %1240 = vmatpush1.bf16.msra.mxu0 %v1212
        %1241 = vmatprep.subr.bf16.mxu0 0
        %1242 = vmatpush1.bf16.msra.mxu0 %v1211
        %1243 = vmatprep.subr.bf16.mxu0 0
        %1244 = vmatpush2.bf16.msra.mxu0 0
        %1245 = vmatprep.subr.bf16.mxu0 0
        %1246 = vmatpush2.bf16.msra.mxu0 0
        %1247 = vmatprep.subr.bf16.mxu0 0
        %1248 = vmatpush2.bf16.msra.mxu0 0
        %1249 = vmatprep.subr.bf16.mxu0 0
        %1250 = vmatpush2.bf16.msra.mxu0 0
        %1251 = vmatprep.subr.bf16.mxu0 0
        %1252 = vmatpush2.bf16.msra.mxu0 0
        %1253 = vmatprep.subr.bf16.mxu0 0
        %1254 = vmatpush2.bf16.msra.mxu0 0
        %1255 = vmatprep.subr.bf16.mxu0 0
        %1256 = vmatpush2.bf16.msra.mxu0 0
        %1257 = vmatprep.subr.bf16.mxu0 0
        %1258 = vmatpush2.bf16.msra.mxu0 0
        %1259 = vmatprep.mubr.bf16.mxu0 0
        %1260 = vmatmul.mubr.bf16.gmra.mxu0 %v299
        %v1261 = vpop.f32.mrf.mxu0
        %v1262 = vadd.f32 0.0, %v1261
        %v1263 = vpop.f32.mrf.mxu0
        %v1264 = vpop.f32.mrf.mxu0
        %v1265 = vpop.f32.mrf.mxu0
        %1266 = vdwg.mxu0
        %v1267 = vpack.c.bf16 %v1262, %v1262
        %s1268 = scalar_lea.vmem %s288, 8 [#allocation6]
        %1269 = vst.msk [vmem:[%s1268] sm:$0xf] %vm406, %v1267
        %s1270 = scalar_lea.vmem %s1, 192
        %v1271 = vld [vmem:[%s1270] sm:$0xf]
        %v1272 = vld [vmem:[%s1270 + $0x4] sm:$0xf]
        %v1273 = vld [vmem:[%s1270 + $0x8] sm:$0xf]
        %v1274 = vld [vmem:[%s1270 + $0xc] sm:$0xf]
        %v1275 = vld [vmem:[%s1270 + $0x10] sm:$0xf]
        %v1276 = vld [vmem:[%s1270 + $0x14] sm:$0xf]
        %v1277 = vld [vmem:[%s1270 + $0x18] sm:$0xf]
        %v1278 = vld [vmem:[%s1270 + $0x1c] sm:$0xf]
        %v1279 = vld [vmem:[%s1270 + $0x20] sm:$0xf]
        %v1280 = vld [vmem:[%s1270 + $0x24] sm:$0xf]
        %v1281 = vld [vmem:[%s1270 + $0x28] sm:$0xf]
        %v1282 = vld [vmem:[%s1270 + $0x2c] sm:$0xf]
        %v1283 = vld [vmem:[%s1270 + $0x30] sm:$0xf]
        %v1284 = vld [vmem:[%s1270 + $0x34] sm:$0xf]
        %v1285 = vld [vmem:[%s1270 + $0x38] sm:$0xf]
        %v1286 = vld [vmem:[%s1270 + $0x3c] sm:$0xf]
        %v1303 = vunpack.c.l.b16 %v1271
        %v1304 = vunpack.c.l.b16 %v1272
        %v1305 = vunpack.c.l.b16 %v1273
        %v1306 = vunpack.c.l.b16 %v1274
        %v1307 = vunpack.c.l.b16 %v1275
        %v1308 = vunpack.c.l.b16 %v1276
        %v1309 = vunpack.c.l.b16 %v1277
        %v1310 = vunpack.c.l.b16 %v1278
        %v1311 = vunpack.c.l.b16 %v1279
        %v1312 = vunpack.c.l.b16 %v1280
        %v1313 = vunpack.c.l.b16 %v1281
        %v1314 = vunpack.c.l.b16 %v1282
        %v1315 = vunpack.c.l.b16 %v1283
        %v1316 = vunpack.c.l.b16 %v1284
        %v1317 = vunpack.c.l.b16 %v1285
        %v1318 = vunpack.c.l.b16 %v1286
        %v1319 = vpack.c.b16 %v1304, %v1303
        %v1320 = vpack.c.b16 %v1306, %v1305
        %v1321 = vpack.c.b16 %v1308, %v1307
        %v1322 = vpack.c.b16 %v1310, %v1309
        %v1323 = vpack.c.b16 %v1312, %v1311
        %v1324 = vpack.c.b16 %v1314, %v1313
        %v1325 = vpack.c.b16 %v1316, %v1315
        %v1326 = vpack.c.b16 %v1318, %v1317
        %1335 = vmatprep.subr.bf16.mxu0 0
        %1336 = vmatpush1.bf16.msra.mxu0 %v1326
        %1337 = vmatprep.subr.bf16.mxu0 0
        %1338 = vmatpush1.bf16.msra.mxu0 %v1325
        %1339 = vmatprep.subr.bf16.mxu0 0
        %1340 = vmatpush1.bf16.msra.mxu0 %v1324
        %1341 = vmatprep.subr.bf16.mxu0 0
        %1342 = vmatpush1.bf16.msra.mxu0 %v1323
        %1343 = vmatprep.subr.bf16.mxu0 0
        %1344 = vmatpush1.bf16.msra.mxu0 %v1322
        %1345 = vmatprep.subr.bf16.mxu0 0
        %1346 = vmatpush1.bf16.msra.mxu0 %v1321
        %1347 = vmatprep.subr.bf16.mxu0 0
        %1348 = vmatpush1.bf16.msra.mxu0 %v1320
        %1349 = vmatprep.subr.bf16.mxu0 0
        %1350 = vmatpush1.bf16.msra.mxu0 %v1319
        %1351 = vmatprep.subr.bf16.mxu0 0
        %1352 = vmatpush2.bf16.msra.mxu0 0
        %1353 = vmatprep.subr.bf16.mxu0 0
        %1354 = vmatpush2.bf16.msra.mxu0 0
        %1355 = vmatprep.subr.bf16.mxu0 0
        %1356 = vmatpush2.bf16.msra.mxu0 0
        %1357 = vmatprep.subr.bf16.mxu0 0
        %1358 = vmatpush2.bf16.msra.mxu0 0
        %1359 = vmatprep.subr.bf16.mxu0 0
        %1360 = vmatpush2.bf16.msra.mxu0 0
        %1361 = vmatprep.subr.bf16.mxu0 0
        %1362 = vmatpush2.bf16.msra.mxu0 0
        %1363 = vmatprep.subr.bf16.mxu0 0
        %1364 = vmatpush2.bf16.msra.mxu0 0
        %1365 = vmatprep.subr.bf16.mxu0 0
        %1366 = vmatpush2.bf16.msra.mxu0 0
        %1367 = vmatprep.mubr.bf16.mxu0 0
        %1368 = vmatmul.mubr.bf16.gmra.mxu0 %v299
        %v1369 = vpop.f32.mrf.mxu0
        %v1370 = vadd.f32 0.0, %v1369
        %v1371 = vpop.f32.mrf.mxu0
        %v1372 = vpop.f32.mrf.mxu0
        %v1373 = vpop.f32.mrf.mxu0
        %1374 = vdwg.mxu0
        %v1375 = vmul.f32 %v1370, 0.25
        %v1376 = vpack.c.bf16 %v1375, %v1375
        %s1377 = scalar_lea.vmem %s274, 12 [#allocation2]
        %1378 = vst.msk [vmem:[%s1377] sm:$0xf] %vm406, %v1376
        %s1379 = scalar_lea.vmem %s2, 192
        %v1380 = vld [vmem:[%s1379] sm:$0xf]
        %v1381 = vld [vmem:[%s1379 + $0x4] sm:$0xf]
        %v1382 = vld [vmem:[%s1379 + $0x8] sm:$0xf]
        %v1383 = vld [vmem:[%s1379 + $0xc] sm:$0xf]
        %v1384 = vld [vmem:[%s1379 + $0x10] sm:$0xf]
        %v1385 = vld [vmem:[%s1379 + $0x14] sm:$0xf]
        %v1386 = vld [vmem:[%s1379 + $0x18] sm:$0xf]
        %v1387 = vld [vmem:[%s1379 + $0x1c] sm:$0xf]
        %v1388 = vld [vmem:[%s1379 + $0x20] sm:$0xf]
        %v1389 = vld [vmem:[%s1379 + $0x24] sm:$0xf]
        %v1390 = vld [vmem:[%s1379 + $0x28] sm:$0xf]
        %v1391 = vld [vmem:[%s1379 + $0x2c] sm:$0xf]
        %v1392 = vld [vmem:[%s1379 + $0x30] sm:$0xf]
        %v1393 = vld [vmem:[%s1379 + $0x34] sm:$0xf]
        %v1394 = vld [vmem:[%s1379 + $0x38] sm:$0xf]
        %v1395 = vld [vmem:[%s1379 + $0x3c] sm:$0xf]
        %v1412 = vunpack.c.l.b16 %v1380
        %v1413 = vunpack.c.l.b16 %v1381
        %v1414 = vunpack.c.l.b16 %v1382
        %v1415 = vunpack.c.l.b16 %v1383
        %v1416 = vunpack.c.l.b16 %v1384
        %v1417 = vunpack.c.l.b16 %v1385
        %v1418 = vunpack.c.l.b16 %v1386
        %v1419 = vunpack.c.l.b16 %v1387
        %v1420 = vunpack.c.l.b16 %v1388
        %v1421 = vunpack.c.l.b16 %v1389
        %v1422 = vunpack.c.l.b16 %v1390
        %v1423 = vunpack.c.l.b16 %v1391
        %v1424 = vunpack.c.l.b16 %v1392
        %v1425 = vunpack.c.l.b16 %v1393
        %v1426 = vunpack.c.l.b16 %v1394
        %v1427 = vunpack.c.l.b16 %v1395
        %v1428 = vpack.c.b16 %v1413, %v1412
        %v1429 = vpack.c.b16 %v1415, %v1414
        %v1430 = vpack.c.b16 %v1417, %v1416
        %v1431 = vpack.c.b16 %v1419, %v1418
        %v1432 = vpack.c.b16 %v1421, %v1420
        %v1433 = vpack.c.b16 %v1423, %v1422
        %v1434 = vpack.c.b16 %v1425, %v1424
        %v1435 = vpack.c.b16 %v1427, %v1426
        %1444 = vmatprep.subr.bf16.mxu0 0
        %1445 = vmatpush1.bf16.msra.mxu0 %v1435
        %1446 = vmatprep.subr.bf16.mxu0 0
        %1447 = vmatpush1.bf16.msra.mxu0 %v1434
        %1448 = vmatprep.subr.bf16.mxu0 0
        %1449 = vmatpush1.bf16.msra.mxu0 %v1433
        %1450 = vmatprep.subr.bf16.mxu0 0
        %1451 = vmatpush1.bf16.msra.mxu0 %v1432
        %1452 = vmatprep.subr.bf16.mxu0 0
        %1453 = vmatpush1.bf16.msra.mxu0 %v1431
        %1454 = vmatprep.subr.bf16.mxu0 0
        %1455 = vmatpush1.bf16.msra.mxu0 %v1430
        %1456 = vmatprep.subr.bf16.mxu0 0
        %1457 = vmatpush1.bf16.msra.mxu0 %v1429
        %1458 = vmatprep.subr.bf16.mxu0 0
        %1459 = vmatpush1.bf16.msra.mxu0 %v1428
        %1460 = vmatprep.subr.bf16.mxu0 0
        %1461 = vmatpush2.bf16.msra.mxu0 0
        %1462 = vmatprep.subr.bf16.mxu0 0
        %1463 = vmatpush2.bf16.msra.mxu0 0
        %1464 = vmatprep.subr.bf16.mxu0 0
        %1465 = vmatpush2.bf16.msra.mxu0 0
        %1466 = vmatprep.subr.bf16.mxu0 0
        %1467 = vmatpush2.bf16.msra.mxu0 0
        %1468 = vmatprep.subr.bf16.mxu0 0
        %1469 = vmatpush2.bf16.msra.mxu0 0
        %1470 = vmatprep.subr.bf16.mxu0 0
        %1471 = vmatpush2.bf16.msra.mxu0 0
        %1472 = vmatprep.subr.bf16.mxu0 0
        %1473 = vmatpush2.bf16.msra.mxu0 0
        %1474 = vmatprep.subr.bf16.mxu0 0
        %1475 = vmatpush2.bf16.msra.mxu0 0
        %1476 = vmatprep.mubr.bf16.mxu0 0
        %1477 = vmatmul.mubr.bf16.gmra.mxu0 %v299
        %v1478 = vpop.f32.mrf.mxu0
        %v1479 = vadd.f32 0.0, %v1478
        %v1480 = vpop.f32.mrf.mxu0
        %v1481 = vpop.f32.mrf.mxu0
        %v1482 = vpop.f32.mrf.mxu0
        %1483 = vdwg.mxu0
        %v1484 = vpack.c.bf16 %v1479, %v1479
        %s1485 = scalar_lea.vmem %s281, 12 [#allocation4]
        %1486 = vst.msk [vmem:[%s1485] sm:$0xf] %vm406, %v1484
        %s1487 = scalar_lea.vmem %s3, 192
        %v1488 = vld [vmem:[%s1487] sm:$0xf]
        %v1489 = vld [vmem:[%s1487 + $0x4] sm:$0xf]
        %v1490 = vld [vmem:[%s1487 + $0x8] sm:$0xf]
        %v1491 = vld [vmem:[%s1487 + $0xc] sm:$0xf]
        %v1492 = vld [vmem:[%s1487 + $0x10] sm:$0xf]
        %v1493 = vld [vmem:[%s1487 + $0x14] sm:$0xf]
        %v1494 = vld [vmem:[%s1487 + $0x18] sm:$0xf]
        %v1495 = vld [vmem:[%s1487 + $0x1c] sm:$0xf]
        %v1496 = vld [vmem:[%s1487 + $0x20] sm:$0xf]
        %v1497 = vld [vmem:[%s1487 + $0x24] sm:$0xf]
        %v1498 = vld [vmem:[%s1487 + $0x28] sm:$0xf]
        %v1499 = vld [vmem:[%s1487 + $0x2c] sm:$0xf]
        %v1500 = vld [vmem:[%s1487 + $0x30] sm:$0xf]
        %v1501 = vld [vmem:[%s1487 + $0x34] sm:$0xf]
        %v1502 = vld [vmem:[%s1487 + $0x38] sm:$0xf]
        %v1503 = vld [vmem:[%s1487 + $0x3c] sm:$0xf]
        %v1520 = vunpack.c.l.b16 %v1488
        %v1521 = vunpack.c.l.b16 %v1489
        %v1522 = vunpack.c.l.b16 %v1490
        %v1523 = vunpack.c.l.b16 %v1491
        %v1524 = vunpack.c.l.b16 %v1492
        %v1525 = vunpack.c.l.b16 %v1493
        %v1526 = vunpack.c.l.b16 %v1494
        %v1527 = vunpack.c.l.b16 %v1495
        %v1528 = vunpack.c.l.b16 %v1496
        %v1529 = vunpack.c.l.b16 %v1497
        %v1530 = vunpack.c.l.b16 %v1498
        %v1531 = vunpack.c.l.b16 %v1499
        %v1532 = vunpack.c.l.b16 %v1500
        %v1533 = vunpack.c.l.b16 %v1501
        %v1534 = vunpack.c.l.b16 %v1502
        %v1535 = vunpack.c.l.b16 %v1503
        %v1536 = vpack.c.b16 %v1521, %v1520
        %v1537 = vpack.c.b16 %v1523, %v1522
        %v1538 = vpack.c.b16 %v1525, %v1524
        %v1539 = vpack.c.b16 %v1527, %v1526
        %v1540 = vpack.c.b16 %v1529, %v1528
        %v1541 = vpack.c.b16 %v1531, %v1530
        %v1542 = vpack.c.b16 %v1533, %v1532
        %v1543 = vpack.c.b16 %v1535, %v1534
        %1552 = vmatprep.subr.bf16.mxu0 0
        %1553 = vmatpush1.bf16.msra.mxu0 %v1543
        %1554 = vmatprep.subr.bf16.mxu0 0
        %1555 = vmatpush1.bf16.msra.mxu0 %v1542
        %1556 = vmatprep.subr.bf16.mxu0 0
        %1557 = vmatpush1.bf16.msra.mxu0 %v1541
        %1558 = vmatprep.subr.bf16.mxu0 0
        %1559 = vmatpush1.bf16.msra.mxu0 %v1540
        %1560 = vmatprep.subr.bf16.mxu0 0
        %1561 = vmatpush1.bf16.msra.mxu0 %v1539
        %1562 = vmatprep.subr.bf16.mxu0 0
        %1563 = vmatpush1.bf16.msra.mxu0 %v1538
        %1564 = vmatprep.subr.bf16.mxu0 0
        %1565 = vmatpush1.bf16.msra.mxu0 %v1537
        %1566 = vmatprep.subr.bf16.mxu0 0
        %1567 = vmatpush1.bf16.msra.mxu0 %v1536
        %1568 = vmatprep.subr.bf16.mxu0 0
        %1569 = vmatpush2.bf16.msra.mxu0 0
        %1570 = vmatprep.subr.bf16.mxu0 0
        %1571 = vmatpush2.bf16.msra.mxu0 0
        %1572 = vmatprep.subr.bf16.mxu0 0
        %1573 = vmatpush2.bf16.msra.mxu0 0
        %1574 = vmatprep.subr.bf16.mxu0 0
        %1575 = vmatpush2.bf16.msra.mxu0 0
        %1576 = vmatprep.subr.bf16.mxu0 0
        %1577 = vmatpush2.bf16.msra.mxu0 0
        %1578 = vmatprep.subr.bf16.mxu0 0
        %1579 = vmatpush2.bf16.msra.mxu0 0
        %1580 = vmatprep.subr.bf16.mxu0 0
        %1581 = vmatpush2.bf16.msra.mxu0 0
        %1582 = vmatprep.subr.bf16.mxu0 0
        %1583 = vmatpush2.bf16.msra.mxu0 0
        %1584 = vmatprep.mubr.bf16.mxu0 0
        %1585 = vmatmul.mubr.bf16.gmra.mxu0 %v299
        %v1586 = vpop.f32.mrf.mxu0
        %v1587 = vadd.f32 0.0, %v1586
        %v1588 = vpop.f32.mrf.mxu0
        %v1589 = vpop.f32.mrf.mxu0
        %v1590 = vpop.f32.mrf.mxu0
        %1591 = vdwg.mxu0
        %v1592 = vpack.c.bf16 %v1587, %v1587
        %s1593 = scalar_lea.vmem %s288, 12 [#allocation6]
        %1594 = vst.msk [vmem:[%s1593] sm:$0xf] %vm406, %v1592
        %s1595 = scalar_lea.vmem %s1, 256
        %v1596 = vld [vmem:[%s1595] sm:$0xf]
        %v1597 = vld [vmem:[%s1595 + $0x4] sm:$0xf]
        %v1598 = vld [vmem:[%s1595 + $0x8] sm:$0xf]
        %v1599 = vld [vmem:[%s1595 + $0xc] sm:$0xf]
        %v1600 = vld [vmem:[%s1595 + $0x10] sm:$0xf]
        %v1601 = vld [vmem:[%s1595 + $0x14] sm:$0xf]
        %v1602 = vld [vmem:[%s1595 + $0x18] sm:$0xf]
        %v1603 = vld [vmem:[%s1595 + $0x1c] sm:$0xf]
        %v1604 = vld [vmem:[%s1595 + $0x20] sm:$0xf]
        %v1605 = vld [vmem:[%s1595 + $0x24] sm:$0xf]
        %v1606 = vld [vmem:[%s1595 + $0x28] sm:$0xf]
        %v1607 = vld [vmem:[%s1595 + $0x2c] sm:$0xf]
        %v1608 = vld [vmem:[%s1595 + $0x30] sm:$0xf]
        %v1609 = vld [vmem:[%s1595 + $0x34] sm:$0xf]
        %v1610 = vld [vmem:[%s1595 + $0x38] sm:$0xf]
        %v1611 = vld [vmem:[%s1595 + $0x3c] sm:$0xf]
        %v1628 = vunpack.c.l.b16 %v1596
        %v1629 = vunpack.c.l.b16 %v1597
        %v1630 = vunpack.c.l.b16 %v1598
        %v1631 = vunpack.c.l.b16 %v1599
        %v1632 = vunpack.c.l.b16 %v1600
        %v1633 = vunpack.c.l.b16 %v1601
        %v1634 = vunpack.c.l.b16 %v1602
        %v1635 = vunpack.c.l.b16 %v1603
        %v1636 = vunpack.c.l.b16 %v1604
        %v1637 = vunpack.c.l.b16 %v1605
        %v1638 = vunpack.c.l.b16 %v1606
        %v1639 = vunpack.c.l.b16 %v1607
        %v1640 = vunpack.c.l.b16 %v1608
        %v1641 = vunpack.c.l.b16 %v1609
        %v1642 = vunpack.c.l.b16 %v1610
        %v1643 = vunpack.c.l.b16 %v1611
        %v1644 = vpack.c.b16 %v1629, %v1628
        %v1645 = vpack.c.b16 %v1631, %v1630
        %v1646 = vpack.c.b16 %v1633, %v1632
        %v1647 = vpack.c.b16 %v1635, %v1634
        %v1648 = vpack.c.b16 %v1637, %v1636
        %v1649 = vpack.c.b16 %v1639, %v1638
        %v1650 = vpack.c.b16 %v1641, %v1640
        %v1651 = vpack.c.b16 %v1643, %v1642
        %1660 = vmatprep.subr.bf16.mxu0 0
        %1661 = vmatpush1.bf16.msra.mxu0 %v1651
        %1662 = vmatprep.subr.bf16.mxu0 0
        %1663 = vmatpush1.bf16.msra.mxu0 %v1650
        %1664 = vmatprep.subr.bf16.mxu0 0
        %1665 = vmatpush1.bf16.msra.mxu0 %v1649
        %1666 = vmatprep.subr.bf16.mxu0 0
        %1667 = vmatpush1.bf16.msra.mxu0 %v1648
        %1668 = vmatprep.subr.bf16.mxu0 0
        %1669 = vmatpush1.bf16.msra.mxu0 %v1647
        %1670 = vmatprep.subr.bf16.mxu0 0
        %1671 = vmatpush1.bf16.msra.mxu0 %v1646
        %1672 = vmatprep.subr.bf16.mxu0 0
        %1673 = vmatpush1.bf16.msra.mxu0 %v1645
        %1674 = vmatprep.subr.bf16.mxu0 0
        %1675 = vmatpush1.bf16.msra.mxu0 %v1644
        %1676 = vmatprep.subr.bf16.mxu0 0
        %1677 = vmatpush2.bf16.msra.mxu0 0
        %1678 = vmatprep.subr.bf16.mxu0 0
        %1679 = vmatpush2.bf16.msra.mxu0 0
        %1680 = vmatprep.subr.bf16.mxu0 0
        %1681 = vmatpush2.bf16.msra.mxu0 0
        %1682 = vmatprep.subr.bf16.mxu0 0
        %1683 = vmatpush2.bf16.msra.mxu0 0
        %1684 = vmatprep.subr.bf16.mxu0 0
        %1685 = vmatpush2.bf16.msra.mxu0 0
        %1686 = vmatprep.subr.bf16.mxu0 0
        %1687 = vmatpush2.bf16.msra.mxu0 0
        %1688 = vmatprep.subr.bf16.mxu0 0
        %1689 = vmatpush2.bf16.msra.mxu0 0
        %1690 = vmatprep.subr.bf16.mxu0 0
        %1691 = vmatpush2.bf16.msra.mxu0 0
        %1692 = vmatprep.mubr.bf16.mxu0 0
        %1693 = vmatmul.mubr.bf16.gmra.mxu0 %v299
        %v1694 = vpop.f32.mrf.mxu0
        %v1695 = vadd.f32 0.0, %v1694
        %v1696 = vpop.f32.mrf.mxu0
        %v1697 = vpop.f32.mrf.mxu0
        %v1698 = vpop.f32.mrf.mxu0
        %1699 = vdwg.mxu0
        %v1700 = vmul.f32 %v1695, 0.25
        %v1701 = vpack.c.bf16 %v1700, %v1700
        %s1702 = scalar_lea.vmem %s274, 16 [#allocation2]
        %1703 = vst.msk [vmem:[%s1702] sm:$0xf] %vm406, %v1701
        %s1704 = scalar_lea.vmem %s2, 256
        %v1705 = vld [vmem:[%s1704] sm:$0xf]
        %v1706 = vld [vmem:[%s1704 + $0x4] sm:$0xf]
        %v1707 = vld [vmem:[%s1704 + $0x8] sm:$0xf]
        %v1708 = vld [vmem:[%s1704 + $0xc] sm:$0xf]
        %v1709 = vld [vmem:[%s1704 + $0x10] sm:$0xf]
        %v1710 = vld [vmem:[%s1704 + $0x14] sm:$0xf]
        %v1711 = vld [vmem:[%s1704 + $0x18] sm:$0xf]
        %v1712 = vld [vmem:[%s1704 + $0x1c] sm:$0xf]
        %v1713 = vld [vmem:[%s1704 + $0x20] sm:$0xf]
        %v1714 = vld [vmem:[%s1704 + $0x24] sm:$0xf]
        %v1715 = vld [vmem:[%s1704 + $0x28] sm:$0xf]
        %v1716 = vld [vmem:[%s1704 + $0x2c] sm:$0xf]
        %v1717 = vld [vmem:[%s1704 + $0x30] sm:$0xf]
        %v1718 = vld [vmem:[%s1704 + $0x34] sm:$0xf]
        %v1719 = vld [vmem:[%s1704 + $0x38] sm:$0xf]
        %v1720 = vld [vmem:[%s1704 + $0x3c] sm:$0xf]
        %v1737 = vunpack.c.l.b16 %v1705
        %v1738 = vunpack.c.l.b16 %v1706
        %v1739 = vunpack.c.l.b16 %v1707
        %v1740 = vunpack.c.l.b16 %v1708
        %v1741 = vunpack.c.l.b16 %v1709
        %v1742 = vunpack.c.l.b16 %v1710
        %v1743 = vunpack.c.l.b16 %v1711
        %v1744 = vunpack.c.l.b16 %v1712
        %v1745 = vunpack.c.l.b16 %v1713
        %v1746 = vunpack.c.l.b16 %v1714
        %v1747 = vunpack.c.l.b16 %v1715
        %v1748 = vunpack.c.l.b16 %v1716
        %v1749 = vunpack.c.l.b16 %v1717
        %v1750 = vunpack.c.l.b16 %v1718
        %v1751 = vunpack.c.l.b16 %v1719
        %v1752 = vunpack.c.l.b16 %v1720
        %v1753 = vpack.c.b16 %v1738, %v1737
        %v1754 = vpack.c.b16 %v1740, %v1739
        %v1755 = vpack.c.b16 %v1742, %v1741
        %v1756 = vpack.c.b16 %v1744, %v1743
        %v1757 = vpack.c.b16 %v1746, %v1745
        %v1758 = vpack.c.b16 %v1748, %v1747
        %v1759 = vpack.c.b16 %v1750, %v1749
        %v1760 = vpack.c.b16 %v1752, %v1751
        %1769 = vmatprep.subr.bf16.mxu0 0
        %1770 = vmatpush1.bf16.msra.mxu0 %v1760
        %1771 = vmatprep.subr.bf16.mxu0 0
        %1772 = vmatpush1.bf16.msra.mxu0 %v1759
        %1773 = vmatprep.subr.bf16.mxu0 0
        %1774 = vmatpush1.bf16.msra.mxu0 %v1758
        %1775 = vmatprep.subr.bf16.mxu0 0
        %1776 = vmatpush1.bf16.msra.mxu0 %v1757
        %1777 = vmatprep.subr.bf16.mxu0 0
        %1778 = vmatpush1.bf16.msra.mxu0 %v1756
        %1779 = vmatprep.subr.bf16.mxu0 0
        %1780 = vmatpush1.bf16.msra.mxu0 %v1755
        %1781 = vmatprep.subr.bf16.mxu0 0
        %1782 = vmatpush1.bf16.msra.mxu0 %v1754
        %1783 = vmatprep.subr.bf16.mxu0 0
        %1784 = vmatpush1.bf16.msra.mxu0 %v1753
        %1785 = vmatprep.subr.bf16.mxu0 0
        %1786 = vmatpush2.bf16.msra.mxu0 0
        %1787 = vmatprep.subr.bf16.mxu0 0
        %1788 = vmatpush2.bf16.msra.mxu0 0
        %1789 = vmatprep.subr.bf16.mxu0 0
        %1790 = vmatpush2.bf16.msra.mxu0 0
        %1791 = vmatprep.subr.bf16.mxu0 0
        %1792 = vmatpush2.bf16.msra.mxu0 0
        %1793 = vmatprep.subr.bf16.mxu0 0
        %1794 = vmatpush2.bf16.msra.mxu0 0
        %1795 = vmatprep.subr.bf16.mxu0 0
        %1796 = vmatpush2.bf16.msra.mxu0 0
        %1797 = vmatprep.subr.bf16.mxu0 0
        %1798 = vmatpush2.bf16.msra.mxu0 0
        %1799 = vmatprep.subr.bf16.mxu0 0
        %1800 = vmatpush2.bf16.msra.mxu0 0
        %1801 = vmatprep.mubr.bf16.mxu0 0
        %1802 = vmatmul.mubr.bf16.gmra.mxu0 %v299
        %v1803 = vpop.f32.mrf.mxu0
        %v1804 = vadd.f32 0.0, %v1803
        %v1805 = vpop.f32.mrf.mxu0
        %v1806 = vpop.f32.mrf.mxu0
        %v1807 = vpop.f32.mrf.mxu0
        %1808 = vdwg.mxu0
        %v1809 = vpack.c.bf16 %v1804, %v1804
        %s1810 = scalar_lea.vmem %s281, 16 [#allocation4]
        %1811 = vst.msk [vmem:[%s1810] sm:$0xf] %vm406, %v1809
        %s1812 = scalar_lea.vmem %s3, 256
        %v1813 = vld [vmem:[%s1812] sm:$0xf]
        %v1814 = vld [vmem:[%s1812 + $0x4] sm:$0xf]
        %v1815 = vld [vmem:[%s1812 + $0x8] sm:$0xf]
        %v1816 = vld [vmem:[%s1812 + $0xc] sm:$0xf]
        %v1817 = vld [vmem:[%s1812 + $0x10] sm:$0xf]
        %v1818 = vld [vmem:[%s1812 + $0x14] sm:$0xf]
        %v1819 = vld [vmem:[%s1812 + $0x18] sm:$0xf]
        %v1820 = vld [vmem:[%s1812 + $0x1c] sm:$0xf]
        %v1821 = vld [vmem:[%s1812 + $0x20] sm:$0xf]
        %v1822 = vld [vmem:[%s1812 + $0x24] sm:$0xf]
        %v1823 = vld [vmem:[%s1812 + $0x28] sm:$0xf]
        %v1824 = vld [vmem:[%s1812 + $0x2c] sm:$0xf]
        %v1825 = vld [vmem:[%s1812 + $0x30] sm:$0xf]
        %v1826 = vld [vmem:[%s1812 + $0x34] sm:$0xf]
        %v1827 = vld [vmem:[%s1812 + $0x38] sm:$0xf]
        %v1828 = vld [vmem:[%s1812 + $0x3c] sm:$0xf]
        %v1845 = vunpack.c.l.b16 %v1813
        %v1846 = vunpack.c.l.b16 %v1814
        %v1847 = vunpack.c.l.b16 %v1815
        %v1848 = vunpack.c.l.b16 %v1816
        %v1849 = vunpack.c.l.b16 %v1817
        %v1850 = vunpack.c.l.b16 %v1818
        %v1851 = vunpack.c.l.b16 %v1819
        %v1852 = vunpack.c.l.b16 %v1820
        %v1853 = vunpack.c.l.b16 %v1821
        %v1854 = vunpack.c.l.b16 %v1822
        %v1855 = vunpack.c.l.b16 %v1823
        %v1856 = vunpack.c.l.b16 %v1824
        %v1857 = vunpack.c.l.b16 %v1825
        %v1858 = vunpack.c.l.b16 %v1826
        %v1859 = vunpack.c.l.b16 %v1827
        %v1860 = vunpack.c.l.b16 %v1828
        %v1861 = vpack.c.b16 %v1846, %v1845
        %v1862 = vpack.c.b16 %v1848, %v1847
        %v1863 = vpack.c.b16 %v1850, %v1849
        %v1864 = vpack.c.b16 %v1852, %v1851
        %v1865 = vpack.c.b16 %v1854, %v1853
        %v1866 = vpack.c.b16 %v1856, %v1855
        %v1867 = vpack.c.b16 %v1858, %v1857
        %v1868 = vpack.c.b16 %v1860, %v1859
        %1877 = vmatprep.subr.bf16.mxu0 0
        %1878 = vmatpush1.bf16.msra.mxu0 %v1868
        %1879 = vmatprep.subr.bf16.mxu0 0
        %1880 = vmatpush1.bf16.msra.mxu0 %v1867
        %1881 = vmatprep.subr.bf16.mxu0 0
        %1882 = vmatpush1.bf16.msra.mxu0 %v1866
        %1883 = vmatprep.subr.bf16.mxu0 0
        %1884 = vmatpush1.bf16.msra.mxu0 %v1865
        %1885 = vmatprep.subr.bf16.mxu0 0
        %1886 = vmatpush1.bf16.msra.mxu0 %v1864
        %1887 = vmatprep.subr.bf16.mxu0 0
        %1888 = vmatpush1.bf16.msra.mxu0 %v1863
        %1889 = vmatprep.subr.bf16.mxu0 0
        %1890 = vmatpush1.bf16.msra.mxu0 %v1862
        %1891 = vmatprep.subr.bf16.mxu0 0
        %1892 = vmatpush1.bf16.msra.mxu0 %v1861
        %1893 = vmatprep.subr.bf16.mxu0 0
        %1894 = vmatpush2.bf16.msra.mxu0 0
        %1895 = vmatprep.subr.bf16.mxu0 0
        %1896 = vmatpush2.bf16.msra.mxu0 0
        %1897 = vmatprep.subr.bf16.mxu0 0
        %1898 = vmatpush2.bf16.msra.mxu0 0
        %1899 = vmatprep.subr.bf16.mxu0 0
        %1900 = vmatpush2.bf16.msra.mxu0 0
        %1901 = vmatprep.subr.bf16.mxu0 0
        %1902 = vmatpush2.bf16.msra.mxu0 0
        %1903 = vmatprep.subr.bf16.mxu0 0
        %1904 = vmatpush2.bf16.msra.mxu0 0
        %1905 = vmatprep.subr.bf16.mxu0 0
        %1906 = vmatpush2.bf16.msra.mxu0 0
        %1907 = vmatprep.subr.bf16.mxu0 0
        %1908 = vmatpush2.bf16.msra.mxu0 0
        %1909 = vmatprep.mubr.bf16.mxu0 0
        %1910 = vmatmul.mubr.bf16.gmra.mxu0 %v299
        %v1911 = vpop.f32.mrf.mxu0
        %v1912 = vadd.f32 0.0, %v1911
        %v1913 = vpop.f32.mrf.mxu0
        %v1914 = vpop.f32.mrf.mxu0
        %v1915 = vpop.f32.mrf.mxu0
        %1916 = vdwg.mxu0
        %v1917 = vpack.c.bf16 %v1912, %v1912
        %s1918 = scalar_lea.vmem %s288, 16 [#allocation6]
        %1919 = vst.msk [vmem:[%s1918] sm:$0xf] %vm406, %v1917
        %s1920 = scalar_lea.vmem %s1, 320
        %v1921 = vld [vmem:[%s1920] sm:$0xf]
        %v1922 = vld [vmem:[%s1920 + $0x4] sm:$0xf]
        %v1923 = vld [vmem:[%s1920 + $0x8] sm:$0xf]
        %v1924 = vld [vmem:[%s1920 + $0xc] sm:$0xf]
        %v1925 = vld [vmem:[%s1920 + $0x10] sm:$0xf]
        %v1926 = vld [vmem:[%s1920 + $0x14] sm:$0xf]
        %v1927 = vld [vmem:[%s1920 + $0x18] sm:$0xf]
        %v1928 = vld [vmem:[%s1920 + $0x1c] sm:$0xf]
        %v1929 = vld [vmem:[%s1920 + $0x20] sm:$0xf]
        %v1930 = vld [vmem:[%s1920 + $0x24] sm:$0xf]
        %v1931 = vld [vmem:[%s1920 + $0x28] sm:$0xf]
        %v1932 = vld [vmem:[%s1920 + $0x2c] sm:$0xf]
        %v1933 = vld [vmem:[%s1920 + $0x30] sm:$0xf]
        %v1934 = vld [vmem:[%s1920 + $0x34] sm:$0xf]
        %v1935 = vld [vmem:[%s1920 + $0x38] sm:$0xf]
        %v1936 = vld [vmem:[%s1920 + $0x3c] sm:$0xf]
        %v1953 = vunpack.c.l.b16 %v1921
        %v1954 = vunpack.c.l.b16 %v1922
        %v1955 = vunpack.c.l.b16 %v1923
        %v1956 = vunpack.c.l.b16 %v1924
        %v1957 = vunpack.c.l.b16 %v1925
        %v1958 = vunpack.c.l.b16 %v1926
        %v1959 = vunpack.c.l.b16 %v1927
        %v1960 = vunpack.c.l.b16 %v1928
        %v1961 = vunpack.c.l.b16 %v1929
        %v1962 = vunpack.c.l.b16 %v1930
        %v1963 = vunpack.c.l.b16 %v1931
        %v1964 = vunpack.c.l.b16 %v1932
        %v1965 = vunpack.c.l.b16 %v1933
        %v1966 = vunpack.c.l.b16 %v1934
        %v1967 = vunpack.c.l.b16 %v1935
        %v1968 = vunpack.c.l.b16 %v1936
        %v1969 = vpack.c.b16 %v1954, %v1953
        %v1970 = vpack.c.b16 %v1956, %v1955
        %v1971 = vpack.c.b16 %v1958, %v1957
        %v1972 = vpack.c.b16 %v1960, %v1959
        %v1973 = vpack.c.b16 %v1962, %v1961
        %v1974 = vpack.c.b16 %v1964, %v1963
        %v1975 = vpack.c.b16 %v1966, %v1965
        %v1976 = vpack.c.b16 %v1968, %v1967
        %1985 = vmatprep.subr.bf16.mxu0 0
        %1986 = vmatpush1.bf16.msra.mxu0 %v1976
        %1987 = vmatprep.subr.bf16.mxu0 0
        %1988 = vmatpush1.bf16.msra.mxu0 %v1975
        %1989 = vmatprep.subr.bf16.mxu0 0
        %1990 = vmatpush1.bf16.msra.mxu0 %v1974
        %1991 = vmatprep.subr.bf16.mxu0 0
        %1992 = vmatpush1.bf16.msra.mxu0 %v1973
        %1993 = vmatprep.subr.bf16.mxu0 0
        %1994 = vmatpush1.bf16.msra.mxu0 %v1972
        %1995 = vmatprep.subr.bf16.mxu0 0
        %1996 = vmatpush1.bf16.msra.mxu0 %v1971
        %1997 = vmatprep.subr.bf16.mxu0 0
        %1998 = vmatpush1.bf16.msra.mxu0 %v1970
        %1999 = vmatprep.subr.bf16.mxu0 0
        %2000 = vmatpush1.bf16.msra.mxu0 %v1969
        %2001 = vmatprep.subr.bf16.mxu0 0
        %2002 = vmatpush2.bf16.msra.mxu0 0
        %2003 = vmatprep.subr.bf16.mxu0 0
        %2004 = vmatpush2.bf16.msra.mxu0 0
        %2005 = vmatprep.subr.bf16.mxu0 0
        %2006 = vmatpush2.bf16.msra.mxu0 0
        %2007 = vmatprep.subr.bf16.mxu0 0
        %2008 = vmatpush2.bf16.msra.mxu0 0
        %2009 = vmatprep.subr.bf16.mxu0 0
        %2010 = vmatpush2.bf16.msra.mxu0 0
        %2011 = vmatprep.subr.bf16.mxu0 0
        %2012 = vmatpush2.bf16.msra.mxu0 0
        %2013 = vmatprep.subr.bf16.mxu0 0
        %2014 = vmatpush2.bf16.msra.mxu0 0
        %2015 = vmatprep.subr.bf16.mxu0 0
        %2016 = vmatpush2.bf16.msra.mxu0 0
        %2017 = vmatprep.mubr.bf16.mxu0 0
        %2018 = vmatmul.mubr.bf16.gmra.mxu0 %v299
        %v2019 = vpop.f32.mrf.mxu0
        %v2020 = vadd.f32 0.0, %v2019
        %v2021 = vpop.f32.mrf.mxu0
        %v2022 = vpop.f32.mrf.mxu0
        %v2023 = vpop.f32.mrf.mxu0
        %2024 = vdwg.mxu0
        %v2025 = vmul.f32 %v2020, 0.25
        %v2026 = vpack.c.bf16 %v2025, %v2025
        %s2027 = scalar_lea.vmem %s274, 20 [#allocation2]
        %2028 = vst.msk [vmem:[%s2027] sm:$0xf] %vm406, %v2026
        %s2029 = scalar_lea.vmem %s2, 320
        %v2030 = vld [vmem:[%s2029] sm:$0xf]
        %v2031 = vld [vmem:[%s2029 + $0x4] sm:$0xf]
        %v2032 = vld [vmem:[%s2029 + $0x8] sm:$0xf]
        %v2033 = vld [vmem:[%s2029 + $0xc] sm:$0xf]
        %v2034 = vld [vmem:[%s2029 + $0x10] sm:$0xf]
        %v2035 = vld [vmem:[%s2029 + $0x14] sm:$0xf]
        %v2036 = vld [vmem:[%s2029 + $0x18] sm:$0xf]
        %v2037 = vld [vmem:[%s2029 + $0x1c] sm:$0xf]
        %v2038 = vld [vmem:[%s2029 + $0x20] sm:$0xf]
        %v2039 = vld [vmem:[%s2029 + $0x24] sm:$0xf]
        %v2040 = vld [vmem:[%s2029 + $0x28] sm:$0xf]
        %v2041 = vld [vmem:[%s2029 + $0x2c] sm:$0xf]
        %v2042 = vld [vmem:[%s2029 + $0x30] sm:$0xf]
        %v2043 = vld [vmem:[%s2029 + $0x34] sm:$0xf]
        %v2044 = vld [vmem:[%s2029 + $0x38] sm:$0xf]
        %v2045 = vld [vmem:[%s2029 + $0x3c] sm:$0xf]
        %v2062 = vunpack.c.l.b16 %v2030
        %v2063 = vunpack.c.l.b16 %v2031
        %v2064 = vunpack.c.l.b16 %v2032
        %v2065 = vunpack.c.l.b16 %v2033
        %v2066 = vunpack.c.l.b16 %v2034
        %v2067 = vunpack.c.l.b16 %v2035
        %v2068 = vunpack.c.l.b16 %v2036
        %v2069 = vunpack.c.l.b16 %v2037
        %v2070 = vunpack.c.l.b16 %v2038
        %v2071 = vunpack.c.l.b16 %v2039
        %v2072 = vunpack.c.l.b16 %v2040
        %v2073 = vunpack.c.l.b16 %v2041
        %v2074 = vunpack.c.l.b16 %v2042
        %v2075 = vunpack.c.l.b16 %v2043
        %v2076 = vunpack.c.l.b16 %v2044
        %v2077 = vunpack.c.l.b16 %v2045
        %v2078 = vpack.c.b16 %v2063, %v2062
        %v2079 = vpack.c.b16 %v2065, %v2064
        %v2080 = vpack.c.b16 %v2067, %v2066
        %v2081 = vpack.c.b16 %v2069, %v2068
        %v2082 = vpack.c.b16 %v2071, %v2070
        %v2083 = vpack.c.b16 %v2073, %v2072
        %v2084 = vpack.c.b16 %v2075, %v2074
        %v2085 = vpack.c.b16 %v2077, %v2076
        %2094 = vmatprep.subr.bf16.mxu0 0
        %2095 = vmatpush1.bf16.msra.mxu0 %v2085
        %2096 = vmatprep.subr.bf16.mxu0 0
        %2097 = vmatpush1.bf16.msra.mxu0 %v2084
        %2098 = vmatprep.subr.bf16.mxu0 0
        %2099 = vmatpush1.bf16.msra.mxu0 %v2083
        %2100 = vmatprep.subr.bf16.mxu0 0
        %2101 = vmatpush1.bf16.msra.mxu0 %v2082
        %2102 = vmatprep.subr.bf16.mxu0 0
        %2103 = vmatpush1.bf16.msra.mxu0 %v2081
        %2104 = vmatprep.subr.bf16.mxu0 0
        %2105 = vmatpush1.bf16.msra.mxu0 %v2080
        %2106 = vmatprep.subr.bf16.mxu0 0
        %2107 = vmatpush1.bf16.msra.mxu0 %v2079
        %2108 = vmatprep.subr.bf16.mxu0 0
        %2109 = vmatpush1.bf16.msra.mxu0 %v2078
        %2110 = vmatprep.subr.bf16.mxu0 0
        %2111 = vmatpush2.bf16.msra.mxu0 0
        %2112 = vmatprep.subr.bf16.mxu0 0
        %2113 = vmatpush2.bf16.msra.mxu0 0
        %2114 = vmatprep.subr.bf16.mxu0 0
        %2115 = vmatpush2.bf16.msra.mxu0 0
        %2116 = vmatprep.subr.bf16.mxu0 0
        %2117 = vmatpush2.bf16.msra.mxu0 0
        %2118 = vmatprep.subr.bf16.mxu0 0
        %2119 = vmatpush2.bf16.msra.mxu0 0
        %2120 = vmatprep.subr.bf16.mxu0 0
        %2121 = vmatpush2.bf16.msra.mxu0 0
        %2122 = vmatprep.subr.bf16.mxu0 0
        %2123 = vmatpush2.bf16.msra.mxu0 0
        %2124 = vmatprep.subr.bf16.mxu0 0
        %2125 = vmatpush2.bf16.msra.mxu0 0
        %2126 = vmatprep.mubr.bf16.mxu0 0
        %2127 = vmatmul.mubr.bf16.gmra.mxu0 %v299
        %v2128 = vpop.f32.mrf.mxu0
        %v2129 = vadd.f32 0.0, %v2128
        %v2130 = vpop.f32.mrf.mxu0
        %v2131 = vpop.f32.mrf.mxu0
        %v2132 = vpop.f32.mrf.mxu0
        %2133 = vdwg.mxu0
        %v2134 = vpack.c.bf16 %v2129, %v2129
        %s2135 = scalar_lea.vmem %s281, 20 [#allocation4]
        %2136 = vst.msk [vmem:[%s2135] sm:$0xf] %vm406, %v2134
        %s2137 = scalar_lea.vmem %s3, 320
        %v2138 = vld [vmem:[%s2137] sm:$0xf]
        %v2139 = vld [vmem:[%s2137 + $0x4] sm:$0xf]
        %v2140 = vld [vmem:[%s2137 + $0x8] sm:$0xf]
        %v2141 = vld [vmem:[%s2137 + $0xc] sm:$0xf]
        %v2142 = vld [vmem:[%s2137 + $0x10] sm:$0xf]
        %v2143 = vld [vmem:[%s2137 + $0x14] sm:$0xf]
        %v2144 = vld [vmem:[%s2137 + $0x18] sm:$0xf]
        %v2145 = vld [vmem:[%s2137 + $0x1c] sm:$0xf]
        %v2146 = vld [vmem:[%s2137 + $0x20] sm:$0xf]
        %v2147 = vld [vmem:[%s2137 + $0x24] sm:$0xf]
        %v2148 = vld [vmem:[%s2137 + $0x28] sm:$0xf]
        %v2149 = vld [vmem:[%s2137 + $0x2c] sm:$0xf]
        %v2150 = vld [vmem:[%s2137 + $0x30] sm:$0xf]
        %v2151 = vld [vmem:[%s2137 + $0x34] sm:$0xf]
        %v2152 = vld [vmem:[%s2137 + $0x38] sm:$0xf]
        %v2153 = vld [vmem:[%s2137 + $0x3c] sm:$0xf]
        %v2170 = vunpack.c.l.b16 %v2138
        %v2171 = vunpack.c.l.b16 %v2139
        %v2172 = vunpack.c.l.b16 %v2140
        %v2173 = vunpack.c.l.b16 %v2141
        %v2174 = vunpack.c.l.b16 %v2142
        %v2175 = vunpack.c.l.b16 %v2143
        %v2176 = vunpack.c.l.b16 %v2144
        %v2177 = vunpack.c.l.b16 %v2145
        %v2178 = vunpack.c.l.b16 %v2146
        %v2179 = vunpack.c.l.b16 %v2147
        %v2180 = vunpack.c.l.b16 %v2148
        %v2181 = vunpack.c.l.b16 %v2149
        %v2182 = vunpack.c.l.b16 %v2150
        %v2183 = vunpack.c.l.b16 %v2151
        %v2184 = vunpack.c.l.b16 %v2152
        %v2185 = vunpack.c.l.b16 %v2153
        %v2186 = vpack.c.b16 %v2171, %v2170
        %v2187 = vpack.c.b16 %v2173, %v2172
        %v2188 = vpack.c.b16 %v2175, %v2174
        %v2189 = vpack.c.b16 %v2177, %v2176
        %v2190 = vpack.c.b16 %v2179, %v2178
        %v2191 = vpack.c.b16 %v2181, %v2180
        %v2192 = vpack.c.b16 %v2183, %v2182
        %v2193 = vpack.c.b16 %v2185, %v2184
        %2202 = vmatprep.subr.bf16.mxu0 0
        %2203 = vmatpush1.bf16.msra.mxu0 %v2193
        %2204 = vmatprep.subr.bf16.mxu0 0
        %2205 = vmatpush1.bf16.msra.mxu0 %v2192
        %2206 = vmatprep.subr.bf16.mxu0 0
        %2207 = vmatpush1.bf16.msra.mxu0 %v2191
        %2208 = vmatprep.subr.bf16.mxu0 0
        %2209 = vmatpush1.bf16.msra.mxu0 %v2190
        %2210 = vmatprep.subr.bf16.mxu0 0
        %2211 = vmatpush1.bf16.msra.mxu0 %v2189
        %2212 = vmatprep.subr.bf16.mxu0 0
        %2213 = vmatpush1.bf16.msra.mxu0 %v2188
        %2214 = vmatprep.subr.bf16.mxu0 0
        %2215 = vmatpush1.bf16.msra.mxu0 %v2187
        %2216 = vmatprep.subr.bf16.mxu0 0
        %2217 = vmatpush1.bf16.msra.mxu0 %v2186
        %2218 = vmatprep.subr.bf16.mxu0 0
        %2219 = vmatpush2.bf16.msra.mxu0 0
        %2220 = vmatprep.subr.bf16.mxu0 0
        %2221 = vmatpush2.bf16.msra.mxu0 0
        %2222 = vmatprep.subr.bf16.mxu0 0
        %2223 = vmatpush2.bf16.msra.mxu0 0
        %2224 = vmatprep.subr.bf16.mxu0 0
        %2225 = vmatpush2.bf16.msra.mxu0 0
        %2226 = vmatprep.subr.bf16.mxu0 0
        %2227 = vmatpush2.bf16.msra.mxu0 0
        %2228 = vmatprep.subr.bf16.mxu0 0
        %2229 = vmatpush2.bf16.msra.mxu0 0
        %2230 = vmatprep.subr.bf16.mxu0 0
        %2231 = vmatpush2.bf16.msra.mxu0 0
        %2232 = vmatprep.subr.bf16.mxu0 0
        %2233 = vmatpush2.bf16.msra.mxu0 0
        %2234 = vmatprep.mubr.bf16.mxu0 0
        %2235 = vmatmul.mubr.bf16.gmra.mxu0 %v299
        %v2236 = vpop.f32.mrf.mxu0
        %v2237 = vadd.f32 0.0, %v2236
        %v2238 = vpop.f32.mrf.mxu0
        %v2239 = vpop.f32.mrf.mxu0
        %v2240 = vpop.f32.mrf.mxu0
        %2241 = vdwg.mxu0
        %v2242 = vpack.c.bf16 %v2237, %v2237
        %s2243 = scalar_lea.vmem %s288, 20 [#allocation6]
        %2244 = vst.msk [vmem:[%s2243] sm:$0xf] %vm406, %v2242
        %s2245 = scalar_lea.vmem %s1, 384
        %v2246 = vld [vmem:[%s2245] sm:$0xf]
        %v2247 = vld [vmem:[%s2245 + $0x4] sm:$0xf]
        %v2248 = vld [vmem:[%s2245 + $0x8] sm:$0xf]
        %v2249 = vld [vmem:[%s2245 + $0xc] sm:$0xf]
        %v2250 = vld [vmem:[%s2245 + $0x10] sm:$0xf]
        %v2251 = vld [vmem:[%s2245 + $0x14] sm:$0xf]
        %v2252 = vld [vmem:[%s2245 + $0x18] sm:$0xf]
        %v2253 = vld [vmem:[%s2245 + $0x1c] sm:$0xf]
        %v2254 = vld [vmem:[%s2245 + $0x20] sm:$0xf]
        %v2255 = vld [vmem:[%s2245 + $0x24] sm:$0xf]
        %v2256 = vld [vmem:[%s2245 + $0x28] sm:$0xf]
        %v2257 = vld [vmem:[%s2245 + $0x2c] sm:$0xf]
        %v2258 = vld [vmem:[%s2245 + $0x30] sm:$0xf]
        %v2259 = vld [vmem:[%s2245 + $0x34] sm:$0xf]
        %v2260 = vld [vmem:[%s2245 + $0x38] sm:$0xf]
        %v2261 = vld [vmem:[%s2245 + $0x3c] sm:$0xf]
        %v2278 = vunpack.c.l.b16 %v2246
        %v2279 = vunpack.c.l.b16 %v2247
        %v2280 = vunpack.c.l.b16 %v2248
        %v2281 = vunpack.c.l.b16 %v2249
        %v2282 = vunpack.c.l.b16 %v2250
        %v2283 = vunpack.c.l.b16 %v2251
        %v2284 = vunpack.c.l.b16 %v2252
        %v2285 = vunpack.c.l.b16 %v2253
        %v2286 = vunpack.c.l.b16 %v2254
        %v2287 = vunpack.c.l.b16 %v2255
        %v2288 = vunpack.c.l.b16 %v2256
        %v2289 = vunpack.c.l.b16 %v2257
        %v2290 = vunpack.c.l.b16 %v2258
        %v2291 = vunpack.c.l.b16 %v2259
        %v2292 = vunpack.c.l.b16 %v2260
        %v2293 = vunpack.c.l.b16 %v2261
        %v2294 = vpack.c.b16 %v2279, %v2278
        %v2295 = vpack.c.b16 %v2281, %v2280
        %v2296 = vpack.c.b16 %v2283, %v2282
        %v2297 = vpack.c.b16 %v2285, %v2284
        %v2298 = vpack.c.b16 %v2287, %v2286
        %v2299 = vpack.c.b16 %v2289, %v2288
        %v2300 = vpack.c.b16 %v2291, %v2290
        %v2301 = vpack.c.b16 %v2293, %v2292
        %2310 = vmatprep.subr.bf16.mxu0 0
        %2311 = vmatpush1.bf16.msra.mxu0 %v2301
        %2312 = vmatprep.subr.bf16.mxu0 0
        %2313 = vmatpush1.bf16.msra.mxu0 %v2300
        %2314 = vmatprep.subr.bf16.mxu0 0
        %2315 = vmatpush1.bf16.msra.mxu0 %v2299
        %2316 = vmatprep.subr.bf16.mxu0 0
        %2317 = vmatpush1.bf16.msra.mxu0 %v2298
        %2318 = vmatprep.subr.bf16.mxu0 0
        %2319 = vmatpush1.bf16.msra.mxu0 %v2297
        %2320 = vmatprep.subr.bf16.mxu0 0
        %2321 = vmatpush1.bf16.msra.mxu0 %v2296
        %2322 = vmatprep.subr.bf16.mxu0 0
        %2323 = vmatpush1.bf16.msra.mxu0 %v2295
        %2324 = vmatprep.subr.bf16.mxu0 0
        %2325 = vmatpush1.bf16.msra.mxu0 %v2294
        %2326 = vmatprep.subr.bf16.mxu0 0
        %2327 = vmatpush2.bf16.msra.mxu0 0
        %2328 = vmatprep.subr.bf16.mxu0 0
        %2329 = vmatpush2.bf16.msra.mxu0 0
        %2330 = vmatprep.subr.bf16.mxu0 0
        %2331 = vmatpush2.bf16.msra.mxu0 0
        %2332 = vmatprep.subr.bf16.mxu0 0
        %2333 = vmatpush2.bf16.msra.mxu0 0
        %2334 = vmatprep.subr.bf16.mxu0 0
        %2335 = vmatpush2.bf16.msra.mxu0 0
        %2336 = vmatprep.subr.bf16.mxu0 0
        %2337 = vmatpush2.bf16.msra.mxu0 0
        %2338 = vmatprep.subr.bf16.mxu0 0
        %2339 = vmatpush2.bf16.msra.mxu0 0
        %2340 = vmatprep.subr.bf16.mxu0 0
        %2341 = vmatpush2.bf16.msra.mxu0 0
        %2342 = vmatprep.mubr.bf16.mxu0 0
        %2343 = vmatmul.mubr.bf16.gmra.mxu0 %v299
        %v2344 = vpop.f32.mrf.mxu0
        %v2345 = vadd.f32 0.0, %v2344
        %v2346 = vpop.f32.mrf.mxu0
        %v2347 = vpop.f32.mrf.mxu0
        %v2348 = vpop.f32.mrf.mxu0
        %2349 = vdwg.mxu0
        %v2350 = vmul.f32 %v2345, 0.25
        %v2351 = vpack.c.bf16 %v2350, %v2350
        %s2352 = scalar_lea.vmem %s274, 24 [#allocation2]
        %2353 = vst.msk [vmem:[%s2352] sm:$0xf] %vm406, %v2351
        %s2354 = scalar_lea.vmem %s2, 384
        %v2355 = vld [vmem:[%s2354] sm:$0xf]
        %v2356 = vld [vmem:[%s2354 + $0x4] sm:$0xf]
        %v2357 = vld [vmem:[%s2354 + $0x8] sm:$0xf]
        %v2358 = vld [vmem:[%s2354 + $0xc] sm:$0xf]
        %v2359 = vld [vmem:[%s2354 + $0x10] sm:$0xf]
        %v2360 = vld [vmem:[%s2354 + $0x14] sm:$0xf]
        %v2361 = vld [vmem:[%s2354 + $0x18] sm:$0xf]
        %v2362 = vld [vmem:[%s2354 + $0x1c] sm:$0xf]
        %v2363 = vld [vmem:[%s2354 + $0x20] sm:$0xf]
        %v2364 = vld [vmem:[%s2354 + $0x24] sm:$0xf]
        %v2365 = vld [vmem:[%s2354 + $0x28] sm:$0xf]
        %v2366 = vld [vmem:[%s2354 + $0x2c] sm:$0xf]
        %v2367 = vld [vmem:[%s2354 + $0x30] sm:$0xf]
        %v2368 = vld [vmem:[%s2354 + $0x34] sm:$0xf]
        %v2369 = vld [vmem:[%s2354 + $0x38] sm:$0xf]
        %v2370 = vld [vmem:[%s2354 + $0x3c] sm:$0xf]
        %v2387 = vunpack.c.l.b16 %v2355
        %v2388 = vunpack.c.l.b16 %v2356
        %v2389 = vunpack.c.l.b16 %v2357
        %v2390 = vunpack.c.l.b16 %v2358
        %v2391 = vunpack.c.l.b16 %v2359
        %v2392 = vunpack.c.l.b16 %v2360
        %v2393 = vunpack.c.l.b16 %v2361
        %v2394 = vunpack.c.l.b16 %v2362
        %v2395 = vunpack.c.l.b16 %v2363
        %v2396 = vunpack.c.l.b16 %v2364
        %v2397 = vunpack.c.l.b16 %v2365
        %v2398 = vunpack.c.l.b16 %v2366
        %v2399 = vunpack.c.l.b16 %v2367
        %v2400 = vunpack.c.l.b16 %v2368
        %v2401 = vunpack.c.l.b16 %v2369
        %v2402 = vunpack.c.l.b16 %v2370
        %v2403 = vpack.c.b16 %v2388, %v2387
        %v2404 = vpack.c.b16 %v2390, %v2389
        %v2405 = vpack.c.b16 %v2392, %v2391
        %v2406 = vpack.c.b16 %v2394, %v2393
        %v2407 = vpack.c.b16 %v2396, %v2395
        %v2408 = vpack.c.b16 %v2398, %v2397
        %v2409 = vpack.c.b16 %v2400, %v2399
        %v2410 = vpack.c.b16 %v2402, %v2401
        %2419 = vmatprep.subr.bf16.mxu0 0
        %2420 = vmatpush1.bf16.msra.mxu0 %v2410
        %2421 = vmatprep.subr.bf16.mxu0 0
        %2422 = vmatpush1.bf16.msra.mxu0 %v2409
        %2423 = vmatprep.subr.bf16.mxu0 0
        %2424 = vmatpush1.bf16.msra.mxu0 %v2408
        %2425 = vmatprep.subr.bf16.mxu0 0
        %2426 = vmatpush1.bf16.msra.mxu0 %v2407
        %2427 = vmatprep.subr.bf16.mxu0 0
        %2428 = vmatpush1.bf16.msra.mxu0 %v2406
        %2429 = vmatprep.subr.bf16.mxu0 0
        %2430 = vmatpush1.bf16.msra.mxu0 %v2405
        %2431 = vmatprep.subr.bf16.mxu0 0
        %2432 = vmatpush1.bf16.msra.mxu0 %v2404
        %2433 = vmatprep.subr.bf16.mxu0 0
        %2434 = vmatpush1.bf16.msra.mxu0 %v2403
        %2435 = vmatprep.subr.bf16.mxu0 0
        %2436 = vmatpush2.bf16.msra.mxu0 0
        %2437 = vmatprep.subr.bf16.mxu0 0
        %2438 = vmatpush2.bf16.msra.mxu0 0
        %2439 = vmatprep.subr.bf16.mxu0 0
        %2440 = vmatpush2.bf16.msra.mxu0 0
        %2441 = vmatprep.subr.bf16.mxu0 0
        %2442 = vmatpush2.bf16.msra.mxu0 0
        %2443 = vmatprep.subr.bf16.mxu0 0
        %2444 = vmatpush2.bf16.msra.mxu0 0
        %2445 = vmatprep.subr.bf16.mxu0 0
        %2446 = vmatpush2.bf16.msra.mxu0 0
        %2447 = vmatprep.subr.bf16.mxu0 0
        %2448 = vmatpush2.bf16.msra.mxu0 0
        %2449 = vmatprep.subr.bf16.mxu0 0
        %2450 = vmatpush2.bf16.msra.mxu0 0
        %2451 = vmatprep.mubr.bf16.mxu0 0
        %2452 = vmatmul.mubr.bf16.gmra.mxu0 %v299
        %v2453 = vpop.f32.mrf.mxu0
        %v2454 = vadd.f32 0.0, %v2453
        %v2455 = vpop.f32.mrf.mxu0
        %v2456 = vpop.f32.mrf.mxu0
        %v2457 = vpop.f32.mrf.mxu0
        %2458 = vdwg.mxu0
        %v2459 = vpack.c.bf16 %v2454, %v2454
        %s2460 = scalar_lea.vmem %s281, 24 [#allocation4]
        %2461 = vst.msk [vmem:[%s2460] sm:$0xf] %vm406, %v2459
        %s2462 = scalar_lea.vmem %s3, 384
        %v2463 = vld [vmem:[%s2462] sm:$0xf]
        %v2464 = vld [vmem:[%s2462 + $0x4] sm:$0xf]
        %v2465 = vld [vmem:[%s2462 + $0x8] sm:$0xf]
        %v2466 = vld [vmem:[%s2462 + $0xc] sm:$0xf]
        %v2467 = vld [vmem:[%s2462 + $0x10] sm:$0xf]
        %v2468 = vld [vmem:[%s2462 + $0x14] sm:$0xf]
        %v2469 = vld [vmem:[%s2462 + $0x18] sm:$0xf]
        %v2470 = vld [vmem:[%s2462 + $0x1c] sm:$0xf]
        %v2471 = vld [vmem:[%s2462 + $0x20] sm:$0xf]
        %v2472 = vld [vmem:[%s2462 + $0x24] sm:$0xf]
        %v2473 = vld [vmem:[%s2462 + $0x28] sm:$0xf]
        %v2474 = vld [vmem:[%s2462 + $0x2c] sm:$0xf]
        %v2475 = vld [vmem:[%s2462 + $0x30] sm:$0xf]
        %v2476 = vld [vmem:[%s2462 + $0x34] sm:$0xf]
        %v2477 = vld [vmem:[%s2462 + $0x38] sm:$0xf]
        %v2478 = vld [vmem:[%s2462 + $0x3c] sm:$0xf]
        %v2495 = vunpack.c.l.b16 %v2463
        %v2496 = vunpack.c.l.b16 %v2464
        %v2497 = vunpack.c.l.b16 %v2465
        %v2498 = vunpack.c.l.b16 %v2466
        %v2499 = vunpack.c.l.b16 %v2467
        %v2500 = vunpack.c.l.b16 %v2468
        %v2501 = vunpack.c.l.b16 %v2469
        %v2502 = vunpack.c.l.b16 %v2470
        %v2503 = vunpack.c.l.b16 %v2471
        %v2504 = vunpack.c.l.b16 %v2472
        %v2505 = vunpack.c.l.b16 %v2473
        %v2506 = vunpack.c.l.b16 %v2474
        %v2507 = vunpack.c.l.b16 %v2475
        %v2508 = vunpack.c.l.b16 %v2476
        %v2509 = vunpack.c.l.b16 %v2477
        %v2510 = vunpack.c.l.b16 %v2478
        %v2511 = vpack.c.b16 %v2496, %v2495
        %v2512 = vpack.c.b16 %v2498, %v2497
        %v2513 = vpack.c.b16 %v2500, %v2499
        %v2514 = vpack.c.b16 %v2502, %v2501
        %v2515 = vpack.c.b16 %v2504, %v2503
        %v2516 = vpack.c.b16 %v2506, %v2505
        %v2517 = vpack.c.b16 %v2508, %v2507
        %v2518 = vpack.c.b16 %v2510, %v2509
        %2527 = vmatprep.subr.bf16.mxu0 0
        %2528 = vmatpush1.bf16.msra.mxu0 %v2518
        %2529 = vmatprep.subr.bf16.mxu0 0
        %2530 = vmatpush1.bf16.msra.mxu0 %v2517
        %2531 = vmatprep.subr.bf16.mxu0 0
        %2532 = vmatpush1.bf16.msra.mxu0 %v2516
        %2533 = vmatprep.subr.bf16.mxu0 0
        %2534 = vmatpush1.bf16.msra.mxu0 %v2515
        %2535 = vmatprep.subr.bf16.mxu0 0
        %2536 = vmatpush1.bf16.msra.mxu0 %v2514
        %2537 = vmatprep.subr.bf16.mxu0 0
        %2538 = vmatpush1.bf16.msra.mxu0 %v2513
        %2539 = vmatprep.subr.bf16.mxu0 0
        %2540 = vmatpush1.bf16.msra.mxu0 %v2512
        %2541 = vmatprep.subr.bf16.mxu0 0
        %2542 = vmatpush1.bf16.msra.mxu0 %v2511
        %2543 = vmatprep.subr.bf16.mxu0 0
        %2544 = vmatpush2.bf16.msra.mxu0 0
        %2545 = vmatprep.subr.bf16.mxu0 0
        %2546 = vmatpush2.bf16.msra.mxu0 0
        %2547 = vmatprep.subr.bf16.mxu0 0
        %2548 = vmatpush2.bf16.msra.mxu0 0
        %2549 = vmatprep.subr.bf16.mxu0 0
        %2550 = vmatpush2.bf16.msra.mxu0 0
        %2551 = vmatprep.subr.bf16.mxu0 0
        %2552 = vmatpush2.bf16.msra.mxu0 0
        %2553 = vmatprep.subr.bf16.mxu0 0
        %2554 = vmatpush2.bf16.msra.mxu0 0
        %2555 = vmatprep.subr.bf16.mxu0 0
        %2556 = vmatpush2.bf16.msra.mxu0 0
        %2557 = vmatprep.subr.bf16.mxu0 0
        %2558 = vmatpush2.bf16.msra.mxu0 0
        %2559 = vmatprep.mubr.bf16.mxu0 0
        %2560 = vmatmul.mubr.bf16.gmra.mxu0 %v299
        %v2561 = vpop.f32.mrf.mxu0
        %v2562 = vadd.f32 0.0, %v2561
        %v2563 = vpop.f32.mrf.mxu0
        %v2564 = vpop.f32.mrf.mxu0
        %v2565 = vpop.f32.mrf.mxu0
        %2566 = vdwg.mxu0
        %v2567 = vpack.c.bf16 %v2562, %v2562
        %s2568 = scalar_lea.vmem %s288, 24 [#allocation6]
        %2569 = vst.msk [vmem:[%s2568] sm:$0xf] %vm406, %v2567
        %s2570 = scalar_lea.vmem %s1, 448
        %v2571 = vld [vmem:[%s2570] sm:$0xf]
        %v2572 = vld [vmem:[%s2570 + $0x4] sm:$0xf]
        %v2573 = vld [vmem:[%s2570 + $0x8] sm:$0xf]
        %v2574 = vld [vmem:[%s2570 + $0xc] sm:$0xf]
        %v2575 = vld [vmem:[%s2570 + $0x10] sm:$0xf]
        %v2576 = vld [vmem:[%s2570 + $0x14] sm:$0xf]
        %v2577 = vld [vmem:[%s2570 + $0x18] sm:$0xf]
        %v2578 = vld [vmem:[%s2570 + $0x1c] sm:$0xf]
        %v2579 = vld [vmem:[%s2570 + $0x20] sm:$0xf]
        %v2580 = vld [vmem:[%s2570 + $0x24] sm:$0xf]
        %v2581 = vld [vmem:[%s2570 + $0x28] sm:$0xf]
        %v2582 = vld [vmem:[%s2570 + $0x2c] sm:$0xf]
        %v2583 = vld [vmem:[%s2570 + $0x30] sm:$0xf]
        %v2584 = vld [vmem:[%s2570 + $0x34] sm:$0xf]
        %v2585 = vld [vmem:[%s2570 + $0x38] sm:$0xf]
        %v2586 = vld [vmem:[%s2570 + $0x3c] sm:$0xf]
        %v2603 = vunpack.c.l.b16 %v2571
        %v2604 = vunpack.c.l.b16 %v2572
        %v2605 = vunpack.c.l.b16 %v2573
        %v2606 = vunpack.c.l.b16 %v2574
        %v2607 = vunpack.c.l.b16 %v2575
        %v2608 = vunpack.c.l.b16 %v2576
        %v2609 = vunpack.c.l.b16 %v2577
        %v2610 = vunpack.c.l.b16 %v2578
        %v2611 = vunpack.c.l.b16 %v2579
        %v2612 = vunpack.c.l.b16 %v2580
        %v2613 = vunpack.c.l.b16 %v2581
        %v2614 = vunpack.c.l.b16 %v2582
        %v2615 = vunpack.c.l.b16 %v2583
        %v2616 = vunpack.c.l.b16 %v2584
        %v2617 = vunpack.c.l.b16 %v2585
        %v2618 = vunpack.c.l.b16 %v2586
        %v2619 = vpack.c.b16 %v2604, %v2603
        %v2620 = vpack.c.b16 %v2606, %v2605
        %v2621 = vpack.c.b16 %v2608, %v2607
        %v2622 = vpack.c.b16 %v2610, %v2609
        %v2623 = vpack.c.b16 %v2612, %v2611
        %v2624 = vpack.c.b16 %v2614, %v2613
        %v2625 = vpack.c.b16 %v2616, %v2615
        %v2626 = vpack.c.b16 %v2618, %v2617
        %2635 = vmatprep.subr.bf16.mxu0 0
        %2636 = vmatpush1.bf16.msra.mxu0 %v2626
        %2637 = vmatprep.subr.bf16.mxu0 0
        %2638 = vmatpush1.bf16.msra.mxu0 %v2625
        %2639 = vmatprep.subr.bf16.mxu0 0
        %2640 = vmatpush1.bf16.msra.mxu0 %v2624
        %2641 = vmatprep.subr.bf16.mxu0 0
        %2642 = vmatpush1.bf16.msra.mxu0 %v2623
        %2643 = vmatprep.subr.bf16.mxu0 0
        %2644 = vmatpush1.bf16.msra.mxu0 %v2622
        %2645 = vmatprep.subr.bf16.mxu0 0
        %2646 = vmatpush1.bf16.msra.mxu0 %v2621
        %2647 = vmatprep.subr.bf16.mxu0 0
        %2648 = vmatpush1.bf16.msra.mxu0 %v2620
        %2649 = vmatprep.subr.bf16.mxu0 0
        %2650 = vmatpush1.bf16.msra.mxu0 %v2619
        %2651 = vmatprep.subr.bf16.mxu0 0
        %2652 = vmatpush2.bf16.msra.mxu0 0
        %2653 = vmatprep.subr.bf16.mxu0 0
        %2654 = vmatpush2.bf16.msra.mxu0 0
        %2655 = vmatprep.subr.bf16.mxu0 0
        %2656 = vmatpush2.bf16.msra.mxu0 0
        %2657 = vmatprep.subr.bf16.mxu0 0
        %2658 = vmatpush2.bf16.msra.mxu0 0
        %2659 = vmatprep.subr.bf16.mxu0 0
        %2660 = vmatpush2.bf16.msra.mxu0 0
        %2661 = vmatprep.subr.bf16.mxu0 0
        %2662 = vmatpush2.bf16.msra.mxu0 0
        %2663 = vmatprep.subr.bf16.mxu0 0
        %2664 = vmatpush2.bf16.msra.mxu0 0
        %2665 = vmatprep.subr.bf16.mxu0 0
        %2666 = vmatpush2.bf16.msra.mxu0 0
        %2667 = vmatprep.mubr.bf16.mxu0 0
        %2668 = vmatmul.mubr.bf16.gmra.mxu0 %v299
        %v2669 = vpop.f32.mrf.mxu0
        %v2670 = vadd.f32 0.0, %v2669
        %v2671 = vpop.f32.mrf.mxu0
        %v2672 = vpop.f32.mrf.mxu0
        %v2673 = vpop.f32.mrf.mxu0
        %2674 = vdwg.mxu0
        %v2675 = vmul.f32 %v2670, 0.25
        %v2676 = vpack.c.bf16 %v2675, %v2675
        %s2677 = scalar_lea.vmem %s274, 28 [#allocation2]
        %2678 = vst.msk [vmem:[%s2677] sm:$0xf] %vm406, %v2676
        %s2679 = scalar_lea.vmem %s2, 448
        %v2680 = vld [vmem:[%s2679] sm:$0xf]
        %v2681 = vld [vmem:[%s2679 + $0x4] sm:$0xf]
        %v2682 = vld [vmem:[%s2679 + $0x8] sm:$0xf]
        %v2683 = vld [vmem:[%s2679 + $0xc] sm:$0xf]
        %v2684 = vld [vmem:[%s2679 + $0x10] sm:$0xf]
        %v2685 = vld [vmem:[%s2679 + $0x14] sm:$0xf]
        %v2686 = vld [vmem:[%s2679 + $0x18] sm:$0xf]
        %v2687 = vld [vmem:[%s2679 + $0x1c] sm:$0xf]
        %v2688 = vld [vmem:[%s2679 + $0x20] sm:$0xf]
        %v2689 = vld [vmem:[%s2679 + $0x24] sm:$0xf]
        %v2690 = vld [vmem:[%s2679 + $0x28] sm:$0xf]
        %v2691 = vld [vmem:[%s2679 + $0x2c] sm:$0xf]
        %v2692 = vld [vmem:[%s2679 + $0x30] sm:$0xf]
        %v2693 = vld [vmem:[%s2679 + $0x34] sm:$0xf]
        %v2694 = vld [vmem:[%s2679 + $0x38] sm:$0xf]
        %v2695 = vld [vmem:[%s2679 + $0x3c] sm:$0xf]
        %v2712 = vunpack.c.l.b16 %v2680
        %v2713 = vunpack.c.l.b16 %v2681
        %v2714 = vunpack.c.l.b16 %v2682
        %v2715 = vunpack.c.l.b16 %v2683
        %v2716 = vunpack.c.l.b16 %v2684
        %v2717 = vunpack.c.l.b16 %v2685
        %v2718 = vunpack.c.l.b16 %v2686
        %v2719 = vunpack.c.l.b16 %v2687
        %v2720 = vunpack.c.l.b16 %v2688
        %v2721 = vunpack.c.l.b16 %v2689
        %v2722 = vunpack.c.l.b16 %v2690
        %v2723 = vunpack.c.l.b16 %v2691
        %v2724 = vunpack.c.l.b16 %v2692
        %v2725 = vunpack.c.l.b16 %v2693
        %v2726 = vunpack.c.l.b16 %v2694
        %v2727 = vunpack.c.l.b16 %v2695
        %v2728 = vpack.c.b16 %v2713, %v2712
        %v2729 = vpack.c.b16 %v2715, %v2714
        %v2730 = vpack.c.b16 %v2717, %v2716
        %v2731 = vpack.c.b16 %v2719, %v2718
        %v2732 = vpack.c.b16 %v2721, %v2720
        %v2733 = vpack.c.b16 %v2723, %v2722
        %v2734 = vpack.c.b16 %v2725, %v2724
        %v2735 = vpack.c.b16 %v2727, %v2726
        %2744 = vmatprep.subr.bf16.mxu0 0
        %2745 = vmatpush1.bf16.msra.mxu0 %v2735
        %2746 = vmatprep.subr.bf16.mxu0 0
        %2747 = vmatpush1.bf16.msra.mxu0 %v2734
        %2748 = vmatprep.subr.bf16.mxu0 0
        %2749 = vmatpush1.bf16.msra.mxu0 %v2733
        %2750 = vmatprep.subr.bf16.mxu0 0
        %2751 = vmatpush1.bf16.msra.mxu0 %v2732
        %2752 = vmatprep.subr.bf16.mxu0 0
        %2753 = vmatpush1.bf16.msra.mxu0 %v2731
        %2754 = vmatprep.subr.bf16.mxu0 0
        %2755 = vmatpush1.bf16.msra.mxu0 %v2730
        %2756 = vmatprep.subr.bf16.mxu0 0
        %2757 = vmatpush1.bf16.msra.mxu0 %v2729
        %2758 = vmatprep.subr.bf16.mxu0 0
        %2759 = vmatpush1.bf16.msra.mxu0 %v2728
        %2760 = vmatprep.subr.bf16.mxu0 0
        %2761 = vmatpush2.bf16.msra.mxu0 0
        %2762 = vmatprep.subr.bf16.mxu0 0
        %2763 = vmatpush2.bf16.msra.mxu0 0
        %2764 = vmatprep.subr.bf16.mxu0 0
        %2765 = vmatpush2.bf16.msra.mxu0 0
        %2766 = vmatprep.subr.bf16.mxu0 0
        %2767 = vmatpush2.bf16.msra.mxu0 0
        %2768 = vmatprep.subr.bf16.mxu0 0
        %2769 = vmatpush2.bf16.msra.mxu0 0
        %2770 = vmatprep.subr.bf16.mxu0 0
        %2771 = vmatpush2.bf16.msra.mxu0 0
        %2772 = vmatprep.subr.bf16.mxu0 0
        %2773 = vmatpush2.bf16.msra.mxu0 0
        %2774 = vmatprep.subr.bf16.mxu0 0
        %2775 = vmatpush2.bf16.msra.mxu0 0
        %2776 = vmatprep.mubr.bf16.mxu0 0
        %2777 = vmatmul.mubr.bf16.gmra.mxu0 %v299
        %v2778 = vpop.f32.mrf.mxu0
        %v2779 = vadd.f32 0.0, %v2778
        %v2780 = vpop.f32.mrf.mxu0
        %v2781 = vpop.f32.mrf.mxu0
        %v2782 = vpop.f32.mrf.mxu0
        %2783 = vdwg.mxu0
        %v2784 = vpack.c.bf16 %v2779, %v2779
        %s2785 = scalar_lea.vmem %s281, 28 [#allocation4]
        %2786 = vst.msk [vmem:[%s2785] sm:$0xf] %vm406, %v2784
        %s2787 = scalar_lea.vmem %s3, 448
        %v2788 = vld [vmem:[%s2787] sm:$0xf]
        %v2789 = vld [vmem:[%s2787 + $0x4] sm:$0xf]
        %v2790 = vld [vmem:[%s2787 + $0x8] sm:$0xf]
        %v2791 = vld [vmem:[%s2787 + $0xc] sm:$0xf]
        %v2792 = vld [vmem:[%s2787 + $0x10] sm:$0xf]
        %v2793 = vld [vmem:[%s2787 + $0x14] sm:$0xf]
        %v2794 = vld [vmem:[%s2787 + $0x18] sm:$0xf]
        %v2795 = vld [vmem:[%s2787 + $0x1c] sm:$0xf]
        %v2796 = vld [vmem:[%s2787 + $0x20] sm:$0xf]
        %v2797 = vld [vmem:[%s2787 + $0x24] sm:$0xf]
        %v2798 = vld [vmem:[%s2787 + $0x28] sm:$0xf]
        %v2799 = vld [vmem:[%s2787 + $0x2c] sm:$0xf]
        %v2800 = vld [vmem:[%s2787 + $0x30] sm:$0xf]
        %v2801 = vld [vmem:[%s2787 + $0x34] sm:$0xf]
        %v2802 = vld [vmem:[%s2787 + $0x38] sm:$0xf]
        %v2803 = vld [vmem:[%s2787 + $0x3c] sm:$0xf]
        %v2820 = vunpack.c.l.b16 %v2788
        %v2821 = vunpack.c.l.b16 %v2789
        %v2822 = vunpack.c.l.b16 %v2790
        %v2823 = vunpack.c.l.b16 %v2791
        %v2824 = vunpack.c.l.b16 %v2792
        %v2825 = vunpack.c.l.b16 %v2793
        %v2826 = vunpack.c.l.b16 %v2794
        %v2827 = vunpack.c.l.b16 %v2795
        %v2828 = vunpack.c.l.b16 %v2796
        %v2829 = vunpack.c.l.b16 %v2797
        %v2830 = vunpack.c.l.b16 %v2798
        %v2831 = vunpack.c.l.b16 %v2799
        %v2832 = vunpack.c.l.b16 %v2800
        %v2833 = vunpack.c.l.b16 %v2801
        %v2834 = vunpack.c.l.b16 %v2802
        %v2835 = vunpack.c.l.b16 %v2803
        %v2836 = vpack.c.b16 %v2821, %v2820
        %v2837 = vpack.c.b16 %v2823, %v2822
        %v2838 = vpack.c.b16 %v2825, %v2824
        %v2839 = vpack.c.b16 %v2827, %v2826
        %v2840 = vpack.c.b16 %v2829, %v2828
        %v2841 = vpack.c.b16 %v2831, %v2830
        %v2842 = vpack.c.b16 %v2833, %v2832
        %v2843 = vpack.c.b16 %v2835, %v2834
        %2852 = vmatprep.subr.bf16.mxu0 0
        %2853 = vmatpush1.bf16.msra.mxu0 %v2843
        %2854 = vmatprep.subr.bf16.mxu0 0
        %2855 = vmatpush1.bf16.msra.mxu0 %v2842
        %2856 = vmatprep.subr.bf16.mxu0 0
        %2857 = vmatpush1.bf16.msra.mxu0 %v2841
        %2858 = vmatprep.subr.bf16.mxu0 0
        %2859 = vmatpush1.bf16.msra.mxu0 %v2840
        %2860 = vmatprep.subr.bf16.mxu0 0
        %2861 = vmatpush1.bf16.msra.mxu0 %v2839
        %2862 = vmatprep.subr.bf16.mxu0 0
        %2863 = vmatpush1.bf16.msra.mxu0 %v2838
        %2864 = vmatprep.subr.bf16.mxu0 0
        %2865 = vmatpush1.bf16.msra.mxu0 %v2837
        %2866 = vmatprep.subr.bf16.mxu0 0
        %2867 = vmatpush1.bf16.msra.mxu0 %v2836
        %2868 = vmatprep.subr.bf16.mxu0 0
        %2869 = vmatpush2.bf16.msra.mxu0 0
        %2870 = vmatprep.subr.bf16.mxu0 0
        %2871 = vmatpush2.bf16.msra.mxu0 0
        %2872 = vmatprep.subr.bf16.mxu0 0
        %2873 = vmatpush2.bf16.msra.mxu0 0
        %2874 = vmatprep.subr.bf16.mxu0 0
        %2875 = vmatpush2.bf16.msra.mxu0 0
        %2876 = vmatprep.subr.bf16.mxu0 0
        %2877 = vmatpush2.bf16.msra.mxu0 0
        %2878 = vmatprep.subr.bf16.mxu0 0
        %2879 = vmatpush2.bf16.msra.mxu0 0
        %2880 = vmatprep.subr.bf16.mxu0 0
        %2881 = vmatpush2.bf16.msra.mxu0 0
        %2882 = vmatprep.subr.bf16.mxu0 0
        %2883 = vmatpush2.bf16.msra.mxu0 0
        %2884 = vmatprep.mubr.bf16.mxu0 0
        %2885 = vmatmul.mubr.bf16.gmra.mxu0 %v299
        %v2886 = vpop.f32.mrf.mxu0
        %v2887 = vadd.f32 0.0, %v2886
        %v2888 = vpop.f32.mrf.mxu0
        %v2889 = vpop.f32.mrf.mxu0
        %v2890 = vpop.f32.mrf.mxu0
        %2891 = vdwg.mxu0
        %v2892 = vpack.c.bf16 %v2887, %v2887
        %s2893 = scalar_lea.vmem %s288, 28 [#allocation6]
        %2894 = vst.msk [vmem:[%s2893] sm:$0xf] %vm406, %v2892
        %s2895 = sand.u32 %s137, 1
        %s2896 = scalar_lea.sflag [#allocation3], %s2895
        %s2897 = sand.u32 %s137, 1
        %s2898 = smul.addr %s2897, 32
        %s2899 = scalar_lea.vmem [#allocation2], %s2898
        %s2900 = sand.u32 %s24, 1
        %s2901 = scalar_lea.sflag [#allocation5], %s2900
        %s2902 = sand.u32 %s165, 1
        %s2903 = smul.addr %s2902, 32
        %s2904 = scalar_lea.vmem [#allocation4], %s2903
        %s2905 = sand.u32 %s24, 1
        %s2906 = scalar_lea.sflag [#allocation5], %s2905
        %s2907 = sand.u32 %s193, 1
        %s2908 = smul.addr %s2907, 32
        %s2909 = scalar_lea.vmem [#allocation6], %s2908
        // Predicated region
        $region37: #{tpu_custom_call.1} parent=35 // pred_check
          %p2910 = pneg %p147
        $region38: #{tpu_custom_call.1} parent=35 // pred_check_branch
          %2912 = sbr.rel (%p2910) target = $region40
        $region39: #{tpu_custom_call.1} parent=35 // pred_region
          %s2914 = ssub.s32 512, 512
          %2915 = vsyncadd %s2896, %s2914
          %s2916 = smul.addr %s28, 16
          %s2917 = sadd.s32 %s29, %s2916
          %s2918 = smul.addr %s2917, 64
          %s2919 = scalar_lea.hbm %s4, %s2918
          %s2920 = sshll.u32 %s2899, 4
          %s2921 = int_to_ptr.vmem [resolvable:$true] %s2920
          %2926 = dma.vmem_to_hbm [thread:$0]  %s2921, 512, %s2919, %s2896, 64, 128, 4
        $region40: #{tpu_custom_call.1} parent=35 // pred_fallthru
          _
        // Predicated region
        $region41: #{tpu_custom_call.1} parent=35 // pred_check
          %p2927 = pneg %p175
        $region42: #{tpu_custom_call.1} parent=35 // pred_check_branch
          %2929 = sbr.rel (%p2927) target = $region44
        $region43: #{tpu_custom_call.1} parent=35 // pred_region
          %s2931 = ssub.s32 512, 512
          %2932 = vsyncadd %s2901, %s2931
          %s2933 = smul.addr %s28, 16
          %s2934 = sadd.s32 %s29, %s2933
          %s2935 = smul.addr %s2934, 64
          %s2936 = scalar_lea.hbm %s5, %s2935
          %s2937 = sshll.u32 %s2904, 4
          %s2938 = int_to_ptr.vmem [resolvable:$true] %s2937
          %2943 = dma.vmem_to_hbm [thread:$0]  %s2938, 512, %s2936, %s2901, 64, 128, 4
        $region44: #{tpu_custom_call.1} parent=35 // pred_fallthru
          _
        // Predicated region
        $region45: #{tpu_custom_call.1} parent=35 // pred_check
          %p2944 = pneg %p203
        $region46: #{tpu_custom_call.1} parent=35 // pred_check_branch
          %2946 = sbr.rel (%p2944) target = $region48
        $region47: #{tpu_custom_call.1} parent=35 // pred_region
          %s2948 = ssub.s32 512, 512
          %2949 = vsyncadd %s2906, %s2948
          %s2950 = smul.addr %s28, 16
          %s2951 = sadd.s32 %s29, %s2950
          %s2952 = smul.addr %s2951, 64
          %s2953 = scalar_lea.hbm %s6, %s2952
          %s2954 = sshll.u32 %s2909, 4
          %s2955 = int_to_ptr.vmem [resolvable:$true] %s2954
          %2960 = dma.vmem_to_hbm [thread:$0]  %s2955, 512, %s2953, %s2906, 64, 128, 4
        $region48: #{tpu_custom_call.1} parent=35 // pred_fallthru
          _
      $region36: #{tpu_custom_call.1} parent=5 // pred_fallthru
        _
      %p2961 = scmp.le.s32.totalorder 2, %s19
      // Predicated region
      $region49: #{tpu_custom_call.1} parent=5 // pred_check
        %p2962 = pneg %p2961
      $region50: #{tpu_custom_call.1} parent=5 // pred_check_branch
        %2964 = sbr.rel (%p2962) target = $region52
      $region51: #{tpu_custom_call.1} parent=5 // pred_region
        %s2965 = ssub.s32 %s19, 2
        // Predicated region
        $region53: #{tpu_custom_call.1} parent=51 // pred_check
          %p2966 = pneg %p153
        $region54: #{tpu_custom_call.1} parent=51 // pred_check_branch
          %2968 = sbr.rel (%p2966) target = $region56
        $region55: #{tpu_custom_call.1} parent=51 // pred_region
          %s2969 = sand.u32 %s138, 1
          %s2970 = scalar_lea.sflag [#allocation3], %s2969
          %s2971 = sand.u32 %s138, 1
          %s2972 = smul.addr %s2971, 32
          %s2973 = scalar_lea.vmem [#allocation2], %s2972
          %2974 = dma.done %s2970, 512
        $region56: #{tpu_custom_call.1} parent=51 // pred_fallthru
          _
        // Predicated region
        $region57: #{tpu_custom_call.1} parent=51 // pred_check
          %p2975 = pneg %p181
        $region58: #{tpu_custom_call.1} parent=51 // pred_check_branch
          %2977 = sbr.rel (%p2975) target = $region60
        $region59: #{tpu_custom_call.1} parent=51 // pred_region
          %s2978 = sand.u32 %s25, 1
          %s2979 = scalar_lea.sflag [#allocation5], %s2978
          %s2980 = sand.u32 %s166, 1
          %s2981 = smul.addr %s2980, 32
          %s2982 = scalar_lea.vmem [#allocation4], %s2981
          %2983 = dma.done %s2979, 512
        $region60: #{tpu_custom_call.1} parent=51 // pred_fallthru
          _
        // Predicated region
        $region61: #{tpu_custom_call.1} parent=51 // pred_check
          %p2984 = pneg %p209
        $region62: #{tpu_custom_call.1} parent=51 // pred_check_branch
          %2986 = sbr.rel (%p2984) target = $region64
        $region63: #{tpu_custom_call.1} parent=51 // pred_region
          %s2987 = sand.u32 %s25, 1
          %s2988 = scalar_lea.sflag [#allocation5], %s2987
          %s2989 = sand.u32 %s194, 1
          %s2990 = smul.addr %s2989, 32
          %s2991 = scalar_lea.vmem [#allocation6], %s2990
          %2992 = dma.done %s2988, 512
        $region64: #{tpu_custom_call.1} parent=51 // pred_fallthru
          _
      $region52: #{tpu_custom_call.1} parent=5 // pred_fallthru
        _
    $region6: #{tpu_custom_call.1} parent=1 // loop_footer
      %s23 = sadd.s32 1, %s19
    $region7: #{tpu_custom_call.1} parent=1 // loop_footer_branch
      %18 = sbr.rel target = $region3
    $region8: #{tpu_custom_call.1} parent=1 // loop_exit
      _
    %2993 = vsyncpa [#allocation3], 1
    %s2994 = scalar_lea.sflag [#allocation3], 1
    %2995 = vsyncpa %s2994, 1
    %2996 = vsyncpa [#allocation5], 1
    %s2997 = scalar_lea.sflag [#allocation5], 1
    %2998 = vsyncpa %s2997, 1

</llo_original>
